<compile_context>
chip_gen: v7x
topology: tpu7x:2x2x1
jax: 0.10.0
libtpu: 0.0.40
codegen_flags: <defaults>
</compile_context>

<pallas_src>
import functools
import numpy as np

import jax
import jax.numpy as jnp
from jax import lax
from jax.experimental import pallas as pl
from jax.experimental.pallas import tpu as pltpu


_INV_SQRT2 = 0.7071067811865476
_LN_EPS = 1e-6


# ----------------------------------------------------------------------------
# Fused encoder-layer kernel (whole batch, single invocation)
# ----------------------------------------------------------------------------

def _encoder_layer_kernel(x_ref, mask_ref,
                          wq_ref, wk_ref, wv_ref, wo_ref, bo_ref,
                          ag_ref, ab_ref,
                          w1_ref, b1_ref, w2_ref, b2_ref, fg_ref, fb_ref,
                          out_ref, attn_ref,
                          *, batch, seq, n_head, d_k, d_v):
    # x_ref    : [B*L, D]        lane-dense activation slab (batch folded)
    # mask_ref : [B, L, L]       additive mask (0 or -1e9)
    # wq/wk    : [D, H*dk]  wv: [D, H*dv]  wo: [H*dv, D]  bo: [1, D]
    # ag/ab    : [1, D]          MHA pre-LayerNorm gamma/beta
    # w1: [D, d_inner] b1: [1, d_inner]  w2: [d_inner, D] b2: [1, D]
    # fg/fb    : [1, D]          FFN pre-LayerNorm gamma/beta
    # out_ref  : [B*L, D]        attn_ref: [B, H, L, L]
    x = x_ref[...]                                   # [B*L, D]
    residual = x

    # ---- MultiHeadAttention, normalize_before=True: LN applied to q only ----
    mu = jnp.mean(x, axis=-1, keepdims=True)
    var = jnp.mean(jnp.square(x - mu), axis=-1, keepdims=True)
    q_norm = (x - mu) * lax.rsqrt(var + _LN_EPS) * ag_ref[...] + ab_ref[...]

    # Hoisted full-width projections (4 MXU matmuls on the [B*L, D] slab).
    q_all = jnp.dot(q_norm, wq_ref[...], preferred_element_type=jnp.float32)
    k_all = jnp.dot(x,      wk_ref[...], preferred_element_type=jnp.float32)
    v_all = jnp.dot(x,      wv_ref[...], preferred_element_type=jnp.float32)

    scale = 1.0 / (d_k ** 0.5)
    ctx_rows = []
    for b in range(batch):
        r0, r1 = b * seq, (b + 1) * seq
        mask_b = mask_ref[b]                         # [L, L] additive
        head_outs = []
        for h in range(n_head):
            qh = q_all[r0:r1, h * d_k:(h + 1) * d_k] * scale     # [L, dk]
            kh = k_all[r0:r1, h * d_k:(h + 1) * d_k]             # [L, dk]
            vh = v_all[r0:r1, h * d_v:(h + 1) * d_v]             # [L, dv]
            # scores = qh @ kh.T  (contract last dims, no explicit transpose)
            s = lax.dot_general(qh, kh, (((1,), (1,)), ((), ())),
                                preferred_element_type=jnp.float32)
            s = s + mask_b
            s = s - jnp.max(s, axis=-1, keepdims=True)
            e = jnp.exp(s)
            a = e / jnp.sum(e, axis=-1, keepdims=True)           # softmax
            attn_ref[b, h, :, :] = a
            head_outs.append(jnp.dot(a, vh,
                                     preferred_element_type=jnp.float32))
        ctx_rows.append(jnp.concatenate(head_outs, axis=-1))      # [L, H*dv]
    ctx = jnp.concatenate(ctx_rows, axis=0)                       # [B*L, H*dv]

    # Single output projection + bias + residual (no post-LN: pre-norm mode).
    y = (jnp.dot(ctx, wo_ref[...], preferred_element_type=jnp.float32)
         + bo_ref[...] + residual)

    # ---- PositionwiseFeedForward, normalize_before=True ----
    mu2 = jnp.mean(y, axis=-1, keepdims=True)
    var2 = jnp.mean(jnp.square(y - mu2), axis=-1, keepdims=True)
    y_norm = (y - mu2) * lax.rsqrt(var2 + _LN_EPS) * fg_ref[...] + fb_ref[...]

    h1 = jnp.dot(y_norm, w1_ref[...],
                 preferred_element_type=jnp.float32) + b1_ref[...]
    # exact (erf) gelu, matching torch.nn.functional.gelu default
    h1 = 0.5 * h1 * (1.0 + lax.erf(h1 * _INV_SQRT2))
    ff = jnp.dot(h1, w2_ref[...],
                 preferred_element_type=jnp.float32) + b2_ref[...]

    out_ref[...] = ff + y


# ----------------------------------------------------------------------------
# Wrapper
# ----------------------------------------------------------------------------

def encoder_layer_pallas(x, mask_add, params, n_head, d_k, d_v):
    """x: [B, L, D] float32; mask_add: [B, L, L] additive mask (0 / -1e9)."""
    B, L, D = x.shape
    x2 = x.reshape(B * L, D)                     # fold batch into sublanes
    kern = functools.partial(_encoder_layer_kernel,
                             batch=B, seq=L, n_head=n_head, d_k=d_k, d_v=d_v)
    out2, attn = pl.pallas_call(
        kern,
        out_shape=(jax.ShapeDtypeStruct((B * L, D), jnp.float32),
                   jax.ShapeDtypeStruct((B, n_head, L, L), jnp.float32)),
    )(x2, mask_add,
      params["wq"], params["wk"], params["wv"], params["wo"], params["bo"],
      params["attn_gamma"], params["attn_beta"],
      params["w1"], params["b1"], params["w2"], params["b2"],
      params["ffn_gamma"], params["ffn_beta"])
    return out2.reshape(B, L, D), attn


# ----------------------------------------------------------------------------
# Pure-JAX reference (same math as the PyTorch module, eval mode)
# ----------------------------------------------------------------------------

def _ref_ln(x, g, b, eps=_LN_EPS):
    mu = jnp.mean(x, axis=-1, keepdims=True)
    var = jnp.mean(jnp.square(x - mu), axis=-1, keepdims=True)
    return (x - mu) * lax.rsqrt(var + eps) * g + b


def ref_encoder_layer(x, mask_bool, p, n_head, d_k, d_v):
    B, L, D = x.shape
    residual = x
    qn = _ref_ln(x, p["attn_gamma"], p["attn_beta"])          # LN on q only
    Q = (qn @ p["wq"]).reshape(B, L, n_head, d_k).transpose(0, 2, 1, 3)
    K = (x @ p["wk"]).reshape(B, L, n_head, d_k).transpose(0, 2, 1, 3)
    V = (x @ p["wv"]).reshape(B, L, n_head, d_v).transpose(0, 2, 1, 3)
    s = jnp.einsum("bhqd,bhkd->bhqk", Q / (d_k ** 0.5), K)
    s = jnp.where(mask_bool[:, None], -1e9, s)                # masked_fill
    a = jax.nn.softmax(s, axis=-1)
    o = jnp.einsum("bhqk,bhkd->bhqd", a, V).transpose(0, 2, 1, 3).reshape(B, L, -1)
    y = o @ p["wo"] + p["bo"] + residual

    yn = _ref_ln(y, p["ffn_gamma"], p["ffn_beta"])
    h = jax.nn.gelu(yn @ p["w1"] + p["b1"], approximate=False)
    out = h @ p["w2"] + p["b2"] + y
    return out, a


# ----------------------------------------------------------------------------
# Main
# ----------------------------------------------------------------------------

if __name__ == "__main__":
    # Small but lane-dense shapes (d_model = 128 keeps every vreg/store dense).
    B, L = 2, 64
    d_model, d_inner = 128, 256
    n_head, d_k, d_v = 4, 32, 32

    key = jax.random.PRNGKey(0)
    ks = iter(jax.random.split(key, 20))

    def nrm(shape, scale=0.1):
        return jax.random.normal(next(ks), shape, jnp.float32) * scale

    params = dict(
        wq=nrm((d_model, n_head * d_k)),
        wk=nrm((d_model, n_head * d_k)),
        wv=nrm((d_model, n_head * d_v)),
        wo=nrm((n_head * d_v, d_model)),
        bo=nrm((1, d_model), 0.02),
        attn_gamma=1.0 + nrm((1, d_model), 0.05),
        attn_beta=nrm((1, d_model), 0.02),
        w1=nrm((d_model, d_inner)),
        b1=nrm((1, d_inner), 0.02),
        w2=nrm((d_inner, d_model)),
        b2=nrm((1, d_model), 0.02),
        ffn_gamma=1.0 + nrm((1, d_model), 0.05),
        ffn_beta=nrm((1, d_model), 0.02),
    )

    x = jax.random.normal(next(ks), (B, L, d_model), jnp.float32)

    # Causal self-attention mask (True = masked), as slf_attn_mask.
    causal = np.triu(np.ones((L, L), dtype=bool), k=1)
    mask_bool = jnp.asarray(np.broadcast_to(causal, (B, L, L)))
    # Additive form shipped to the kernel (precomputed host-side).
    mask_add = mask_bool.astype(jnp.float32) * (-1e9)

    out, attn = encoder_layer_pallas(x, mask_add, params, n_head, d_k, d_v)
    out = jax.block_until_ready(out)
    attn = jax.block_until_ready(attn)

    ref_out, ref_attn = ref_encoder_layer(x, mask_bool, params, n_head, d_k, d_v)
    ref_out = jax.block_until_ready(ref_out)

    np.testing.assert_allclose(np.asarray(out), np.asarray(ref_out),
                               rtol=2e-3, atol=2e-3)
    np.testing.assert_allclose(np.asarray(attn), np.asarray(ref_attn),
                               rtol=2e-3, atol=2e-3)
    assert out.shape == (B, L, d_model)
    assert attn.shape == (B, n_head, L, L)
    print("KERNEL_OK")
</pallas_src>

<mosaic_0001>
module attributes {stable_mosaic.version = 11 : i64} {
  func.func @_encoder_layer_kernel(%arg0: memref<128x128xf32, #tpu.memory_space<vmem>>, %arg1: memref<2x64x64xf32, #tpu.memory_space<vmem>>, %arg2: memref<128x128xf32, #tpu.memory_space<vmem>>, %arg3: memref<128x128xf32, #tpu.memory_space<vmem>>, %arg4: memref<128x128xf32, #tpu.memory_space<vmem>>, %arg5: memref<128x128xf32, #tpu.memory_space<vmem>>, %arg6: memref<1x128xf32, #tpu.memory_space<vmem>>, %arg7: memref<1x128xf32, #tpu.memory_space<vmem>>, %arg8: memref<1x128xf32, #tpu.memory_space<vmem>>, %arg9: memref<128x256xf32, #tpu.memory_space<vmem>>, %arg10: memref<1x256xf32, #tpu.memory_space<vmem>>, %arg11: memref<256x128xf32, #tpu.memory_space<vmem>>, %arg12: memref<1x128xf32, #tpu.memory_space<vmem>>, %arg13: memref<1x128xf32, #tpu.memory_space<vmem>>, %arg14: memref<1x128xf32, #tpu.memory_space<vmem>>, %arg15: memref<128x128xf32, #tpu.memory_space<vmem>>, %arg16: memref<2x4x64x64xf32, #tpu.memory_space<vmem>>) attributes {dimension_semantics = [], scalar_prefetch = 0 : i64, scratch_operands = 0 : i64, tpu.core_type = #tpu.core_type<tc>} {
    %c0 = arith.constant 0 : index
    %c0_0 = arith.constant 0 : index
    %0 = vector.load %arg0[%c0, %c0_0] : memref<128x128xf32, #tpu.memory_space<vmem>>, vector<128x128xf32>
    %cst = arith.constant dense<0.000000e+00> : vector<128xf32>
    %1 = vector.multi_reduction <add>, %0, %cst [1] : vector<128x128xf32> to vector<128xf32>
    %2 = vector.shape_cast %1 : vector<128xf32> to vector<128x1xf32>
    %cst_1 = arith.constant 1.280000e+02 : f32
    %3 = vector.broadcast %cst_1 : f32 to vector<128x1xf32>
    %4 = arith.divf %2, %3 : vector<128x1xf32>
    %5 = vector.broadcast %4 : vector<128x1xf32> to vector<128x128xf32>
    %6 = arith.subf %0, %5 : vector<128x128xf32>
    %7 = arith.mulf %6, %6 : vector<128x128xf32>
    %cst_2 = arith.constant dense<0.000000e+00> : vector<128xf32>
    %8 = vector.multi_reduction <add>, %7, %cst_2 [1] : vector<128x128xf32> to vector<128xf32>
    %9 = vector.shape_cast %8 : vector<128xf32> to vector<128x1xf32>
    %cst_3 = arith.constant 1.280000e+02 : f32
    %10 = vector.broadcast %cst_3 : f32 to vector<128x1xf32>
    %11 = arith.divf %9, %10 : vector<128x1xf32>
    %12 = vector.broadcast %4 : vector<128x1xf32> to vector<128x128xf32>
    %13 = arith.subf %0, %12 : vector<128x128xf32>
    %cst_4 = arith.constant 9.99999997E-7 : f32
    %14 = vector.broadcast %cst_4 : f32 to vector<128x1xf32>
    %15 = arith.addf %11, %14 : vector<128x1xf32>
    %16 = math.rsqrt %15 : vector<128x1xf32>
    %17 = vector.broadcast %16 : vector<128x1xf32> to vector<128x128xf32>
    %18 = arith.mulf %13, %17 : vector<128x128xf32>
    %c0_5 = arith.constant 0 : index
    %c0_6 = arith.constant 0 : index
    %19 = vector.load %arg7[%c0_5, %c0_6] : memref<1x128xf32, #tpu.memory_space<vmem>>, vector<1x128xf32>
    %20 = vector.broadcast %19 : vector<1x128xf32> to vector<128x128xf32>
    %21 = arith.mulf %18, %20 : vector<128x128xf32>
    %c0_7 = arith.constant 0 : index
    %c0_8 = arith.constant 0 : index
    %22 = vector.load %arg8[%c0_7, %c0_8] : memref<1x128xf32, #tpu.memory_space<vmem>>, vector<1x128xf32>
    %23 = vector.broadcast %22 : vector<1x128xf32> to vector<128x128xf32>
    %24 = arith.addf %21, %23 : vector<128x128xf32>
    %c0_9 = arith.constant 0 : index
    %c0_10 = arith.constant 0 : index
    %25 = vector.load %arg2[%c0_9, %c0_10] : memref<128x128xf32, #tpu.memory_space<vmem>>, vector<128x128xf32>
    %cst_11 = arith.constant dense<0.000000e+00> : vector<128x128xf32>
    %26 = tpu.matmul %24, %25, %cst_11 {dimension_numbers = #tpu.dot_dimension_numbers<[1], [0], [0], [1], [0, 0, 1, 1], [], []>} : vector<128x128xf32>, vector<128x128xf32>, vector<128x128xf32> -> vector<128x128xf32>
    %c0_12 = arith.constant 0 : index
    %c0_13 = arith.constant 0 : index
    %27 = vector.load %arg3[%c0_12, %c0_13] : memref<128x128xf32, #tpu.memory_space<vmem>>, vector<128x128xf32>
    %cst_14 = arith.constant dense<0.000000e+00> : vector<128x128xf32>
    %28 = tpu.matmul %0, %27, %cst_14 {dimension_numbers = #tpu.dot_dimension_numbers<[1], [0], [0], [1], [0, 0, 1, 1], [], []>} : vector<128x128xf32>, vector<128x128xf32>, vector<128x128xf32> -> vector<128x128xf32>
    %c0_15 = arith.constant 0 : index
    %c0_16 = arith.constant 0 : index
    %29 = vector.load %arg4[%c0_15, %c0_16] : memref<128x128xf32, #tpu.memory_space<vmem>>, vector<128x128xf32>
    %cst_17 = arith.constant dense<0.000000e+00> : vector<128x128xf32>
    %30 = tpu.matmul %0, %29, %cst_17 {dimension_numbers = #tpu.dot_dimension_numbers<[1], [0], [0], [1], [0, 0, 1, 1], [], []>} : vector<128x128xf32>, vector<128x128xf32>, vector<128x128xf32> -> vector<128x128xf32>
    %c0_18 = arith.constant 0 : index
    %c0_19 = arith.constant 0 : index
    %c0_20 = arith.constant 0 : index
    %31 = vector.load %arg1[%c0_18, %c0_19, %c0_20] : memref<2x64x64xf32, #tpu.memory_space<vmem>>, vector<1x64x64xf32>
    %32 = vector.shape_cast %31 : vector<1x64x64xf32> to vector<64x64xf32>
    %33 = vector.extract_strided_slice %26 {offsets = [0, 0], sizes = [64, 32], strides = [1, 1]} : vector<128x128xf32> to vector<64x32xf32>
    %cst_21 = arith.constant 0.176776692 : f32
    %34 = vector.broadcast %cst_21 : f32 to vector<64x32xf32>
    %35 = arith.mulf %33, %34 : vector<64x32xf32>
    %36 = vector.extract_strided_slice %28 {offsets = [0, 0], sizes = [64, 32], strides = [1, 1]} : vector<128x128xf32> to vector<64x32xf32>
    %37 = vector.extract_strided_slice %30 {offsets = [0, 0], sizes = [64, 32], strides = [1, 1]} : vector<128x128xf32> to vector<64x32xf32>
    %cst_22 = arith.constant dense<0.000000e+00> : vector<64x64xf32>
    %38 = tpu.matmul %35, %36, %cst_22 {dimension_numbers = #tpu.dot_dimension_numbers<[1], [1], [0], [0], [0, 0, 1, 0], [], []>} : vector<64x32xf32>, vector<64x32xf32>, vector<64x64xf32> -> vector<64x64xf32>
    %39 = arith.addf %38, %32 : vector<64x64xf32>
    %cst_23 = arith.constant dense<0xFF800000> : vector<64xf32>
    %40 = vector.multi_reduction <maximumf>, %39, %cst_23 [1] : vector<64x64xf32> to vector<64xf32>
    %41 = vector.shape_cast %40 : vector<64xf32> to vector<64x1xf32>
    %42 = vector.broadcast %41 : vector<64x1xf32> to vector<64x64xf32>
    %43 = arith.subf %39, %42 : vector<64x64xf32>
    %44 = math.exp %43 : vector<64x64xf32>
    %cst_24 = arith.constant dense<0.000000e+00> : vector<64xf32>
    %45 = vector.multi_reduction <add>, %44, %cst_24 [1] : vector<64x64xf32> to vector<64xf32>
    %46 = vector.shape_cast %45 : vector<64xf32> to vector<64x1xf32>
    %47 = vector.broadcast %46 : vector<64x1xf32> to vector<64x64xf32>
    %48 = arith.divf %44, %47 : vector<64x64xf32>
    %c0_25 = arith.constant 0 : index
    %c0_26 = arith.constant 0 : index
    %c0_27 = arith.constant 0 : index
    %c0_28 = arith.constant 0 : index
    %49 = vector.load %arg16[%c0_25, %c0_26, %c0_27, %c0_28] : memref<2x4x64x64xf32, #tpu.memory_space<vmem>>, vector<1x1x64x64xf32>
    %50 = vector.shape_cast %49 : vector<1x1x64x64xf32> to vector<64x64xf32>
    %51 = vector.shape_cast %48 : vector<64x64xf32> to vector<1x1x64x64xf32>
    tpu.vector_store %arg16[%c0_25, %c0_26, %c0_27, %c0_28], %51 {strides = array<i32>} : memref<2x4x64x64xf32, #tpu.memory_space<vmem>>, vector<1x1x64x64xf32>,
    %cst_29 = arith.constant dense<0.000000e+00> : vector<64x32xf32>
    %52 = tpu.matmul %48, %37, %cst_29 {dimension_numbers = #tpu.dot_dimension_numbers<[1], [0], [0], [1], [0, 0, 1, 1], [], []>} : vector<64x64xf32>, vector<64x32xf32>, vector<64x32xf32> -> vector<64x32xf32>
    %53 = vector.extract_strided_slice %26 {offsets = [0, 32], sizes = [64, 32], strides = [1, 1]} : vector<128x128xf32> to vector<64x32xf32>
    %cst_30 = arith.constant 0.176776692 : f32
    %54 = vector.broadcast %cst_30 : f32 to vector<64x32xf32>
    %55 = arith.mulf %53, %54 : vector<64x32xf32>
    %56 = vector.extract_strided_slice %28 {offsets = [0, 32], sizes = [64, 32], strides = [1, 1]} : vector<128x128xf32> to vector<64x32xf32>
    %57 = vector.extract_strided_slice %30 {offsets = [0, 32], sizes = [64, 32], strides = [1, 1]} : vector<128x128xf32> to vector<64x32xf32>
    %cst_31 = arith.constant dense<0.000000e+00> : vector<64x64xf32>
    %58 = tpu.matmul %55, %56, %cst_31 {dimension_numbers = #tpu.dot_dimension_numbers<[1], [1], [0], [0], [0, 0, 1, 0], [], []>} : vector<64x32xf32>, vector<64x32xf32>, vector<64x64xf32> -> vector<64x64xf32>
    %59 = arith.addf %58, %32 : vector<64x64xf32>
    %cst_32 = arith.constant dense<0xFF800000> : vector<64xf32>
    %60 = vector.multi_reduction <maximumf>, %59, %cst_32 [1] : vector<64x64xf32> to vector<64xf32>
    %61 = vector.shape_cast %60 : vector<64xf32> to vector<64x1xf32>
    %62 = vector.broadcast %61 : vector<64x1xf32> to vector<64x64xf32>
    %63 = arith.subf %59, %62 : vector<64x64xf32>
    %64 = math.exp %63 : vector<64x64xf32>
    %cst_33 = arith.constant dense<0.000000e+00> : vector<64xf32>
    %65 = vector.multi_reduction <add>, %64, %cst_33 [1] : vector<64x64xf32> to vector<64xf32>
    %66 = vector.shape_cast %65 : vector<64xf32> to vector<64x1xf32>
    %67 = vector.broadcast %66 : vector<64x1xf32> to vector<64x64xf32>
    %68 = arith.divf %64, %67 : vector<64x64xf32>
    %c0_34 = arith.constant 0 : index
    %c1 = arith.constant 1 : index
    %c0_35 = arith.constant 0 : index
    %c0_36 = arith.constant 0 : index
    %69 = vector.load %arg16[%c0_34, %c1, %c0_35, %c0_36] : memref<2x4x64x64xf32, #tpu.memory_space<vmem>>, vector<1x1x64x64xf32>
    %70 = vector.shape_cast %69 : vector<1x1x64x64xf32> to vector<64x64xf32>
    %71 = vector.shape_cast %68 : vector<64x64xf32> to vector<1x1x64x64xf32>
    tpu.vector_store %arg16[%c0_34, %c1, %c0_35, %c0_36], %71 {strides = array<i32>} : memref<2x4x64x64xf32, #tpu.memory_space<vmem>>, vector<1x1x64x64xf32>,
    %cst_37 = arith.constant dense<0.000000e+00> : vector<64x32xf32>
    %72 = tpu.matmul %68, %57, %cst_37 {dimension_numbers = #tpu.dot_dimension_numbers<[1], [0], [0], [1], [0, 0, 1, 1], [], []>} : vector<64x64xf32>, vector<64x32xf32>, vector<64x32xf32> -> vector<64x32xf32>
    %73 = vector.extract_strided_slice %26 {offsets = [0, 64], sizes = [64, 32], strides = [1, 1]} : vector<128x128xf32> to vector<64x32xf32>
    %cst_38 = arith.constant 0.176776692 : f32
    %74 = vector.broadcast %cst_38 : f32 to vector<64x32xf32>
    %75 = arith.mulf %73, %74 : vector<64x32xf32>
    %76 = vector.extract_strided_slice %28 {offsets = [0, 64], sizes = [64, 32], strides = [1, 1]} : vector<128x128xf32> to vector<64x32xf32>
    %77 = vector.extract_strided_slice %30 {offsets = [0, 64], sizes = [64, 32], strides = [1, 1]} : vector<128x128xf32> to vector<64x32xf32>
    %cst_39 = arith.constant dense<0.000000e+00> : vector<64x64xf32>
    %78 = tpu.matmul %75, %76, %cst_39 {dimension_numbers = #tpu.dot_dimension_numbers<[1], [1], [0], [0], [0, 0, 1, 0], [], []>} : vector<64x32xf32>, vector<64x32xf32>, vector<64x64xf32> -> vector<64x64xf32>
    %79 = arith.addf %78, %32 : vector<64x64xf32>
    %cst_40 = arith.constant dense<0xFF800000> : vector<64xf32>
    %80 = vector.multi_reduction <maximumf>, %79, %cst_40 [1] : vector<64x64xf32> to vector<64xf32>
    %81 = vector.shape_cast %80 : vector<64xf32> to vector<64x1xf32>
    %82 = vector.broadcast %81 : vector<64x1xf32> to vector<64x64xf32>
    %83 = arith.subf %79, %82 : vector<64x64xf32>
    %84 = math.exp %83 : vector<64x64xf32>
    %cst_41 = arith.constant dense<0.000000e+00> : vector<64xf32>
    %85 = vector.multi_reduction <add>, %84, %cst_41 [1] : vector<64x64xf32> to vector<64xf32>
    %86 = vector.shape_cast %85 : vector<64xf32> to vector<64x1xf32>
    %87 = vector.broadcast %86 : vector<64x1xf32> to vector<64x64xf32>
    %88 = arith.divf %84, %87 : vector<64x64xf32>
    %c0_42 = arith.constant 0 : index
    %c2 = arith.constant 2 : index
    %c0_43 = arith.constant 0 : index
    %c0_44 = arith.constant 0 : index
    %89 = vector.load %arg16[%c0_42, %c2, %c0_43, %c0_44] : memref<2x4x64x64xf32, #tpu.memory_space<vmem>>, vector<1x1x64x64xf32>
    %90 = vector.shape_cast %89 : vector<1x1x64x64xf32> to vector<64x64xf32>
    %91 = vector.shape_cast %88 : vector<64x64xf32> to vector<1x1x64x64xf32>
    tpu.vector_store %arg16[%c0_42, %c2, %c0_43, %c0_44], %91 {strides = array<i32>} : memref<2x4x64x64xf32, #tpu.memory_space<vmem>>, vector<1x1x64x64xf32>,
    %cst_45 = arith.constant dense<0.000000e+00> : vector<64x32xf32>
    %92 = tpu.matmul %88, %77, %cst_45 {dimension_numbers = #tpu.dot_dimension_numbers<[1], [0], [0], [1], [0, 0, 1, 1], [], []>} : vector<64x64xf32>, vector<64x32xf32>, vector<64x32xf32> -> vector<64x32xf32>
    %93 = vector.extract_strided_slice %26 {offsets = [0, 96], sizes = [64, 32], strides = [1, 1]} : vector<128x128xf32> to vector<64x32xf32>
    %cst_46 = arith.constant 0.176776692 : f32
    %94 = vector.broadcast %cst_46 : f32 to vector<64x32xf32>
    %95 = arith.mulf %93, %94 : vector<64x32xf32>
    %96 = vector.extract_strided_slice %28 {offsets = [0, 96], sizes = [64, 32], strides = [1, 1]} : vector<128x128xf32> to vector<64x32xf32>
    %97 = vector.extract_strided_slice %30 {offsets = [0, 96], sizes = [64, 32], strides = [1, 1]} : vector<128x128xf32> to vector<64x32xf32>
    %cst_47 = arith.constant dense<0.000000e+00> : vector<64x64xf32>
    %98 = tpu.matmul %95, %96, %cst_47 {dimension_numbers = #tpu.dot_dimension_numbers<[1], [1], [0], [0], [0, 0, 1, 0], [], []>} : vector<64x32xf32>, vector<64x32xf32>, vector<64x64xf32> -> vector<64x64xf32>
    %99 = arith.addf %98, %32 : vector<64x64xf32>
    %cst_48 = arith.constant dense<0xFF800000> : vector<64xf32>
    %100 = vector.multi_reduction <maximumf>, %99, %cst_48 [1] : vector<64x64xf32> to vector<64xf32>
    %101 = vector.shape_cast %100 : vector<64xf32> to vector<64x1xf32>
    %102 = vector.broadcast %101 : vector<64x1xf32> to vector<64x64xf32>
    %103 = arith.subf %99, %102 : vector<64x64xf32>
    %104 = math.exp %103 : vector<64x64xf32>
    %cst_49 = arith.constant dense<0.000000e+00> : vector<64xf32>
    %105 = vector.multi_reduction <add>, %104, %cst_49 [1] : vector<64x64xf32> to vector<64xf32>
    %106 = vector.shape_cast %105 : vector<64xf32> to vector<64x1xf32>
    %107 = vector.broadcast %106 : vector<64x1xf32> to vector<64x64xf32>
    %108 = arith.divf %104, %107 : vector<64x64xf32>
    %c0_50 = arith.constant 0 : index
    %c3 = arith.constant 3 : index
    %c0_51 = arith.constant 0 : index
    %c0_52 = arith.constant 0 : index
    %109 = vector.load %arg16[%c0_50, %c3, %c0_51, %c0_52] : memref<2x4x64x64xf32, #tpu.memory_space<vmem>>, vector<1x1x64x64xf32>
    %110 = vector.shape_cast %109 : vector<1x1x64x64xf32> to vector<64x64xf32>
    %111 = vector.shape_cast %108 : vector<64x64xf32> to vector<1x1x64x64xf32>
    tpu.vector_store %arg16[%c0_50, %c3, %c0_51, %c0_52], %111 {strides = array<i32>} : memref<2x4x64x64xf32, #tpu.memory_space<vmem>>, vector<1x1x64x64xf32>,
    %cst_53 = arith.constant dense<0.000000e+00> : vector<64x32xf32>
    %112 = tpu.matmul %108, %97, %cst_53 {dimension_numbers = #tpu.dot_dimension_numbers<[1], [0], [0], [1], [0, 0, 1, 1], [], []>} : vector<64x64xf32>, vector<64x32xf32>, vector<64x32xf32> -> vector<64x32xf32>
    %113 = tpu.concatenate %52, %72, %92, %112 in 1 : vector<64x32xf32>, vector<64x32xf32>, vector<64x32xf32>, vector<64x32xf32> -> vector<64x128xf32>
    %c1_54 = arith.constant 1 : index
    %c0_55 = arith.constant 0 : index
    %c0_56 = arith.constant 0 : index
    %114 = vector.load %arg1[%c1_54, %c0_55, %c0_56] : memref<2x64x64xf32, #tpu.memory_space<vmem>>, vector<1x64x64xf32>
    %115 = vector.shape_cast %114 : vector<1x64x64xf32> to vector<64x64xf32>
    %116 = vector.extract_strided_slice %26 {offsets = [64, 0], sizes = [64, 32], strides = [1, 1]} : vector<128x128xf32> to vector<64x32xf32>
    %cst_57 = arith.constant 0.176776692 : f32
    %117 = vector.broadcast %cst_57 : f32 to vector<64x32xf32>
    %118 = arith.mulf %116, %117 : vector<64x32xf32>
    %119 = vector.extract_strided_slice %28 {offsets = [64, 0], sizes = [64, 32], strides = [1, 1]} : vector<128x128xf32> to vector<64x32xf32>
    %120 = vector.extract_strided_slice %30 {offsets = [64, 0], sizes = [64, 32], strides = [1, 1]} : vector<128x128xf32> to vector<64x32xf32>
    %cst_58 = arith.constant dense<0.000000e+00> : vector<64x64xf32>
    %121 = tpu.matmul %118, %119, %cst_58 {dimension_numbers = #tpu.dot_dimension_numbers<[1], [1], [0], [0], [0, 0, 1, 0], [], []>} : vector<64x32xf32>, vector<64x32xf32>, vector<64x64xf32> -> vector<64x64xf32>
    %122 = arith.addf %121, %115 : vector<64x64xf32>
    %cst_59 = arith.constant dense<0xFF800000> : vector<64xf32>
    %123 = vector.multi_reduction <maximumf>, %122, %cst_59 [1] : vector<64x64xf32> to vector<64xf32>
    %124 = vector.shape_cast %123 : vector<64xf32> to vector<64x1xf32>
    %125 = vector.broadcast %124 : vector<64x1xf32> to vector<64x64xf32>
    %126 = arith.subf %122, %125 : vector<64x64xf32>
    %127 = math.exp %126 : vector<64x64xf32>
    %cst_60 = arith.constant dense<0.000000e+00> : vector<64xf32>
    %128 = vector.multi_reduction <add>, %127, %cst_60 [1] : vector<64x64xf32> to vector<64xf32>
    %129 = vector.shape_cast %128 : vector<64xf32> to vector<64x1xf32>
    %130 = vector.broadcast %129 : vector<64x1xf32> to vector<64x64xf32>
    %131 = arith.divf %127, %130 : vector<64x64xf32>
    %c1_61 = arith.constant 1 : index
    %c0_62 = arith.constant 0 : index
    %c0_63 = arith.constant 0 : index
    %c0_64 = arith.constant 0 : index
    %132 = vector.load %arg16[%c1_61, %c0_62, %c0_63, %c0_64] : memref<2x4x64x64xf32, #tpu.memory_space<vmem>>, vector<1x1x64x64xf32>
    %133 = vector.shape_cast %132 : vector<1x1x64x64xf32> to vector<64x64xf32>
    %134 = vector.shape_cast %131 : vector<64x64xf32> to vector<1x1x64x64xf32>
    tpu.vector_store %arg16[%c1_61, %c0_62, %c0_63, %c0_64], %134 {strides = array<i32>} : memref<2x4x64x64xf32, #tpu.memory_space<vmem>>, vector<1x1x64x64xf32>,
    %cst_65 = arith.constant dense<0.000000e+00> : vector<64x32xf32>
    %135 = tpu.matmul %131, %120, %cst_65 {dimension_numbers = #tpu.dot_dimension_numbers<[1], [0], [0], [1], [0, 0, 1, 1], [], []>} : vector<64x64xf32>, vector<64x32xf32>, vector<64x32xf32> -> vector<64x32xf32>
    %136 = vector.extract_strided_slice %26 {offsets = [64, 32], sizes = [64, 32], strides = [1, 1]} : vector<128x128xf32> to vector<64x32xf32>
    %cst_66 = arith.constant 0.176776692 : f32
    %137 = vector.broadcast %cst_66 : f32 to vector<64x32xf32>
    %138 = arith.mulf %136, %137 : vector<64x32xf32>
    %139 = vector.extract_strided_slice %28 {offsets = [64, 32], sizes = [64, 32], strides = [1, 1]} : vector<128x128xf32> to vector<64x32xf32>
    %140 = vector.extract_strided_slice %30 {offsets = [64, 32], sizes = [64, 32], strides = [1, 1]} : vector<128x128xf32> to vector<64x32xf32>
    %cst_67 = arith.constant dense<0.000000e+00> : vector<64x64xf32>
    %141 = tpu.matmul %138, %139, %cst_67 {dimension_numbers = #tpu.dot_dimension_numbers<[1], [1], [0], [0], [0, 0, 1, 0], [], []>} : vector<64x32xf32>, vector<64x32xf32>, vector<64x64xf32> -> vector<64x64xf32>
    %142 = arith.addf %141, %115 : vector<64x64xf32>
    %cst_68 = arith.constant dense<0xFF800000> : vector<64xf32>
    %143 = vector.multi_reduction <maximumf>, %142, %cst_68 [1] : vector<64x64xf32> to vector<64xf32>
    %144 = vector.shape_cast %143 : vector<64xf32> to vector<64x1xf32>
    %145 = vector.broadcast %144 : vector<64x1xf32> to vector<64x64xf32>
    %146 = arith.subf %142, %145 : vector<64x64xf32>
    %147 = math.exp %146 : vector<64x64xf32>
    %cst_69 = arith.constant dense<0.000000e+00> : vector<64xf32>
    %148 = vector.multi_reduction <add>, %147, %cst_69 [1] : vector<64x64xf32> to vector<64xf32>
    %149 = vector.shape_cast %148 : vector<64xf32> to vector<64x1xf32>
    %150 = vector.broadcast %149 : vector<64x1xf32> to vector<64x64xf32>
    %151 = arith.divf %147, %150 : vector<64x64xf32>
    %c1_70 = arith.constant 1 : index
    %c1_71 = arith.constant 1 : index
    %c0_72 = arith.constant 0 : index
    %c0_73 = arith.constant 0 : index
    %152 = vector.load %arg16[%c1_70, %c1_71, %c0_72, %c0_73] : memref<2x4x64x64xf32, #tpu.memory_space<vmem>>, vector<1x1x64x64xf32>
    %153 = vector.shape_cast %152 : vector<1x1x64x64xf32> to vector<64x64xf32>
    %154 = vector.shape_cast %151 : vector<64x64xf32> to vector<1x1x64x64xf32>
    tpu.vector_store %arg16[%c1_70, %c1_71, %c0_72, %c0_73], %154 {strides = array<i32>} : memref<2x4x64x64xf32, #tpu.memory_space<vmem>>, vector<1x1x64x64xf32>,
    %cst_74 = arith.constant dense<0.000000e+00> : vector<64x32xf32>
    %155 = tpu.matmul %151, %140, %cst_74 {dimension_numbers = #tpu.dot_dimension_numbers<[1], [0], [0], [1], [0, 0, 1, 1], [], []>} : vector<64x64xf32>, vector<64x32xf32>, vector<64x32xf32> -> vector<64x32xf32>
    %156 = vector.extract_strided_slice %26 {offsets = [64, 64], sizes = [64, 32], strides = [1, 1]} : vector<128x128xf32> to vector<64x32xf32>
    %cst_75 = arith.constant 0.176776692 : f32
    %157 = vector.broadcast %cst_75 : f32 to vector<64x32xf32>
    %158 = arith.mulf %156, %157 : vector<64x32xf32>
    %159 = vector.extract_strided_slice %28 {offsets = [64, 64], sizes = [64, 32], strides = [1, 1]} : vector<128x128xf32> to vector<64x32xf32>
    %160 = vector.extract_strided_slice %30 {offsets = [64, 64], sizes = [64, 32], strides = [1, 1]} : vector<128x128xf32> to vector<64x32xf32>
    %cst_76 = arith.constant dense<0.000000e+00> : vector<64x64xf32>
    %161 = tpu.matmul %158, %159, %cst_76 {dimension_numbers = #tpu.dot_dimension_numbers<[1], [1], [0], [0], [0, 0, 1, 0], [], []>} : vector<64x32xf32>, vector<64x32xf32>, vector<64x64xf32> -> vector<64x64xf32>
    %162 = arith.addf %161, %115 : vector<64x64xf32>
    %cst_77 = arith.constant dense<0xFF800000> : vector<64xf32>
    %163 = vector.multi_reduction <maximumf>, %162, %cst_77 [1] : vector<64x64xf32> to vector<64xf32>
    %164 = vector.shape_cast %163 : vector<64xf32> to vector<64x1xf32>
    %165 = vector.broadcast %164 : vector<64x1xf32> to vector<64x64xf32>
    %166 = arith.subf %162, %165 : vector<64x64xf32>
    %167 = math.exp %166 : vector<64x64xf32>
    %cst_78 = arith.constant dense<0.000000e+00> : vector<64xf32>
    %168 = vector.multi_reduction <add>, %167, %cst_78 [1] : vector<64x64xf32> to vector<64xf32>
    %169 = vector.shape_cast %168 : vector<64xf32> to vector<64x1xf32>
    %170 = vector.broadcast %169 : vector<64x1xf32> to vector<64x64xf32>
    %171 = arith.divf %167, %170 : vector<64x64xf32>
    %c1_79 = arith.constant 1 : index
    %c2_80 = arith.constant 2 : index
    %c0_81 = arith.constant 0 : index
    %c0_82 = arith.constant 0 : index
    %172 = vector.load %arg16[%c1_79, %c2_80, %c0_81, %c0_82] : memref<2x4x64x64xf32, #tpu.memory_space<vmem>>, vector<1x1x64x64xf32>
    %173 = vector.shape_cast %172 : vector<1x1x64x64xf32> to vector<64x64xf32>
    %174 = vector.shape_cast %171 : vector<64x64xf32> to vector<1x1x64x64xf32>
    tpu.vector_store %arg16[%c1_79, %c2_80, %c0_81, %c0_82], %174 {strides = array<i32>} : memref<2x4x64x64xf32, #tpu.memory_space<vmem>>, vector<1x1x64x64xf32>,
    %cst_83 = arith.constant dense<0.000000e+00> : vector<64x32xf32>
    %175 = tpu.matmul %171, %160, %cst_83 {dimension_numbers = #tpu.dot_dimension_numbers<[1], [0], [0], [1], [0, 0, 1, 1], [], []>} : vector<64x64xf32>, vector<64x32xf32>, vector<64x32xf32> -> vector<64x32xf32>
    %176 = vector.extract_strided_slice %26 {offsets = [64, 96], sizes = [64, 32], strides = [1, 1]} : vector<128x128xf32> to vector<64x32xf32>
    %cst_84 = arith.constant 0.176776692 : f32
    %177 = vector.broadcast %cst_84 : f32 to vector<64x32xf32>
    %178 = arith.mulf %176, %177 : vector<64x32xf32>
    %179 = vector.extract_strided_slice %28 {offsets = [64, 96], sizes = [64, 32], strides = [1, 1]} : vector<128x128xf32> to vector<64x32xf32>
    %180 = vector.extract_strided_slice %30 {offsets = [64, 96], sizes = [64, 32], strides = [1, 1]} : vector<128x128xf32> to vector<64x32xf32>
    %cst_85 = arith.constant dense<0.000000e+00> : vector<64x64xf32>
    %181 = tpu.matmul %178, %179, %cst_85 {dimension_numbers = #tpu.dot_dimension_numbers<[1], [1], [0], [0], [0, 0, 1, 0], [], []>} : vector<64x32xf32>, vector<64x32xf32>, vector<64x64xf32> -> vector<64x64xf32>
    %182 = arith.addf %181, %115 : vector<64x64xf32>
    %cst_86 = arith.constant dense<0xFF800000> : vector<64xf32>
    %183 = vector.multi_reduction <maximumf>, %182, %cst_86 [1] : vector<64x64xf32> to vector<64xf32>
    %184 = vector.shape_cast %183 : vector<64xf32> to vector<64x1xf32>
    %185 = vector.broadcast %184 : vector<64x1xf32> to vector<64x64xf32>
    %186 = arith.subf %182, %185 : vector<64x64xf32>
    %187 = math.exp %186 : vector<64x64xf32>
    %cst_87 = arith.constant dense<0.000000e+00> : vector<64xf32>
    %188 = vector.multi_reduction <add>, %187, %cst_87 [1] : vector<64x64xf32> to vector<64xf32>
    %189 = vector.shape_cast %188 : vector<64xf32> to vector<64x1xf32>
    %190 = vector.broadcast %189 : vector<64x1xf32> to vector<64x64xf32>
    %191 = arith.divf %187, %190 : vector<64x64xf32>
    %c1_88 = arith.constant 1 : index
    %c3_89 = arith.constant 3 : index
    %c0_90 = arith.constant 0 : index
    %c0_91 = arith.constant 0 : index
    %192 = vector.load %arg16[%c1_88, %c3_89, %c0_90, %c0_91] : memref<2x4x64x64xf32, #tpu.memory_space<vmem>>, vector<1x1x64x64xf32>
    %193 = vector.shape_cast %192 : vector<1x1x64x64xf32> to vector<64x64xf32>
    %194 = vector.shape_cast %191 : vector<64x64xf32> to vector<1x1x64x64xf32>
    tpu.vector_store %arg16[%c1_88, %c3_89, %c0_90, %c0_91], %194 {strides = array<i32>} : memref<2x4x64x64xf32, #tpu.memory_space<vmem>>, vector<1x1x64x64xf32>,
    %cst_92 = arith.constant dense<0.000000e+00> : vector<64x32xf32>
    %195 = tpu.matmul %191, %180, %cst_92 {dimension_numbers = #tpu.dot_dimension_numbers<[1], [0], [0], [1], [0, 0, 1, 1], [], []>} : vector<64x64xf32>, vector<64x32xf32>, vector<64x32xf32> -> vector<64x32xf32>
    %196 = tpu.concatenate %135, %155, %175, %195 in 1 : vector<64x32xf32>, vector<64x32xf32>, vector<64x32xf32>, vector<64x32xf32> -> vector<64x128xf32>
    %197 = tpu.concatenate %113, %196 in 0 : vector<64x128xf32>, vector<64x128xf32> -> vector<128x128xf32>
    %c0_93 = arith.constant 0 : index
    %c0_94 = arith.constant 0 : index
    %198 = vector.load %arg5[%c0_93, %c0_94] : memref<128x128xf32, #tpu.memory_space<vmem>>, vector<128x128xf32>
    %cst_95 = arith.constant dense<0.000000e+00> : vector<128x128xf32>
    %199 = tpu.matmul %197, %198, %cst_95 {dimension_numbers = #tpu.dot_dimension_numbers<[1], [0], [0], [1], [0, 0, 1, 1], [], []>} : vector<128x128xf32>, vector<128x128xf32>, vector<128x128xf32> -> vector<128x128xf32>
    %c0_96 = arith.constant 0 : index
    %c0_97 = arith.constant 0 : index
    %200 = vector.load %arg6[%c0_96, %c0_97] : memref<1x128xf32, #tpu.memory_space<vmem>>, vector<1x128xf32>
    %201 = vector.broadcast %200 : vector<1x128xf32> to vector<128x128xf32>
    %202 = arith.addf %199, %201 : vector<128x128xf32>
    %203 = arith.addf %202, %0 : vector<128x128xf32>
    %cst_98 = arith.constant dense<0.000000e+00> : vector<128xf32>
    %204 = vector.multi_reduction <add>, %203, %cst_98 [1] : vector<128x128xf32> to vector<128xf32>
    %205 = vector.shape_cast %204 : vector<128xf32> to vector<128x1xf32>
    %cst_99 = arith.constant 1.280000e+02 : f32
    %206 = vector.broadcast %cst_99 : f32 to vector<128x1xf32>
    %207 = arith.divf %205, %206 : vector<128x1xf32>
    %208 = vector.broadcast %207 : vector<128x1xf32> to vector<128x128xf32>
    %209 = arith.subf %203, %208 : vector<128x128xf32>
    %210 = arith.mulf %209, %209 : vector<128x128xf32>
    %cst_100 = arith.constant dense<0.000000e+00> : vector<128xf32>
    %211 = vector.multi_reduction <add>, %210, %cst_100 [1] : vector<128x128xf32> to vector<128xf32>
    %212 = vector.shape_cast %211 : vector<128xf32> to vector<128x1xf32>
    %cst_101 = arith.constant 1.280000e+02 : f32
    %213 = vector.broadcast %cst_101 : f32 to vector<128x1xf32>
    %214 = arith.divf %212, %213 : vector<128x1xf32>
    %215 = vector.broadcast %207 : vector<128x1xf32> to vector<128x128xf32>
    %216 = arith.subf %203, %215 : vector<128x128xf32>
    %cst_102 = arith.constant 9.99999997E-7 : f32
    %217 = vector.broadcast %cst_102 : f32 to vector<128x1xf32>
    %218 = arith.addf %214, %217 : vector<128x1xf32>
    %219 = math.rsqrt %218 : vector<128x1xf32>
    %220 = vector.broadcast %219 : vector<128x1xf32> to vector<128x128xf32>
    %221 = arith.mulf %216, %220 : vector<128x128xf32>
    %c0_103 = arith.constant 0 : index
    %c0_104 = arith.constant 0 : index
    %222 = vector.load %arg13[%c0_103, %c0_104] : memref<1x128xf32, #tpu.memory_space<vmem>>, vector<1x128xf32>
    %223 = vector.broadcast %222 : vector<1x128xf32> to vector<128x128xf32>
    %224 = arith.mulf %221, %223 : vector<128x128xf32>
    %c0_105 = arith.constant 0 : index
    %c0_106 = arith.constant 0 : index
    %225 = vector.load %arg14[%c0_105, %c0_106] : memref<1x128xf32, #tpu.memory_space<vmem>>, vector<1x128xf32>
    %226 = vector.broadcast %225 : vector<1x128xf32> to vector<128x128xf32>
    %227 = arith.addf %224, %226 : vector<128x128xf32>
    %c0_107 = arith.constant 0 : index
    %c0_108 = arith.constant 0 : index
    %228 = vector.load %arg9[%c0_107, %c0_108] : memref<128x256xf32, #tpu.memory_space<vmem>>, vector<128x256xf32>
    %cst_109 = arith.constant dense<0.000000e+00> : vector<128x256xf32>
    %229 = tpu.matmul %227, %228, %cst_109 {dimension_numbers = #tpu.dot_dimension_numbers<[1], [0], [0], [1], [0, 0, 1, 1], [], []>} : vector<128x128xf32>, vector<128x256xf32>, vector<128x256xf32> -> vector<128x256xf32>
    %c0_110 = arith.constant 0 : index
    %c0_111 = arith.constant 0 : index
    %230 = vector.load %arg10[%c0_110, %c0_111] : memref<1x256xf32, #tpu.memory_space<vmem>>, vector<1x256xf32>
    %231 = vector.broadcast %230 : vector<1x256xf32> to vector<128x256xf32>
    %232 = arith.addf %229, %231 : vector<128x256xf32>
    %cst_112 = arith.constant 5.000000e-01 : f32
    %233 = vector.broadcast %cst_112 : f32 to vector<128x256xf32>
    %234 = arith.mulf %233, %232 : vector<128x256xf32>
    %cst_113 = arith.constant 0.707106769 : f32
    %235 = vector.broadcast %cst_113 : f32 to vector<128x256xf32>
    %236 = arith.mulf %232, %235 : vector<128x256xf32>
    %237 = math.erf %236 : vector<128x256xf32>
    %cst_114 = arith.constant 1.000000e+00 : f32
    %238 = vector.broadcast %cst_114 : f32 to vector<128x256xf32>
    %239 = arith.addf %238, %237 : vector<128x256xf32>
    %240 = arith.mulf %234, %239 : vector<128x256xf32>
    %c0_115 = arith.constant 0 : index
    %c0_116 = arith.constant 0 : index
    %241 = vector.load %arg11[%c0_115, %c0_116] : memref<256x128xf32, #tpu.memory_space<vmem>>, vector<256x128xf32>
    %cst_117 = arith.constant dense<0.000000e+00> : vector<128x128xf32>
    %242 = tpu.matmul %240, %241, %cst_117 {dimension_numbers = #tpu.dot_dimension_numbers<[1], [0], [0], [1], [0, 0, 1, 1], [], []>} : vector<128x256xf32>, vector<256x128xf32>, vector<128x128xf32> -> vector<128x128xf32>
    %c0_118 = arith.constant 0 : index
    %c0_119 = arith.constant 0 : index
    %243 = vector.load %arg12[%c0_118, %c0_119] : memref<1x128xf32, #tpu.memory_space<vmem>>, vector<1x128xf32>
    %244 = vector.broadcast %243 : vector<1x128xf32> to vector<128x128xf32>
    %245 = arith.addf %242, %244 : vector<128x128xf32>
    %246 = arith.addf %245, %203 : vector<128x128xf32>
    %c0_120 = arith.constant 0 : index
    %c0_121 = arith.constant 0 : index
    %247 = vector.load %arg15[%c0_120, %c0_121] : memref<128x128xf32, #tpu.memory_space<vmem>>, vector<128x128xf32>
    tpu.vector_store %arg15[%c0_120, %c0_121], %246 {strides = array<i32>} : memref<128x128xf32, #tpu.memory_space<vmem>>, vector<128x128xf32>,
    return
  }
}

</mosaic_0001>

<llo_original>
// kernel: tpu_custom_call.1
$region0: #{tpu_custom_call.1}
  #allocation0 [shape = 'u32[]', space=smem, size = 0x4, offset = 0x4, fixed_abs, tag = 'smem constant byte address 0x4 - core index']
  #allocation1 [shape = 'u32[144,128]{1,0:T(1,128)}', space=vmem, size = 0x12000, scoped, tag = 'internal scratch']
  %s0 = inlined_call_operand.hbm [shape: f32[128,128], index: 0, kind: input, shape index: {}]
  %s1 = inlined_call_operand.hbm [shape: f32[2,64,64], index: 1, kind: input, shape index: {}]
  %s2 = inlined_call_operand.hbm [shape: f32[128,128], index: 2, kind: input, shape index: {}]
  %s3 = inlined_call_operand.hbm [shape: f32[128,128], index: 3, kind: input, shape index: {}]
  %s4 = inlined_call_operand.hbm [shape: f32[128,128], index: 4, kind: input, shape index: {}]
  %s5 = inlined_call_operand.hbm [shape: f32[128,128], index: 5, kind: input, shape index: {}]
  %s6 = inlined_call_operand.vmem [shape: f32[1,128], index: 6, kind: input, shape index: {}]
  %s7 = inlined_call_operand.vmem [shape: f32[1,128], index: 7, kind: input, shape index: {}]
  %s8 = inlined_call_operand.vmem [shape: f32[1,128], index: 8, kind: input, shape index: {}]
  %s9 = inlined_call_operand.hbm [shape: f32[128,256], index: 9, kind: input, shape index: {}]
  %s10 = inlined_call_operand.vmem [shape: f32[1,256], index: 10, kind: input, shape index: {}]
  %s11 = inlined_call_operand.hbm [shape: f32[256,128], index: 11, kind: input, shape index: {}]
  %s12 = inlined_call_operand.vmem [shape: f32[1,128], index: 12, kind: input, shape index: {}]
  %s13 = inlined_call_operand.vmem [shape: f32[1,128], index: 13, kind: input, shape index: {}]
  %s14 = inlined_call_operand.vmem [shape: f32[1,128], index: 14, kind: input, shape index: {}]
  %s15 = inlined_call_operand.hbm [shape: f32[128,128], index: 15, kind: output, shape index: {0}]
  %s16 = inlined_call_operand.hbm [shape: f32[2,4,64,64], index: 16, kind: output, shape index: {1}]
  %17 = xla_tuple %s15, %s16
  %s18 = sld [smem:[#allocation0]]
  $region110: #{tpu_custom_call.1} parent=0
    _
  %s20 = ssub.s32 1, %s18
  %s21 = scalar_select 0, %s20, %s18
  $region1: #{tpu_custom_call.1} parent=0
    #allocation2 [shape = 'u8[65536]{0}', space=vmem, size = 0x10000, scoped, tag = 'input window, operand 0, single buffered']
    #allocation3 [shape = 's32[1]{0}', space=sflag, size = 0x4, scoped, tag = 'scoped memory for tpu_custom_call.1']
    #allocation4 [shape = 's32[1]{0}', space=sflag, size = 0x4, scoped, tag = 'scoped memory for tpu_custom_call.1']
    #allocation5 [shape = 'u8[65536]{0}', space=vmem, size = 0x10000, scoped, tag = 'input window, operand 1, single buffered']
    #allocation6 [shape = 's32[1]{0}', space=sflag, size = 0x4, scoped, tag = 'scoped memory for tpu_custom_call.1']
    #allocation7 [shape = 'u8[65536]{0}', space=vmem, size = 0x10000, scoped, tag = 'input window, operand 2, single buffered']
    #allocation8 [shape = 'u8[65536]{0}', space=vmem, size = 0x10000, scoped, tag = 'input window, operand 3, single buffered']
    #allocation9 [shape = 's32[1]{0}', space=sflag, size = 0x4, scoped, tag = 'scoped memory for tpu_custom_call.1']
    #allocation10 [shape = 'u8[65536]{0}', space=vmem, size = 0x10000, scoped, tag = 'input window, operand 4, single buffered']
    #allocation11 [shape = 'u8[65536]{0}', space=vmem, size = 0x10000, scoped, tag = 'input window, operand 5, single buffered']
    #allocation12 [shape = 's32[1]{0}', space=sflag, size = 0x4, scoped, tag = 'scoped memory for tpu_custom_call.1']
    #allocation13 [shape = 'u8[131072]{0}', space=vmem, size = 0x20000, scoped, tag = 'input window, operand 9, single buffered']
    #allocation14 [shape = 'u8[131072]{0}', space=vmem, size = 0x20000, scoped, tag = 'input window, operand 11, single buffered']
    #allocation15 [shape = 's32[1]{0}', space=sflag, size = 0x4, scoped, tag = 'scoped memory for tpu_custom_call.1']
    #allocation16 [shape = 'u8[65536]{0}', space=vmem, size = 0x10000, scoped, tag = 'output window, operand 0, single buffered']
    #allocation17 [shape = 'u8[262144]{0}', space=vmem, size = 0x40000, scoped, tag = 'output window, operand 1, single buffered']
    #allocation18 [shape = 's32[1]{0}', space=sflag, size = 0x4, scoped, tag = 'scoped memory for tpu_custom_call.1']
    %22 = vsyncpa [#allocation3], 0
    %23 = vsyncpa [#allocation6], 0
    %24 = vsyncpa [#allocation9], 0
    %25 = vsyncpa [#allocation12], 0
    %26 = vsyncpa [#allocation15], 0
    %27 = vsyncpa [#allocation4], 0
    %28 = vsyncpa [#allocation18], 0
    // Predicated region
    $region2: #{tpu_custom_call.1} parent=1 // pred_check
      _
    $region3: #{tpu_custom_call.1} parent=1 // pred_check_branch
      %30 = sbr.rel (0) target = $region5
    $region4: #{tpu_custom_call.1} parent=1 // pred_region
      %s32 = ssub.s32 2048, 2048
      %33 = vsyncadd [#allocation3], %s32
      %s34 = sshll.u32 [#allocation2], 4
      %s35 = int_to_ptr.vmem [resolvable:$true] %s34
      %40 = dma.hbm_to_vmem [thread:$0]  %s0, 2048, %s35, [#allocation3], 128, 128, 8
    $region5: #{tpu_custom_call.1} parent=1 // pred_fallthru
      _
    // Predicated region
    $region6: #{tpu_custom_call.1} parent=1 // pred_check
      _
    $region7: #{tpu_custom_call.1} parent=1 // pred_check_branch
      %42 = sbr.rel (0) target = $region9
    $region8: #{tpu_custom_call.1} parent=1 // pred_region
      %s44 = ssub.s32 2048, 2048
      %45 = vsyncadd [#allocation6], %s44
      %s46 = sshll.u32 [#allocation5], 4
      %s47 = int_to_ptr.vmem [resolvable:$true] %s46
      %52 = dma.hbm_to_vmem [thread:$0]  %s1, 2048, %s47, [#allocation6], 128, 128, 8
    $region9: #{tpu_custom_call.1} parent=1 // pred_fallthru
      _
    // Predicated region
    $region10: #{tpu_custom_call.1} parent=1 // pred_check
      _
    $region11: #{tpu_custom_call.1} parent=1 // pred_check_branch
      %54 = sbr.rel (0) target = $region13
    $region12: #{tpu_custom_call.1} parent=1 // pred_region
      %s56 = ssub.s32 2048, 2048
      %57 = vsyncadd [#allocation6], %s56
      %s58 = sshll.u32 [#allocation7], 4
      %s59 = int_to_ptr.vmem [resolvable:$true] %s58
      %64 = dma.hbm_to_vmem [thread:$0]  %s2, 2048, %s59, [#allocation6], 128, 128, 8
    $region13: #{tpu_custom_call.1} parent=1 // pred_fallthru
      _
    // Predicated region
    $region14: #{tpu_custom_call.1} parent=1 // pred_check
      _
    $region15: #{tpu_custom_call.1} parent=1 // pred_check_branch
      %66 = sbr.rel (0) target = $region17
    $region16: #{tpu_custom_call.1} parent=1 // pred_region
      %s68 = ssub.s32 2048, 2048
      %69 = vsyncadd [#allocation9], %s68
      %s70 = sshll.u32 [#allocation8], 4
      %s71 = int_to_ptr.vmem [resolvable:$true] %s70
      %76 = dma.hbm_to_vmem [thread:$0]  %s3, 2048, %s71, [#allocation9], 128, 128, 8
    $region17: #{tpu_custom_call.1} parent=1 // pred_fallthru
      _
    // Predicated region
    $region18: #{tpu_custom_call.1} parent=1 // pred_check
      _
    $region19: #{tpu_custom_call.1} parent=1 // pred_check_branch
      %78 = sbr.rel (0) target = $region21
    $region20: #{tpu_custom_call.1} parent=1 // pred_region
      %s80 = ssub.s32 2048, 2048
      %81 = vsyncadd [#allocation9], %s80
      %s82 = sshll.u32 [#allocation10], 4
      %s83 = int_to_ptr.vmem [resolvable:$true] %s82
      %88 = dma.hbm_to_vmem [thread:$0]  %s4, 2048, %s83, [#allocation9], 128, 128, 8
    $region21: #{tpu_custom_call.1} parent=1 // pred_fallthru
      _
    // Predicated region
    $region22: #{tpu_custom_call.1} parent=1 // pred_check
      _
    $region23: #{tpu_custom_call.1} parent=1 // pred_check_branch
      %90 = sbr.rel (0) target = $region25
    $region24: #{tpu_custom_call.1} parent=1 // pred_region
      %s92 = ssub.s32 2048, 2048
      %93 = vsyncadd [#allocation12], %s92
      %s94 = sshll.u32 [#allocation11], 4
      %s95 = int_to_ptr.vmem [resolvable:$true] %s94
      %100 = dma.hbm_to_vmem [thread:$0]  %s5, 2048, %s95, [#allocation12], 128, 128, 8
    $region25: #{tpu_custom_call.1} parent=1 // pred_fallthru
      _
    // Predicated region
    $region26: #{tpu_custom_call.1} parent=1 // pred_check
      _
    $region27: #{tpu_custom_call.1} parent=1 // pred_check_branch
      %102 = sbr.rel (0) target = $region29
    $region28: #{tpu_custom_call.1} parent=1 // pred_region
      _
    $region29: #{tpu_custom_call.1} parent=1 // pred_fallthru
      _
    // Predicated region
    $region30: #{tpu_custom_call.1} parent=1 // pred_check
      _
    $region31: #{tpu_custom_call.1} parent=1 // pred_check_branch
      %104 = sbr.rel (0) target = $region33
    $region32: #{tpu_custom_call.1} parent=1 // pred_region
      _
    $region33: #{tpu_custom_call.1} parent=1 // pred_fallthru
      _
    // Predicated region
    $region34: #{tpu_custom_call.1} parent=1 // pred_check
      _
    $region35: #{tpu_custom_call.1} parent=1 // pred_check_branch
      %106 = sbr.rel (0) target = $region37
    $region36: #{tpu_custom_call.1} parent=1 // pred_region
      _
    $region37: #{tpu_custom_call.1} parent=1 // pred_fallthru
      _
    // Predicated region
    $region38: #{tpu_custom_call.1} parent=1 // pred_check
      _
    $region39: #{tpu_custom_call.1} parent=1 // pred_check_branch
      %108 = sbr.rel (0) target = $region41
    $region40: #{tpu_custom_call.1} parent=1 // pred_region
      %s110 = ssub.s32 4096, 4096
      %111 = vsyncadd [#allocation12], %s110
      %s112 = sshll.u32 [#allocation13], 4
      %s113 = int_to_ptr.vmem [resolvable:$true] %s112
      %118 = dma.hbm_to_vmem [thread:$0]  %s9, 4096, %s113, [#allocation12], 256, 256, 16
    $region41: #{tpu_custom_call.1} parent=1 // pred_fallthru
      _
    // Predicated region
    $region42: #{tpu_custom_call.1} parent=1 // pred_check
      _
    $region43: #{tpu_custom_call.1} parent=1 // pred_check_branch
      %120 = sbr.rel (0) target = $region45
    $region44: #{tpu_custom_call.1} parent=1 // pred_region
      _
    $region45: #{tpu_custom_call.1} parent=1 // pred_fallthru
      _
    // Predicated region
    $region46: #{tpu_custom_call.1} parent=1 // pred_check
      _
    $region47: #{tpu_custom_call.1} parent=1 // pred_check_branch
      %122 = sbr.rel (0) target = $region49
    $region48: #{tpu_custom_call.1} parent=1 // pred_region
      %s124 = ssub.s32 4096, 4096
      %125 = vsyncadd [#allocation15], %s124
      %s126 = sshll.u32 [#allocation14], 4
      %s127 = int_to_ptr.vmem [resolvable:$true] %s126
      %132 = dma.hbm_to_vmem [thread:$0]  %s11, 4096, %s127, [#allocation15], 128, 128, 8
    $region49: #{tpu_custom_call.1} parent=1 // pred_fallthru
      _
    // Predicated region
    $region50: #{tpu_custom_call.1} parent=1 // pred_check
      _
    $region51: #{tpu_custom_call.1} parent=1 // pred_check_branch
      %134 = sbr.rel (0) target = $region53
    $region52: #{tpu_custom_call.1} parent=1 // pred_region
      _
    $region53: #{tpu_custom_call.1} parent=1 // pred_fallthru
      _
    // Predicated region
    $region54: #{tpu_custom_call.1} parent=1 // pred_check
      _
    $region55: #{tpu_custom_call.1} parent=1 // pred_check_branch
      %136 = sbr.rel (0) target = $region57
    $region56: #{tpu_custom_call.1} parent=1 // pred_region
      _
    $region57: #{tpu_custom_call.1} parent=1 // pred_fallthru
      _
    // Predicated region
    $region58: #{tpu_custom_call.1} parent=1 // pred_check
      _
    $region59: #{tpu_custom_call.1} parent=1 // pred_check_branch
      %138 = sbr.rel (0) target = $region61
    $region60: #{tpu_custom_call.1} parent=1 // pred_region
      _
    $region61: #{tpu_custom_call.1} parent=1 // pred_fallthru
      _
    // Predicated region
    $region62: #{tpu_custom_call.1} parent=1 // pred_check
      _
    $region63: #{tpu_custom_call.1} parent=1 // pred_check_branch
      %140 = sbr.rel (0) target = $region65
    $region64: #{tpu_custom_call.1} parent=1 // pred_region
      %141 = dma.done [#allocation3], 2048
    $region65: #{tpu_custom_call.1} parent=1 // pred_fallthru
      _
    // Predicated region
    $region66: #{tpu_custom_call.1} parent=1 // pred_check
      _
    $region67: #{tpu_custom_call.1} parent=1 // pred_check_branch
      %143 = sbr.rel (0) target = $region69
    $region68: #{tpu_custom_call.1} parent=1 // pred_region
      %144 = dma.done [#allocation6], 2048
    $region69: #{tpu_custom_call.1} parent=1 // pred_fallthru
      _
    // Predicated region
    $region70: #{tpu_custom_call.1} parent=1 // pred_check
      _
    $region71: #{tpu_custom_call.1} parent=1 // pred_check_branch
      %146 = sbr.rel (0) target = $region73
    $region72: #{tpu_custom_call.1} parent=1 // pred_region
      %147 = dma.done [#allocation6], 2048
    $region73: #{tpu_custom_call.1} parent=1 // pred_fallthru
      _
    // Predicated region
    $region74: #{tpu_custom_call.1} parent=1 // pred_check
      _
    $region75: #{tpu_custom_call.1} parent=1 // pred_check_branch
      %149 = sbr.rel (0) target = $region77
    $region76: #{tpu_custom_call.1} parent=1 // pred_region
      %150 = dma.done [#allocation9], 2048
    $region77: #{tpu_custom_call.1} parent=1 // pred_fallthru
      _
    // Predicated region
    $region78: #{tpu_custom_call.1} parent=1 // pred_check
      _
    $region79: #{tpu_custom_call.1} parent=1 // pred_check_branch
      %152 = sbr.rel (0) target = $region81
    $region80: #{tpu_custom_call.1} parent=1 // pred_region
      %153 = dma.done [#allocation9], 2048
    $region81: #{tpu_custom_call.1} parent=1 // pred_fallthru
      _
    // Predicated region
    $region82: #{tpu_custom_call.1} parent=1 // pred_check
      _
    $region83: #{tpu_custom_call.1} parent=1 // pred_check_branch
      %155 = sbr.rel (0) target = $region85
    $region84: #{tpu_custom_call.1} parent=1 // pred_region
      %156 = dma.done [#allocation12], 2048
    $region85: #{tpu_custom_call.1} parent=1 // pred_fallthru
      _
    // Predicated region
    $region86: #{tpu_custom_call.1} parent=1 // pred_check
      _
    $region87: #{tpu_custom_call.1} parent=1 // pred_check_branch
      %158 = sbr.rel (0) target = $region89
    $region88: #{tpu_custom_call.1} parent=1 // pred_region
      %159 = dma.done [#allocation12], 4096
    $region89: #{tpu_custom_call.1} parent=1 // pred_fallthru
      _
    // Predicated region
    $region90: #{tpu_custom_call.1} parent=1 // pred_check
      _
    $region91: #{tpu_custom_call.1} parent=1 // pred_check_branch
      %161 = sbr.rel (0) target = $region93
    $region92: #{tpu_custom_call.1} parent=1 // pred_region
      %162 = dma.done [#allocation15], 4096
    $region93: #{tpu_custom_call.1} parent=1 // pred_fallthru
      _
    %v163 = vld [vmem:[#allocation2] sm:$0xff]
    %v164 = vld [vmem:[#allocation2 + $0x8] sm:$0xff]
    %v165 = vld [vmem:[#allocation2 + $0x10] sm:$0xff]
    %v166 = vld [vmem:[#allocation2 + $0x18] sm:$0xff]
    %v167 = vld [vmem:[#allocation2 + $0x20] sm:$0xff]
    %v168 = vld [vmem:[#allocation2 + $0x28] sm:$0xff]
    %v169 = vld [vmem:[#allocation2 + $0x30] sm:$0xff]
    %v170 = vld [vmem:[#allocation2 + $0x38] sm:$0xff]
    %v171 = vld [vmem:[#allocation2 + $0x40] sm:$0xff]
    %v172 = vld [vmem:[#allocation2 + $0x48] sm:$0xff]
    %v173 = vld [vmem:[#allocation2 + $0x50] sm:$0xff]
    %v174 = vld [vmem:[#allocation2 + $0x58] sm:$0xff]
    %v175 = vld [vmem:[#allocation2 + $0x60] sm:$0xff]
    %v176 = vld [vmem:[#allocation2 + $0x68] sm:$0xff]
    %v177 = vld [vmem:[#allocation2 + $0x70] sm:$0xff]
    %v178 = vld [vmem:[#allocation2 + $0x78] sm:$0xff]
    %179 = vadd.xlane.f32.xlu0 %v163
    %v180 = vpop.xlane.xlu0 %179
    %181 = vadd.xlane.f32.xlu0 %v164
    %v182 = vpop.xlane.xlu0 %181
    %183 = vadd.xlane.f32.xlu0 %v165
    %v184 = vpop.xlane.xlu0 %183
    %185 = vadd.xlane.f32.xlu0 %v166
    %v186 = vpop.xlane.xlu0 %185
    %187 = vadd.xlane.f32.xlu0 %v167
    %v188 = vpop.xlane.xlu0 %187
    %189 = vadd.xlane.f32.xlu0 %v168
    %v190 = vpop.xlane.xlu0 %189
    %191 = vadd.xlane.f32.xlu0 %v169
    %v192 = vpop.xlane.xlu0 %191
    %193 = vadd.xlane.f32.xlu0 %v170
    %v194 = vpop.xlane.xlu0 %193
    %195 = vadd.xlane.f32.xlu0 %v171
    %v196 = vpop.xlane.xlu0 %195
    %197 = vadd.xlane.f32.xlu0 %v172
    %v198 = vpop.xlane.xlu0 %197
    %199 = vadd.xlane.f32.xlu0 %v173
    %v200 = vpop.xlane.xlu0 %199
    %201 = vadd.xlane.f32.xlu0 %v174
    %v202 = vpop.xlane.xlu0 %201
    %203 = vadd.xlane.f32.xlu0 %v175
    %v204 = vpop.xlane.xlu0 %203
    %205 = vadd.xlane.f32.xlu0 %v176
    %v206 = vpop.xlane.xlu0 %205
    %207 = vadd.xlane.f32.xlu0 %v177
    %v208 = vpop.xlane.xlu0 %207
    %209 = vadd.xlane.f32.xlu0 %v178
    %v210 = vpop.xlane.xlu0 %209
    %v211 = vrcp.pop 128.0
    %v212 = vmul.f32 %v180, %v211
    %v213 = vmul.f32 %v182, %v211
    %v214 = vmul.f32 %v184, %v211
    %v215 = vmul.f32 %v186, %v211
    %v216 = vmul.f32 %v188, %v211
    %v217 = vmul.f32 %v190, %v211
    %v218 = vmul.f32 %v192, %v211
    %v219 = vmul.f32 %v194, %v211
    %v220 = vmul.f32 %v196, %v211
    %v221 = vmul.f32 %v198, %v211
    %v222 = vmul.f32 %v200, %v211
    %v223 = vmul.f32 %v202, %v211
    %v224 = vmul.f32 %v204, %v211
    %v225 = vmul.f32 %v206, %v211
    %v226 = vmul.f32 %v208, %v211
    %v227 = vmul.f32 %v210, %v211
    %v228 = vsub.f32 %v163, %v212
    %v229 = vsub.f32 %v164, %v213
    %v230 = vsub.f32 %v165, %v214
    %v231 = vsub.f32 %v166, %v215
    %v232 = vsub.f32 %v167, %v216
    %v233 = vsub.f32 %v168, %v217
    %v234 = vsub.f32 %v169, %v218
    %v235 = vsub.f32 %v170, %v219
    %v236 = vsub.f32 %v171, %v220
    %v237 = vsub.f32 %v172, %v221
    %v238 = vsub.f32 %v173, %v222
    %v239 = vsub.f32 %v174, %v223
    %v240 = vsub.f32 %v175, %v224
    %v241 = vsub.f32 %v176, %v225
    %v242 = vsub.f32 %v177, %v226
    %v243 = vsub.f32 %v178, %v227
    %v244 = vmul.f32 %v228, %v228
    %v245 = vmul.f32 %v229, %v229
    %v246 = vmul.f32 %v230, %v230
    %v247 = vmul.f32 %v231, %v231
    %v248 = vmul.f32 %v232, %v232
    %v249 = vmul.f32 %v233, %v233
    %v250 = vmul.f32 %v234, %v234
    %v251 = vmul.f32 %v235, %v235
    %v252 = vmul.f32 %v236, %v236
    %v253 = vmul.f32 %v237, %v237
    %v254 = vmul.f32 %v238, %v238
    %v255 = vmul.f32 %v239, %v239
    %v256 = vmul.f32 %v240, %v240
    %v257 = vmul.f32 %v241, %v241
    %v258 = vmul.f32 %v242, %v242
    %v259 = vmul.f32 %v243, %v243
    %260 = vadd.xlane.f32.xlu0 %v244
    %v261 = vpop.xlane.xlu0 %260
    %262 = vadd.xlane.f32.xlu0 %v245
    %v263 = vpop.xlane.xlu0 %262
    %264 = vadd.xlane.f32.xlu0 %v246
    %v265 = vpop.xlane.xlu0 %264
    %266 = vadd.xlane.f32.xlu0 %v247
    %v267 = vpop.xlane.xlu0 %266
    %268 = vadd.xlane.f32.xlu0 %v248
    %v269 = vpop.xlane.xlu0 %268
    %270 = vadd.xlane.f32.xlu0 %v249
    %v271 = vpop.xlane.xlu0 %270
    %272 = vadd.xlane.f32.xlu0 %v250
    %v273 = vpop.xlane.xlu0 %272
    %274 = vadd.xlane.f32.xlu0 %v251
    %v275 = vpop.xlane.xlu0 %274
    %276 = vadd.xlane.f32.xlu0 %v252
    %v277 = vpop.xlane.xlu0 %276
    %278 = vadd.xlane.f32.xlu0 %v253
    %v279 = vpop.xlane.xlu0 %278
    %280 = vadd.xlane.f32.xlu0 %v254
    %v281 = vpop.xlane.xlu0 %280
    %282 = vadd.xlane.f32.xlu0 %v255
    %v283 = vpop.xlane.xlu0 %282
    %284 = vadd.xlane.f32.xlu0 %v256
    %v285 = vpop.xlane.xlu0 %284
    %286 = vadd.xlane.f32.xlu0 %v257
    %v287 = vpop.xlane.xlu0 %286
    %288 = vadd.xlane.f32.xlu0 %v258
    %v289 = vpop.xlane.xlu0 %288
    %290 = vadd.xlane.f32.xlu0 %v259
    %v291 = vpop.xlane.xlu0 %290
    %v292 = vmul.f32 %v261, %v211
    %v293 = vmul.f32 %v263, %v211
    %v294 = vmul.f32 %v265, %v211
    %v295 = vmul.f32 %v267, %v211
    %v296 = vmul.f32 %v269, %v211
    %v297 = vmul.f32 %v271, %v211
    %v298 = vmul.f32 %v273, %v211
    %v299 = vmul.f32 %v275, %v211
    %v300 = vmul.f32 %v277, %v211
    %v301 = vmul.f32 %v279, %v211
    %v302 = vmul.f32 %v281, %v211
    %v303 = vmul.f32 %v283, %v211
    %v304 = vmul.f32 %v285, %v211
    %v305 = vmul.f32 %v287, %v211
    %v306 = vmul.f32 %v289, %v211
    %v307 = vmul.f32 %v291, %v211
    %v308 = vadd.f32 %v292, 1e-06
    %v309 = vadd.f32 %v293, 1e-06
    %v310 = vadd.f32 %v294, 1e-06
    %v311 = vadd.f32 %v295, 1e-06
    %v312 = vadd.f32 %v296, 1e-06
    %v313 = vadd.f32 %v297, 1e-06
    %v314 = vadd.f32 %v298, 1e-06
    %v315 = vadd.f32 %v299, 1e-06
    %v316 = vadd.f32 %v300, 1e-06
    %v317 = vadd.f32 %v301, 1e-06
    %v318 = vadd.f32 %v302, 1e-06
    %v319 = vadd.f32 %v303, 1e-06
    %v320 = vadd.f32 %v304, 1e-06
    %v321 = vadd.f32 %v305, 1e-06
    %v322 = vadd.f32 %v306, 1e-06
    %v323 = vadd.f32 %v307, 1e-06
    %v324 = vrsqrt.pop %v308
    %v325 = vrsqrt.pop %v309
    %v326 = vrsqrt.pop %v310
    %v327 = vrsqrt.pop %v311
    %v328 = vrsqrt.pop %v312
    %v329 = vrsqrt.pop %v313
    %v330 = vrsqrt.pop %v314
    %v331 = vrsqrt.pop %v315
    %v332 = vrsqrt.pop %v316
    %v333 = vrsqrt.pop %v317
    %v334 = vrsqrt.pop %v318
    %v335 = vrsqrt.pop %v319
    %v336 = vrsqrt.pop %v320
    %v337 = vrsqrt.pop %v321
    %v338 = vrsqrt.pop %v322
    %v339 = vrsqrt.pop %v323
    %v340 = vmul.f32 %v228, %v324
    %v341 = vmul.f32 %v229, %v325
    %v342 = vmul.f32 %v230, %v326
    %v343 = vmul.f32 %v231, %v327
    %v344 = vmul.f32 %v232, %v328
    %v345 = vmul.f32 %v233, %v329
    %v346 = vmul.f32 %v234, %v330
    %v347 = vmul.f32 %v235, %v331
    %v348 = vmul.f32 %v236, %v332
    %v349 = vmul.f32 %v237, %v333
    %v350 = vmul.f32 %v238, %v334
    %v351 = vmul.f32 %v239, %v335
    %v352 = vmul.f32 %v240, %v336
    %v353 = vmul.f32 %v241, %v337
    %v354 = vmul.f32 %v242, %v338
    %v355 = vmul.f32 %v243, %v339
    %v356 = vld [vmem:[%s7] sm:$0x1]
    %v358 = vlaneseq
    %v359 = vshrl.u32 %v358, 7
    %v360 = vsub.s32 0, %v359
    %v361 = vrot.slane %v356, %v360
    %v363 = vmul.f32 %v340, %v361
    %v364 = vmul.f32 %v341, %v361
    %v365 = vmul.f32 %v342, %v361
    %v366 = vmul.f32 %v343, %v361
    %v367 = vmul.f32 %v344, %v361
    %v368 = vmul.f32 %v345, %v361
    %v369 = vmul.f32 %v346, %v361
    %v370 = vmul.f32 %v347, %v361
    %v371 = vmul.f32 %v348, %v361
    %v372 = vmul.f32 %v349, %v361
    %v373 = vmul.f32 %v350, %v361
    %v374 = vmul.f32 %v351, %v361
    %v375 = vmul.f32 %v352, %v361
    %v376 = vmul.f32 %v353, %v361
    %v377 = vmul.f32 %v354, %v361
    %v378 = vmul.f32 %v355, %v361
    %v379 = vld [vmem:[%s8] sm:$0x1]
    %v381 = vlaneseq
    %v382 = vshrl.u32 %v381, 7
    %v383 = vsub.s32 0, %v382
    %v384 = vrot.slane %v379, %v383
    %v386 = vadd.f32 %v363, %v384
    %v387 = vadd.f32 %v364, %v384
    %v388 = vadd.f32 %v365, %v384
    %v389 = vadd.f32 %v366, %v384
    %v390 = vadd.f32 %v367, %v384
    %v391 = vadd.f32 %v368, %v384
    %v392 = vadd.f32 %v369, %v384
    %v393 = vadd.f32 %v370, %v384
    %v394 = vadd.f32 %v371, %v384
    %v395 = vadd.f32 %v372, %v384
    %v396 = vadd.f32 %v373, %v384
    %v397 = vadd.f32 %v374, %v384
    %v398 = vadd.f32 %v375, %v384
    %v399 = vadd.f32 %v376, %v384
    %v400 = vadd.f32 %v377, %v384
    %v401 = vadd.f32 %v378, %v384
    %v402 = vld [vmem:[#allocation7] sm:$0xff]
    %v403 = vld [vmem:[#allocation7 + $0x8] sm:$0xff]
    %v404 = vld [vmem:[#allocation7 + $0x10] sm:$0xff]
    %v405 = vld [vmem:[#allocation7 + $0x18] sm:$0xff]
    %v406 = vld [vmem:[#allocation7 + $0x20] sm:$0xff]
    %v407 = vld [vmem:[#allocation7 + $0x28] sm:$0xff]
    %v408 = vld [vmem:[#allocation7 + $0x30] sm:$0xff]
    %v409 = vld [vmem:[#allocation7 + $0x38] sm:$0xff]
    %v410 = vld [vmem:[#allocation7 + $0x40] sm:$0xff]
    %v411 = vld [vmem:[#allocation7 + $0x48] sm:$0xff]
    %v412 = vld [vmem:[#allocation7 + $0x50] sm:$0xff]
    %v413 = vld [vmem:[#allocation7 + $0x58] sm:$0xff]
    %v414 = vld [vmem:[#allocation7 + $0x60] sm:$0xff]
    %v415 = vld [vmem:[#allocation7 + $0x68] sm:$0xff]
    %v416 = vld [vmem:[#allocation7 + $0x70] sm:$0xff]
    %v417 = vld [vmem:[#allocation7 + $0x78] sm:$0xff]
    %418 = vmatprep.subr.mxu0 0.0
    %419 = vmatpush1.msra.mxu0 %v402
    %420 = vmatprep.subr.mxu0 0.0
    %421 = vmatpush1.msra.mxu0 %v403
    %422 = vmatprep.subr.mxu0 0.0
    %423 = vmatpush1.msra.mxu0 %v404
    %424 = vmatprep.subr.mxu0 0.0
    %425 = vmatpush1.msra.mxu0 %v405
    %426 = vmatprep.subr.mxu0 0.0
    %427 = vmatpush1.msra.mxu0 %v406
    %428 = vmatprep.subr.mxu0 0.0
    %429 = vmatpush1.msra.mxu0 %v407
    %430 = vmatprep.subr.mxu0 0.0
    %431 = vmatpush1.msra.mxu0 %v408
    %432 = vmatprep.subr.mxu0 0.0
    %433 = vmatpush1.msra.mxu0 %v409
    %434 = vmatprep.subr.mxu0 0.0
    %435 = vmatpush1.msra.mxu0 %v410
    %436 = vmatprep.subr.mxu0 0.0
    %437 = vmatpush1.msra.mxu0 %v411
    %438 = vmatprep.subr.mxu0 0.0
    %439 = vmatpush1.msra.mxu0 %v412
    %440 = vmatprep.subr.mxu0 0.0
    %441 = vmatpush1.msra.mxu0 %v413
    %442 = vmatprep.subr.mxu0 0.0
    %443 = vmatpush1.msra.mxu0 %v414
    %444 = vmatprep.subr.mxu0 0.0
    %445 = vmatpush1.msra.mxu0 %v415
    %446 = vmatprep.subr.mxu0 0.0
    %447 = vmatpush1.msra.mxu0 %v416
    %448 = vmatprep.subr.mxu0 0.0
    %449 = vmatpush1.msra.mxu0 %v417
    %450 = vmatprep.subr.mxu0 0.0
    %451 = vmatpush1.msra.mxu0 0.0
    %452 = vmatprep.subr.mxu0 0.0
    %453 = vmatpush1.msra.mxu0 0.0
    %454 = vmatprep.subr.mxu0 0.0
    %455 = vmatpush1.msra.mxu0 0.0
    %456 = vmatprep.subr.mxu0 0.0
    %457 = vmatpush1.msra.mxu0 0.0
    %458 = vmatprep.subr.mxu0 0.0
    %459 = vmatpush1.msra.mxu0 0.0
    %460 = vmatprep.subr.mxu0 0.0
    %461 = vmatpush1.msra.mxu0 0.0
    %462 = vmatprep.subr.mxu0 0.0
    %463 = vmatpush1.msra.mxu0 0.0
    %464 = vmatprep.subr.mxu0 0.0
    %465 = vmatpush1.msra.mxu0 0.0
    %466 = vmatprep.subr.mxu0 0.0
    %467 = vmatpush1.msra.mxu0 0.0
    %468 = vmatprep.subr.mxu0 0.0
    %469 = vmatpush1.msra.mxu0 0.0
    %470 = vmatprep.subr.mxu0 0.0
    %471 = vmatpush1.msra.mxu0 0.0
    %472 = vmatprep.subr.mxu0 0.0
    %473 = vmatpush1.msra.mxu0 0.0
    %474 = vmatprep.subr.mxu0 0.0
    %475 = vmatpush1.msra.mxu0 0.0
    %476 = vmatprep.subr.mxu0 0.0
    %477 = vmatpush1.msra.mxu0 0.0
    %478 = vmatprep.subr.mxu0 0.0
    %479 = vmatpush1.msra.mxu0 0.0
    %480 = vmatprep.subr.mxu0 0.0
    %481 = vmatpush1.msra.mxu0 0.0
    %482 = vmatprep.mubr.f32.mxu0 0.0
    %483 = vmatmul.mubr.f32.gmra.mrb[0].mxu0 %v386
    %v484 = vpop.f32.mrb[0].mxu0
    %v485 = vadd.f32 0.0, %v484
    %v486 = vpop.f32.mrb[0].mxu0
    %487 = vmatprep.mubr.f32.mxu0 0.0
    %488 = vmatmul.mubr.f32.gmra.mrb[0].mxu0 %v387
    %v489 = vpop.f32.mrb[0].mxu0
    %v490 = vadd.f32 0.0, %v489
    %v491 = vpop.f32.mrb[0].mxu0
    %492 = vmatprep.mubr.f32.mxu0 0.0
    %493 = vmatmul.mubr.f32.gmra.mrb[0].mxu0 %v388
    %v494 = vpop.f32.mrb[0].mxu0
    %v495 = vadd.f32 0.0, %v494
    %v496 = vpop.f32.mrb[0].mxu0
    %497 = vmatprep.mubr.f32.mxu0 0.0
    %498 = vmatmul.mubr.f32.gmra.mrb[0].mxu0 %v389
    %v499 = vpop.f32.mrb[0].mxu0
    %v500 = vadd.f32 0.0, %v499
    %v501 = vpop.f32.mrb[0].mxu0
    %502 = vmatprep.mubr.f32.mxu0 0.0
    %503 = vmatmul.mubr.f32.gmra.mrb[0].mxu0 %v390
    %v504 = vpop.f32.mrb[0].mxu0
    %v505 = vadd.f32 0.0, %v504
    %v506 = vpop.f32.mrb[0].mxu0
    %507 = vmatprep.mubr.f32.mxu0 0.0
    %508 = vmatmul.mubr.f32.gmra.mrb[0].mxu0 %v391
    %v509 = vpop.f32.mrb[0].mxu0
    %v510 = vadd.f32 0.0, %v509
    %v511 = vpop.f32.mrb[0].mxu0
    %512 = vmatprep.mubr.f32.mxu0 0.0
    %513 = vmatmul.mubr.f32.gmra.mrb[0].mxu0 %v392
    %v514 = vpop.f32.mrb[0].mxu0
    %v515 = vadd.f32 0.0, %v514
    %v516 = vpop.f32.mrb[0].mxu0
    %517 = vmatprep.mubr.f32.mxu0 0.0
    %518 = vmatmul.mubr.f32.gmra.mrb[0].mxu0 %v393
    %v519 = vpop.f32.mrb[0].mxu0
    %v520 = vadd.f32 0.0, %v519
    %v521 = vpop.f32.mrb[0].mxu0
    %522 = vmatprep.mubr.f32.mxu0 0.0
    %523 = vmatmul.mubr.f32.gmra.mrb[0].mxu0 %v394
    %v524 = vpop.f32.mrb[0].mxu0
    %v525 = vadd.f32 0.0, %v524
    %v526 = vpop.f32.mrb[0].mxu0
    %527 = vmatprep.mubr.f32.mxu0 0.0
    %528 = vmatmul.mubr.f32.gmra.mrb[0].mxu0 %v395
    %v529 = vpop.f32.mrb[0].mxu0
    %v530 = vadd.f32 0.0, %v529
    %v531 = vpop.f32.mrb[0].mxu0
    %532 = vmatprep.mubr.f32.mxu0 0.0
    %533 = vmatmul.mubr.f32.gmra.mrb[0].mxu0 %v396
    %v534 = vpop.f32.mrb[0].mxu0
    %v535 = vadd.f32 0.0, %v534
    %v536 = vpop.f32.mrb[0].mxu0
    %537 = vmatprep.mubr.f32.mxu0 0.0
    %538 = vmatmul.mubr.f32.gmra.mrb[0].mxu0 %v397
    %v539 = vpop.f32.mrb[0].mxu0
    %v540 = vadd.f32 0.0, %v539
    %v541 = vpop.f32.mrb[0].mxu0
    %542 = vmatprep.mubr.f32.mxu0 0.0
    %543 = vmatmul.mubr.f32.gmra.mrb[0].mxu0 %v398
    %v544 = vpop.f32.mrb[0].mxu0
    %v545 = vadd.f32 0.0, %v544
    %v546 = vpop.f32.mrb[0].mxu0
    %547 = vmatprep.mubr.f32.mxu0 0.0
    %548 = vmatmul.mubr.f32.gmra.mrb[0].mxu0 %v399
    %v549 = vpop.f32.mrb[0].mxu0
    %v550 = vadd.f32 0.0, %v549
    %v551 = vpop.f32.mrb[0].mxu0
    %552 = vmatprep.mubr.f32.mxu0 0.0
    %553 = vmatmul.mubr.f32.gmra.mrb[0].mxu0 %v400
    %v554 = vpop.f32.mrb[0].mxu0
    %v555 = vadd.f32 0.0, %v554
    %v556 = vpop.f32.mrb[0].mxu0
    %557 = vmatprep.mubr.f32.mxu0 0.0
    %558 = vmatmul.mubr.f32.gmra.mrb[0].mxu0 %v401
    %v559 = vpop.f32.mrb[0].mxu0
    %v560 = vadd.f32 0.0, %v559
    %v561 = vpop.f32.mrb[0].mxu0
    %562 = vdwg.mxu0
    %v563 = vld [vmem:[#allocation8] sm:$0xff]
    %v564 = vld [vmem:[#allocation8 + $0x8] sm:$0xff]
    %v565 = vld [vmem:[#allocation8 + $0x10] sm:$0xff]
    %v566 = vld [vmem:[#allocation8 + $0x18] sm:$0xff]
    %v567 = vld [vmem:[#allocation8 + $0x20] sm:$0xff]
    %v568 = vld [vmem:[#allocation8 + $0x28] sm:$0xff]
    %v569 = vld [vmem:[#allocation8 + $0x30] sm:$0xff]
    %v570 = vld [vmem:[#allocation8 + $0x38] sm:$0xff]
    %v571 = vld [vmem:[#allocation8 + $0x40] sm:$0xff]
    %v572 = vld [vmem:[#allocation8 + $0x48] sm:$0xff]
    %v573 = vld [vmem:[#allocation8 + $0x50] sm:$0xff]
    %v574 = vld [vmem:[#allocation8 + $0x58] sm:$0xff]
    %v575 = vld [vmem:[#allocation8 + $0x60] sm:$0xff]
    %v576 = vld [vmem:[#allocation8 + $0x68] sm:$0xff]
    %v577 = vld [vmem:[#allocation8 + $0x70] sm:$0xff]
    %v578 = vld [vmem:[#allocation8 + $0x78] sm:$0xff]
    %579 = vmatprep.subr.mxu0 0.0
    %580 = vmatpush1.msra.mxu0 %v563
    %581 = vmatprep.subr.mxu0 0.0
    %582 = vmatpush1.msra.mxu0 %v564
    %583 = vmatprep.subr.mxu0 0.0
    %584 = vmatpush1.msra.mxu0 %v565
    %585 = vmatprep.subr.mxu0 0.0
    %586 = vmatpush1.msra.mxu0 %v566
    %587 = vmatprep.subr.mxu0 0.0
    %588 = vmatpush1.msra.mxu0 %v567
    %589 = vmatprep.subr.mxu0 0.0
    %590 = vmatpush1.msra.mxu0 %v568
    %591 = vmatprep.subr.mxu0 0.0
    %592 = vmatpush1.msra.mxu0 %v569
    %593 = vmatprep.subr.mxu0 0.0
    %594 = vmatpush1.msra.mxu0 %v570
    %595 = vmatprep.subr.mxu0 0.0
    %596 = vmatpush1.msra.mxu0 %v571
    %597 = vmatprep.subr.mxu0 0.0
    %598 = vmatpush1.msra.mxu0 %v572
    %599 = vmatprep.subr.mxu0 0.0
    %600 = vmatpush1.msra.mxu0 %v573
    %601 = vmatprep.subr.mxu0 0.0
    %602 = vmatpush1.msra.mxu0 %v574
    %603 = vmatprep.subr.mxu0 0.0
    %604 = vmatpush1.msra.mxu0 %v575
    %605 = vmatprep.subr.mxu0 0.0
    %606 = vmatpush1.msra.mxu0 %v576
    %607 = vmatprep.subr.mxu0 0.0
    %608 = vmatpush1.msra.mxu0 %v577
    %609 = vmatprep.subr.mxu0 0.0
    %610 = vmatpush1.msra.mxu0 %v578
    %611 = vmatprep.subr.mxu0 0.0
    %612 = vmatpush1.msra.mxu0 0.0
    %613 = vmatprep.subr.mxu0 0.0
    %614 = vmatpush1.msra.mxu0 0.0
    %615 = vmatprep.subr.mxu0 0.0
    %616 = vmatpush1.msra.mxu0 0.0
    %617 = vmatprep.subr.mxu0 0.0
    %618 = vmatpush1.msra.mxu0 0.0
    %619 = vmatprep.subr.mxu0 0.0
    %620 = vmatpush1.msra.mxu0 0.0
    %621 = vmatprep.subr.mxu0 0.0
    %622 = vmatpush1.msra.mxu0 0.0
    %623 = vmatprep.subr.mxu0 0.0
    %624 = vmatpush1.msra.mxu0 0.0
    %625 = vmatprep.subr.mxu0 0.0
    %626 = vmatpush1.msra.mxu0 0.0
    %627 = vmatprep.subr.mxu0 0.0
    %628 = vmatpush1.msra.mxu0 0.0
    %629 = vmatprep.subr.mxu0 0.0
    %630 = vmatpush1.msra.mxu0 0.0
    %631 = vmatprep.subr.mxu0 0.0
    %632 = vmatpush1.msra.mxu0 0.0
    %633 = vmatprep.subr.mxu0 0.0
    %634 = vmatpush1.msra.mxu0 0.0
    %635 = vmatprep.subr.mxu0 0.0
    %636 = vmatpush1.msra.mxu0 0.0
    %637 = vmatprep.subr.mxu0 0.0
    %638 = vmatpush1.msra.mxu0 0.0
    %639 = vmatprep.subr.mxu0 0.0
    %640 = vmatpush1.msra.mxu0 0.0
    %641 = vmatprep.subr.mxu0 0.0
    %642 = vmatpush1.msra.mxu0 0.0
    %643 = vmatprep.mubr.f32.mxu0 0.0
    %644 = vmatmul.mubr.f32.gmra.mrb[0].mxu0 %v163
    %v645 = vpop.f32.mrb[0].mxu0
    %v646 = vadd.f32 0.0, %v645
    %v647 = vpop.f32.mrb[0].mxu0
    %648 = vmatprep.mubr.f32.mxu0 0.0
    %649 = vmatmul.mubr.f32.gmra.mrb[0].mxu0 %v164
    %v650 = vpop.f32.mrb[0].mxu0
    %v651 = vadd.f32 0.0, %v650
    %v652 = vpop.f32.mrb[0].mxu0
    %653 = vmatprep.mubr.f32.mxu0 0.0
    %654 = vmatmul.mubr.f32.gmra.mrb[0].mxu0 %v165
    %v655 = vpop.f32.mrb[0].mxu0
    %v656 = vadd.f32 0.0, %v655
    %v657 = vpop.f32.mrb[0].mxu0
    %658 = vmatprep.mubr.f32.mxu0 0.0
    %659 = vmatmul.mubr.f32.gmra.mrb[0].mxu0 %v166
    %v660 = vpop.f32.mrb[0].mxu0
    %v661 = vadd.f32 0.0, %v660
    %v662 = vpop.f32.mrb[0].mxu0
    %663 = vmatprep.mubr.f32.mxu0 0.0
    %664 = vmatmul.mubr.f32.gmra.mrb[0].mxu0 %v167
    %v665 = vpop.f32.mrb[0].mxu0
    %v666 = vadd.f32 0.0, %v665
    %v667 = vpop.f32.mrb[0].mxu0
    %668 = vmatprep.mubr.f32.mxu0 0.0
    %669 = vmatmul.mubr.f32.gmra.mrb[0].mxu0 %v168
    %v670 = vpop.f32.mrb[0].mxu0
    %v671 = vadd.f32 0.0, %v670
    %v672 = vpop.f32.mrb[0].mxu0
    %673 = vmatprep.mubr.f32.mxu0 0.0
    %674 = vmatmul.mubr.f32.gmra.mrb[0].mxu0 %v169
    %v675 = vpop.f32.mrb[0].mxu0
    %v676 = vadd.f32 0.0, %v675
    %v677 = vpop.f32.mrb[0].mxu0
    %678 = vmatprep.mubr.f32.mxu0 0.0
    %679 = vmatmul.mubr.f32.gmra.mrb[0].mxu0 %v170
    %v680 = vpop.f32.mrb[0].mxu0
    %v681 = vadd.f32 0.0, %v680
    %v682 = vpop.f32.mrb[0].mxu0
    %683 = vmatprep.mubr.f32.mxu0 0.0
    %684 = vmatmul.mubr.f32.gmra.mrb[0].mxu0 %v171
    %v685 = vpop.f32.mrb[0].mxu0
    %v686 = vadd.f32 0.0, %v685
    %v687 = vpop.f32.mrb[0].mxu0
    %688 = vmatprep.mubr.f32.mxu0 0.0
    %689 = vmatmul.mubr.f32.gmra.mrb[0].mxu0 %v172
    %v690 = vpop.f32.mrb[0].mxu0
    %v691 = vadd.f32 0.0, %v690
    %v692 = vpop.f32.mrb[0].mxu0
    %693 = vmatprep.mubr.f32.mxu0 0.0
    %694 = vmatmul.mubr.f32.gmra.mrb[0].mxu0 %v173
    %v695 = vpop.f32.mrb[0].mxu0
    %v696 = vadd.f32 0.0, %v695
    %v697 = vpop.f32.mrb[0].mxu0
    %698 = vmatprep.mubr.f32.mxu0 0.0
    %699 = vmatmul.mubr.f32.gmra.mrb[0].mxu0 %v174
    %v700 = vpop.f32.mrb[0].mxu0
    %v701 = vadd.f32 0.0, %v700
    %v702 = vpop.f32.mrb[0].mxu0
    %703 = vmatprep.mubr.f32.mxu0 0.0
    %704 = vmatmul.mubr.f32.gmra.mrb[0].mxu0 %v175
    %v705 = vpop.f32.mrb[0].mxu0
    %v706 = vadd.f32 0.0, %v705
    %v707 = vpop.f32.mrb[0].mxu0
    %708 = vmatprep.mubr.f32.mxu0 0.0
    %709 = vmatmul.mubr.f32.gmra.mrb[0].mxu0 %v176
    %v710 = vpop.f32.mrb[0].mxu0
    %v711 = vadd.f32 0.0, %v710
    %v712 = vpop.f32.mrb[0].mxu0
    %713 = vmatprep.mubr.f32.mxu0 0.0
    %714 = vmatmul.mubr.f32.gmra.mrb[0].mxu0 %v177
    %v715 = vpop.f32.mrb[0].mxu0
    %v716 = vadd.f32 0.0, %v715
    %v717 = vpop.f32.mrb[0].mxu0
    %718 = vmatprep.mubr.f32.mxu0 0.0
    %719 = vmatmul.mubr.f32.gmra.mrb[0].mxu0 %v178
    %v720 = vpop.f32.mrb[0].mxu0
    %v721 = vadd.f32 0.0, %v720
    %v722 = vpop.f32.mrb[0].mxu0
    %723 = vdwg.mxu0
    %v724 = vld [vmem:[#allocation10] sm:$0xff]
    %v725 = vld [vmem:[#allocation10 + $0x8] sm:$0xff]
    %v726 = vld [vmem:[#allocation10 + $0x10] sm:$0xff]
    %v727 = vld [vmem:[#allocation10 + $0x18] sm:$0xff]
    %v728 = vld [vmem:[#allocation10 + $0x20] sm:$0xff]
    %v729 = vld [vmem:[#allocation10 + $0x28] sm:$0xff]
    %v730 = vld [vmem:[#allocation10 + $0x30] sm:$0xff]
    %v731 = vld [vmem:[#allocation10 + $0x38] sm:$0xff]
    %v732 = vld [vmem:[#allocation10 + $0x40] sm:$0xff]
    %v733 = vld [vmem:[#allocation10 + $0x48] sm:$0xff]
    %v734 = vld [vmem:[#allocation10 + $0x50] sm:$0xff]
    %v735 = vld [vmem:[#allocation10 + $0x58] sm:$0xff]
    %v736 = vld [vmem:[#allocation10 + $0x60] sm:$0xff]
    %v737 = vld [vmem:[#allocation10 + $0x68] sm:$0xff]
    %v738 = vld [vmem:[#allocation10 + $0x70] sm:$0xff]
    %v739 = vld [vmem:[#allocation10 + $0x78] sm:$0xff]
    %740 = vmatprep.subr.mxu0 0.0
    %741 = vmatpush1.msra.mxu0 %v724
    %742 = vmatprep.subr.mxu0 0.0
    %743 = vmatpush1.msra.mxu0 %v725
    %744 = vmatprep.subr.mxu0 0.0
    %745 = vmatpush1.msra.mxu0 %v726
    %746 = vmatprep.subr.mxu0 0.0
    %747 = vmatpush1.msra.mxu0 %v727
    %748 = vmatprep.subr.mxu0 0.0
    %749 = vmatpush1.msra.mxu0 %v728
    %750 = vmatprep.subr.mxu0 0.0
    %751 = vmatpush1.msra.mxu0 %v729
    %752 = vmatprep.subr.mxu0 0.0
    %753 = vmatpush1.msra.mxu0 %v730
    %754 = vmatprep.subr.mxu0 0.0
    %755 = vmatpush1.msra.mxu0 %v731
    %756 = vmatprep.subr.mxu0 0.0
    %757 = vmatpush1.msra.mxu0 %v732
    %758 = vmatprep.subr.mxu0 0.0
    %759 = vmatpush1.msra.mxu0 %v733
    %760 = vmatprep.subr.mxu0 0.0
    %761 = vmatpush1.msra.mxu0 %v734
    %762 = vmatprep.subr.mxu0 0.0
    %763 = vmatpush1.msra.mxu0 %v735
    %764 = vmatprep.subr.mxu0 0.0
    %765 = vmatpush1.msra.mxu0 %v736
    %766 = vmatprep.subr.mxu0 0.0
    %767 = vmatpush1.msra.mxu0 %v737
    %768 = vmatprep.subr.mxu0 0.0
    %769 = vmatpush1.msra.mxu0 %v738
    %770 = vmatprep.subr.mxu0 0.0
    %771 = vmatpush1.msra.mxu0 %v739
    %772 = vmatprep.subr.mxu0 0.0
    %773 = vmatpush1.msra.mxu0 0.0
    %774 = vmatprep.subr.mxu0 0.0
    %775 = vmatpush1.msra.mxu0 0.0
    %776 = vmatprep.subr.mxu0 0.0
    %777 = vmatpush1.msra.mxu0 0.0
    %778 = vmatprep.subr.mxu0 0.0
    %779 = vmatpush1.msra.mxu0 0.0
    %780 = vmatprep.subr.mxu0 0.0
    %781 = vmatpush1.msra.mxu0 0.0
    %782 = vmatprep.subr.mxu0 0.0
    %783 = vmatpush1.msra.mxu0 0.0
    %784 = vmatprep.subr.mxu0 0.0
    %785 = vmatpush1.msra.mxu0 0.0
    %786 = vmatprep.subr.mxu0 0.0
    %787 = vmatpush1.msra.mxu0 0.0
    %788 = vmatprep.subr.mxu0 0.0
    %789 = vmatpush1.msra.mxu0 0.0
    %790 = vmatprep.subr.mxu0 0.0
    %791 = vmatpush1.msra.mxu0 0.0
    %792 = vmatprep.subr.mxu0 0.0
    %793 = vmatpush1.msra.mxu0 0.0
    %794 = vmatprep.subr.mxu0 0.0
    %795 = vmatpush1.msra.mxu0 0.0
    %796 = vmatprep.subr.mxu0 0.0
    %797 = vmatpush1.msra.mxu0 0.0
    %798 = vmatprep.subr.mxu0 0.0
    %799 = vmatpush1.msra.mxu0 0.0
    %800 = vmatprep.subr.mxu0 0.0
    %801 = vmatpush1.msra.mxu0 0.0
    %802 = vmatprep.subr.mxu0 0.0
    %803 = vmatpush1.msra.mxu0 0.0
    %804 = vmatprep.mubr.f32.mxu0 0.0
    %805 = vmatmul.mubr.f32.gmra.mrb[0].mxu0 %v163
    %v806 = vpop.f32.mrb[0].mxu0
    %v807 = vadd.f32 0.0, %v806
    %v808 = vpop.f32.mrb[0].mxu0
    %809 = vmatprep.mubr.f32.mxu0 0.0
    %810 = vmatmul.mubr.f32.gmra.mrb[0].mxu0 %v164
    %v811 = vpop.f32.mrb[0].mxu0
    %v812 = vadd.f32 0.0, %v811
    %v813 = vpop.f32.mrb[0].mxu0
    %814 = vmatprep.mubr.f32.mxu0 0.0
    %815 = vmatmul.mubr.f32.gmra.mrb[0].mxu0 %v165
    %v816 = vpop.f32.mrb[0].mxu0
    %v817 = vadd.f32 0.0, %v816
    %v818 = vpop.f32.mrb[0].mxu0
    %819 = vmatprep.mubr.f32.mxu0 0.0
    %820 = vmatmul.mubr.f32.gmra.mrb[0].mxu0 %v166
    %v821 = vpop.f32.mrb[0].mxu0
    %v822 = vadd.f32 0.0, %v821
    %v823 = vpop.f32.mrb[0].mxu0
    %824 = vmatprep.mubr.f32.mxu0 0.0
    %825 = vmatmul.mubr.f32.gmra.mrb[0].mxu0 %v167
    %v826 = vpop.f32.mrb[0].mxu0
    %v827 = vadd.f32 0.0, %v826
    %v828 = vpop.f32.mrb[0].mxu0
    %829 = vmatprep.mubr.f32.mxu0 0.0
    %830 = vmatmul.mubr.f32.gmra.mrb[0].mxu0 %v168
    %v831 = vpop.f32.mrb[0].mxu0
    %v832 = vadd.f32 0.0, %v831
    %v833 = vpop.f32.mrb[0].mxu0
    %834 = vmatprep.mubr.f32.mxu0 0.0
    %835 = vmatmul.mubr.f32.gmra.mrb[0].mxu0 %v169
    %v836 = vpop.f32.mrb[0].mxu0
    %v837 = vadd.f32 0.0, %v836
    %v838 = vpop.f32.mrb[0].mxu0
    %839 = vmatprep.mubr.f32.mxu0 0.0
    %840 = vmatmul.mubr.f32.gmra.mrb[0].mxu0 %v170
    %v841 = vpop.f32.mrb[0].mxu0
    %v842 = vadd.f32 0.0, %v841
    %v843 = vpop.f32.mrb[0].mxu0
    %844 = vmatprep.mubr.f32.mxu0 0.0
    %845 = vmatmul.mubr.f32.gmra.mrb[0].mxu0 %v171
    %v846 = vpop.f32.mrb[0].mxu0
    %v847 = vadd.f32 0.0, %v846
    %v848 = vpop.f32.mrb[0].mxu0
    %849 = vmatprep.mubr.f32.mxu0 0.0
    %850 = vmatmul.mubr.f32.gmra.mrb[0].mxu0 %v172
    %v851 = vpop.f32.mrb[0].mxu0
    %v852 = vadd.f32 0.0, %v851
    %v853 = vpop.f32.mrb[0].mxu0
    %854 = vmatprep.mubr.f32.mxu0 0.0
    %855 = vmatmul.mubr.f32.gmra.mrb[0].mxu0 %v173
    %v856 = vpop.f32.mrb[0].mxu0
    %v857 = vadd.f32 0.0, %v856
    %v858 = vpop.f32.mrb[0].mxu0
    %859 = vmatprep.mubr.f32.mxu0 0.0
    %860 = vmatmul.mubr.f32.gmra.mrb[0].mxu0 %v174
    %v861 = vpop.f32.mrb[0].mxu0
    %v862 = vadd.f32 0.0, %v861
    %v863 = vpop.f32.mrb[0].mxu0
    %864 = vmatprep.mubr.f32.mxu0 0.0
    %865 = vmatmul.mubr.f32.gmra.mrb[0].mxu0 %v175
    %v866 = vpop.f32.mrb[0].mxu0
    %v867 = vadd.f32 0.0, %v866
    %v868 = vpop.f32.mrb[0].mxu0
    %869 = vmatprep.mubr.f32.mxu0 0.0
    %870 = vmatmul.mubr.f32.gmra.mrb[0].mxu0 %v176
    %v871 = vpop.f32.mrb[0].mxu0
    %v872 = vadd.f32 0.0, %v871
    %v873 = vpop.f32.mrb[0].mxu0
    %874 = vmatprep.mubr.f32.mxu0 0.0
    %875 = vmatmul.mubr.f32.gmra.mrb[0].mxu0 %v177
    %v876 = vpop.f32.mrb[0].mxu0
    %v877 = vadd.f32 0.0, %v876
    %v878 = vpop.f32.mrb[0].mxu0
    %879 = vmatprep.mubr.f32.mxu0 0.0
    %880 = vmatmul.mubr.f32.gmra.mrb[0].mxu0 %v178
    %v881 = vpop.f32.mrb[0].mxu0
    %v882 = vadd.f32 0.0, %v881
    %v883 = vpop.f32.mrb[0].mxu0
    %884 = vdwg.mxu0
    %v885 = vld [vmem:[#allocation5] sm:$0xff]
    %v886 = vld [vmem:[#allocation5 + $0x8] sm:$0xff]
    %v887 = vld [vmem:[#allocation5 + $0x10] sm:$0xff]
    %v888 = vld [vmem:[#allocation5 + $0x18] sm:$0xff]
    %v889 = vld [vmem:[#allocation5 + $0x20] sm:$0xff]
    %v890 = vld [vmem:[#allocation5 + $0x28] sm:$0xff]
    %v891 = vld [vmem:[#allocation5 + $0x30] sm:$0xff]
    %v892 = vld [vmem:[#allocation5 + $0x38] sm:$0xff]
    %v893 = vmul.f32 %v485, 0.17677669
    %v894 = vmul.f32 %v490, 0.17677669
    %v895 = vmul.f32 %v495, 0.17677669
    %v896 = vmul.f32 %v500, 0.17677669
    %v897 = vmul.f32 %v505, 0.17677669
    %v898 = vmul.f32 %v510, 0.17677669
    %v899 = vmul.f32 %v515, 0.17677669
    %v900 = vmul.f32 %v520, 0.17677669
    %vm901 = vcmask 261120
    %v903 = vsel %vm901, %v893, 0
    %v906 = vsel %vm901, %v894, 0
    %v909 = vsel %vm901, %v895, 0
    %v912 = vsel %vm901, %v896, 0
    %v915 = vsel %vm901, %v897, 0
    %v918 = vsel %vm901, %v898, 0
    %v921 = vsel %vm901, %v899, 0
    %v924 = vsel %vm901, %v900, 0
    %v927 = vsel %vm901, %v646, 0
    %v930 = vsel %vm901, %v651, 0
    %v933 = vsel %vm901, %v656, 0
    %v936 = vsel %vm901, %v661, 0
    %v939 = vsel %vm901, %v666, 0
    %v942 = vsel %vm901, %v671, 0
    %v945 = vsel %vm901, %v676, 0
    %v948 = vsel %vm901, %v681, 0
    %950 = vmatprep.subr.mxu0 0.0
    %951 = vmatpush1.xpose.msra.mxu0 %v927
    %952 = vmatprep.subr.mxu0 0.0
    %953 = vmatpush1.xpose.msra.mxu0 %v930
    %954 = vmatprep.subr.mxu0 0.0
    %955 = vmatpush1.xpose.msra.mxu0 %v933
    %956 = vmatprep.subr.mxu0 0.0
    %957 = vmatpush1.xpose.msra.mxu0 %v936
    %958 = vmatprep.subr.mxu0 0.0
    %959 = vmatpush1.xpose.msra.mxu0 %v939
    %960 = vmatprep.subr.mxu0 0.0
    %961 = vmatpush1.xpose.msra.mxu0 %v942
    %962 = vmatprep.subr.mxu0 0.0
    %963 = vmatpush1.xpose.msra.mxu0 %v945
    %964 = vmatprep.subr.mxu0 0.0
    %965 = vmatpush1.xpose.msra.mxu0 %v948
    %966 = vmatprep.subr.mxu0 0.0
    %967 = vmatpush1.xpose.msra.mxu0 0.0
    %968 = vmatprep.subr.mxu0 0.0
    %969 = vmatpush1.xpose.msra.mxu0 0.0
    %970 = vmatprep.subr.mxu0 0.0
    %971 = vmatpush1.xpose.msra.mxu0 0.0
    %972 = vmatprep.subr.mxu0 0.0
    %973 = vmatpush1.xpose.msra.mxu0 0.0
    %974 = vmatprep.subr.mxu0 0.0
    %975 = vmatpush1.xpose.msra.mxu0 0.0
    %976 = vmatprep.subr.mxu0 0.0
    %977 = vmatpush1.xpose.msra.mxu0 0.0
    %978 = vmatprep.subr.mxu0 0.0
    %979 = vmatpush1.xpose.msra.mxu0 0.0
    %980 = vmatprep.subr.mxu0 0.0
    %981 = vmatpush1.xpose.msra.mxu0 0.0
    %982 = vmatprep.subr.mxu0 0.0
    %983 = vmatpush1.xpose.msra.mxu0 0.0
    %984 = vmatprep.subr.mxu0 0.0
    %985 = vmatpush1.xpose.msra.mxu0 0.0
    %986 = vmatprep.subr.mxu0 0.0
    %987 = vmatpush1.xpose.msra.mxu0 0.0
    %988 = vmatprep.subr.mxu0 0.0
    %989 = vmatpush1.xpose.msra.mxu0 0.0
    %990 = vmatprep.subr.mxu0 0.0
    %991 = vmatpush1.xpose.msra.mxu0 0.0
    %992 = vmatprep.subr.mxu0 0.0
    %993 = vmatpush1.xpose.msra.mxu0 0.0
    %994 = vmatprep.subr.mxu0 0.0
    %995 = vmatpush1.xpose.msra.mxu0 0.0
    %996 = vmatprep.subr.mxu0 0.0
    %997 = vmatpush1.xpose.msra.mxu0 0.0
    %998 = vmatprep.subr.mxu0 0.0
    %999 = vmatpush1.xpose.msra.mxu0 0.0
    %1000 = vmatprep.subr.mxu0 0.0
    %1001 = vmatpush1.xpose.msra.mxu0 0.0
    %1002 = vmatprep.subr.mxu0 0.0
    %1003 = vmatpush1.xpose.msra.mxu0 0.0
    %1004 = vmatprep.subr.mxu0 0.0
    %1005 = vmatpush1.xpose.msra.mxu0 0.0
    %1006 = vmatprep.subr.mxu0 0.0
    %1007 = vmatpush1.xpose.msra.mxu0 0.0
    %1008 = vmatprep.subr.mxu0 0.0
    %1009 = vmatpush1.xpose.msra.mxu0 0.0
    %1010 = vmatprep.subr.mxu0 0.0
    %1011 = vmatpush1.xpose.msra.mxu0 0.0
    %1012 = vmatprep.subr.mxu0 0.0
    %1013 = vmatpush1.xpose.msra.mxu0 0.0
    %1014 = vmatprep.mubr.f32.mxu0 0.0
    %1015 = vmatmul.mubr.f32.gmra.mrb[0].mxu0 %v903
    %v1016 = vpop.f32.mrb[0].mxu0
    %v1017 = vadd.f32 %v885, %v1016
    %v1018 = vpop.f32.mrb[0].mxu0
    %1019 = vmatprep.mubr.f32.mxu0 0.0
    %1020 = vmatmul.mubr.f32.gmra.mrb[0].mxu0 %v906
    %v1021 = vpop.f32.mrb[0].mxu0
    %v1022 = vadd.f32 %v886, %v1021
    %v1023 = vpop.f32.mrb[0].mxu0
    %1024 = vmatprep.mubr.f32.mxu0 0.0
    %1025 = vmatmul.mubr.f32.gmra.mrb[0].mxu0 %v909
    %v1026 = vpop.f32.mrb[0].mxu0
    %v1027 = vadd.f32 %v887, %v1026
    %v1028 = vpop.f32.mrb[0].mxu0
    %1029 = vmatprep.mubr.f32.mxu0 0.0
    %1030 = vmatmul.mubr.f32.gmra.mrb[0].mxu0 %v912
    %v1031 = vpop.f32.mrb[0].mxu0
    %v1032 = vadd.f32 %v888, %v1031
    %v1033 = vpop.f32.mrb[0].mxu0
    %1034 = vmatprep.mubr.f32.mxu0 0.0
    %1035 = vmatmul.mubr.f32.gmra.mrb[0].mxu0 %v915
    %v1036 = vpop.f32.mrb[0].mxu0
    %v1037 = vadd.f32 %v889, %v1036
    %v1038 = vpop.f32.mrb[0].mxu0
    %1039 = vmatprep.mubr.f32.mxu0 0.0
    %1040 = vmatmul.mubr.f32.gmra.mrb[0].mxu0 %v918
    %v1041 = vpop.f32.mrb[0].mxu0
    %v1042 = vadd.f32 %v890, %v1041
    %v1043 = vpop.f32.mrb[0].mxu0
    %1044 = vmatprep.mubr.f32.mxu0 0.0
    %1045 = vmatmul.mubr.f32.gmra.mrb[0].mxu0 %v921
    %v1046 = vpop.f32.mrb[0].mxu0
    %v1047 = vadd.f32 %v891, %v1046
    %v1048 = vpop.f32.mrb[0].mxu0
    %1049 = vmatprep.mubr.f32.mxu0 0.0
    %1050 = vmatmul.mubr.f32.gmra.mrb[0].mxu0 %v924
    %v1051 = vpop.f32.mrb[0].mxu0
    %v1052 = vadd.f32 %v892, %v1051
    %v1053 = vpop.f32.mrb[0].mxu0
    %1054 = vdwg.mxu0
    %vm1055 = vcmask 523264
    %v1056 = vsel %vm1055, %v1017, -inf
    %1057 = vmax.xlane.f32.xlu0 %v1056
    %v1058 = vpop.xlane.xlu0 %1057
    %v1059 = vsel %vm1055, %v1022, -inf
    %1060 = vmax.xlane.f32.xlu0 %v1059
    %v1061 = vpop.xlane.xlu0 %1060
    %v1062 = vsel %vm1055, %v1027, -inf
    %1063 = vmax.xlane.f32.xlu0 %v1062
    %v1064 = vpop.xlane.xlu0 %1063
    %v1065 = vsel %vm1055, %v1032, -inf
    %1066 = vmax.xlane.f32.xlu0 %v1065
    %v1067 = vpop.xlane.xlu0 %1066
    %v1068 = vsel %vm1055, %v1037, -inf
    %1069 = vmax.xlane.f32.xlu0 %v1068
    %v1070 = vpop.xlane.xlu0 %1069
    %v1071 = vsel %vm1055, %v1042, -inf
    %1072 = vmax.xlane.f32.xlu0 %v1071
    %v1073 = vpop.xlane.xlu0 %1072
    %v1074 = vsel %vm1055, %v1047, -inf
    %1075 = vmax.xlane.f32.xlu0 %v1074
    %v1076 = vpop.xlane.xlu0 %1075
    %v1077 = vsel %vm1055, %v1052, -inf
    %1078 = vmax.xlane.f32.xlu0 %v1077
    %v1079 = vpop.xlane.xlu0 %1078
    %v1080 = vsub.f32 %v1017, %v1058
    %v1081 = vsub.f32 %v1022, %v1061
    %v1082 = vsub.f32 %v1027, %v1064
    %v1083 = vsub.f32 %v1032, %v1067
    %v1084 = vsub.f32 %v1037, %v1070
    %v1085 = vsub.f32 %v1042, %v1073
    %v1086 = vsub.f32 %v1047, %v1076
    %v1087 = vsub.f32 %v1052, %v1079
    %v1088 = vmul.f32 %v1080, 1.442695
    %v1089 = vpow.pop %v1088
    %v1090 = vmul.f32 %v1081, 1.442695
    %v1091 = vpow.pop %v1090
    %v1092 = vmul.f32 %v1082, 1.442695
    %v1093 = vpow.pop %v1092
    %v1094 = vmul.f32 %v1083, 1.442695
    %v1095 = vpow.pop %v1094
    %v1096 = vmul.f32 %v1084, 1.442695
    %v1097 = vpow.pop %v1096
    %v1098 = vmul.f32 %v1085, 1.442695
    %v1099 = vpow.pop %v1098
    %v1100 = vmul.f32 %v1086, 1.442695
    %v1101 = vpow.pop %v1100
    %v1102 = vmul.f32 %v1087, 1.442695
    %v1103 = vpow.pop %v1102
    %v1104 = vsel %vm1055, %v1089, 0.0
    %1105 = vadd.xlane.f32.xlu0 %v1104
    %v1106 = vpop.xlane.xlu0 %1105
    %v1107 = vsel %vm1055, %v1091, 0.0
    %1108 = vadd.xlane.f32.xlu0 %v1107
    %v1109 = vpop.xlane.xlu0 %1108
    %v1110 = vsel %vm1055, %v1093, 0.0
    %1111 = vadd.xlane.f32.xlu0 %v1110
    %v1112 = vpop.xlane.xlu0 %1111
    %v1113 = vsel %vm1055, %v1095, 0.0
    %1114 = vadd.xlane.f32.xlu0 %v1113
    %v1115 = vpop.xlane.xlu0 %1114
    %v1116 = vsel %vm1055, %v1097, 0.0
    %1117 = vadd.xlane.f32.xlu0 %v1116
    %v1118 = vpop.xlane.xlu0 %1117
    %v1119 = vsel %vm1055, %v1099, 0.0
    %1120 = vadd.xlane.f32.xlu0 %v1119
    %v1121 = vpop.xlane.xlu0 %1120
    %v1122 = vsel %vm1055, %v1101, 0.0
    %1123 = vadd.xlane.f32.xlu0 %v1122
    %v1124 = vpop.xlane.xlu0 %1123
    %v1125 = vsel %vm1055, %v1103, 0.0
    %1126 = vadd.xlane.f32.xlu0 %v1125
    %v1127 = vpop.xlane.xlu0 %1126
    %v1128 = vrcp.pop %v1106
    %v1129 = vmul.f32 %v1089, %v1128
    %v1130 = vrcp.pop %v1109
    %v1131 = vmul.f32 %v1091, %v1130
    %v1132 = vrcp.pop %v1112
    %v1133 = vmul.f32 %v1093, %v1132
    %v1134 = vrcp.pop %v1115
    %v1135 = vmul.f32 %v1095, %v1134
    %v1136 = vrcp.pop %v1118
    %v1137 = vmul.f32 %v1097, %v1136
    %v1138 = vrcp.pop %v1121
    %v1139 = vmul.f32 %v1099, %v1138
    %v1140 = vrcp.pop %v1124
    %v1141 = vmul.f32 %v1101, %v1140
    %v1142 = vrcp.pop %v1127
    %v1143 = vmul.f32 %v1103, %v1142
    %1144 = vst.msk [vmem:[#allocation17] sm:$0xff] %vm1055, %v1129
    %1145 = vst.msk [vmem:[#allocation17 + $0x8] sm:$0xff] %vm1055, %v1131
    %1146 = vst.msk [vmem:[#allocation17 + $0x10] sm:$0xff] %vm1055, %v1133
    %1147 = vst.msk [vmem:[#allocation17 + $0x18] sm:$0xff] %vm1055, %v1135
    %1148 = vst.msk [vmem:[#allocation17 + $0x20] sm:$0xff] %vm1055, %v1137
    %1149 = vst.msk [vmem:[#allocation17 + $0x28] sm:$0xff] %vm1055, %v1139
    %1150 = vst.msk [vmem:[#allocation17 + $0x30] sm:$0xff] %vm1055, %v1141
    %1151 = vst.msk [vmem:[#allocation17 + $0x38] sm:$0xff] %vm1055, %v1143
    %v1153 = vsel %vm1055, %v1129, 0
    %v1156 = vsel %vm1055, %v1131, 0
    %v1159 = vsel %vm1055, %v1133, 0
    %v1162 = vsel %vm1055, %v1135, 0
    %v1165 = vsel %vm1055, %v1137, 0
    %v1168 = vsel %vm1055, %v1139, 0
    %v1171 = vsel %vm1055, %v1141, 0
    %v1174 = vsel %vm1055, %v1143, 0
    %1176 = vmatprep.subr.mxu0 0.0
    %1177 = vmatpush1.msra.mxu0 %v807
    %1178 = vmatprep.subr.mxu0 0.0
    %1179 = vmatpush1.msra.mxu0 %v812
    %1180 = vmatprep.subr.mxu0 0.0
    %1181 = vmatpush1.msra.mxu0 %v817
    %1182 = vmatprep.subr.mxu0 0.0
    %1183 = vmatpush1.msra.mxu0 %v822
    %1184 = vmatprep.subr.mxu0 0.0
    %1185 = vmatpush1.msra.mxu0 %v827
    %1186 = vmatprep.subr.mxu0 0.0
    %1187 = vmatpush1.msra.mxu0 %v832
    %1188 = vmatprep.subr.mxu0 0.0
    %1189 = vmatpush1.msra.mxu0 %v837
    %1190 = vmatprep.subr.mxu0 0.0
    %1191 = vmatpush1.msra.mxu0 %v842
    %1192 = vmatprep.subr.mxu0 0.0
    %1193 = vmatpush1.msra.mxu0 0.0
    %1194 = vmatprep.subr.mxu0 0.0
    %1195 = vmatpush1.msra.mxu0 0.0
    %1196 = vmatprep.subr.mxu0 0.0
    %1197 = vmatpush1.msra.mxu0 0.0
    %1198 = vmatprep.subr.mxu0 0.0
    %1199 = vmatpush1.msra.mxu0 0.0
    %1200 = vmatprep.subr.mxu0 0.0
    %1201 = vmatpush1.msra.mxu0 0.0
    %1202 = vmatprep.subr.mxu0 0.0
    %1203 = vmatpush1.msra.mxu0 0.0
    %1204 = vmatprep.subr.mxu0 0.0
    %1205 = vmatpush1.msra.mxu0 0.0
    %1206 = vmatprep.subr.mxu0 0.0
    %1207 = vmatpush1.msra.mxu0 0.0
    %1208 = vmatprep.subr.mxu0 0.0
    %1209 = vmatpush1.msra.mxu0 0.0
    %1210 = vmatprep.subr.mxu0 0.0
    %1211 = vmatpush1.msra.mxu0 0.0
    %1212 = vmatprep.subr.mxu0 0.0
    %1213 = vmatpush1.msra.mxu0 0.0
    %1214 = vmatprep.subr.mxu0 0.0
    %1215 = vmatpush1.msra.mxu0 0.0
    %1216 = vmatprep.subr.mxu0 0.0
    %1217 = vmatpush1.msra.mxu0 0.0
    %1218 = vmatprep.subr.mxu0 0.0
    %1219 = vmatpush1.msra.mxu0 0.0
    %1220 = vmatprep.subr.mxu0 0.0
    %1221 = vmatpush1.msra.mxu0 0.0
    %1222 = vmatprep.subr.mxu0 0.0
    %1223 = vmatpush1.msra.mxu0 0.0
    %1224 = vmatprep.subr.mxu0 0.0
    %1225 = vmatpush1.msra.mxu0 0.0
    %1226 = vmatprep.subr.mxu0 0.0
    %1227 = vmatpush1.msra.mxu0 0.0
    %1228 = vmatprep.subr.mxu0 0.0
    %1229 = vmatpush1.msra.mxu0 0.0
    %1230 = vmatprep.subr.mxu0 0.0
    %1231 = vmatpush1.msra.mxu0 0.0
    %1232 = vmatprep.subr.mxu0 0.0
    %1233 = vmatpush1.msra.mxu0 0.0
    %1234 = vmatprep.subr.mxu0 0.0
    %1235 = vmatpush1.msra.mxu0 0.0
    %1236 = vmatprep.subr.mxu0 0.0
    %1237 = vmatpush1.msra.mxu0 0.0
    %1238 = vmatprep.subr.mxu0 0.0
    %1239 = vmatpush1.msra.mxu0 0.0
    %1240 = vmatprep.mubr.f32.mxu0 0.0
    %1241 = vmatmul.mubr.f32.gmra.mrb[0].mxu0 %v1153
    %v1242 = vpop.f32.mrb[0].mxu0
    %v1243 = vadd.f32 0.0, %v1242
    %v1244 = vpop.f32.mrb[0].mxu0
    %1245 = vmatprep.mubr.f32.mxu0 0.0
    %1246 = vmatmul.mubr.f32.gmra.mrb[0].mxu0 %v1156
    %v1247 = vpop.f32.mrb[0].mxu0
    %v1248 = vadd.f32 0.0, %v1247
    %v1249 = vpop.f32.mrb[0].mxu0
    %1250 = vmatprep.mubr.f32.mxu0 0.0
    %1251 = vmatmul.mubr.f32.gmra.mrb[0].mxu0 %v1159
    %v1252 = vpop.f32.mrb[0].mxu0
    %v1253 = vadd.f32 0.0, %v1252
    %v1254 = vpop.f32.mrb[0].mxu0
    %1255 = vmatprep.mubr.f32.mxu0 0.0
    %1256 = vmatmul.mubr.f32.gmra.mrb[0].mxu0 %v1162
    %v1257 = vpop.f32.mrb[0].mxu0
    %v1258 = vadd.f32 0.0, %v1257
    %v1259 = vpop.f32.mrb[0].mxu0
    %1260 = vmatprep.mubr.f32.mxu0 0.0
    %1261 = vmatmul.mubr.f32.gmra.mrb[0].mxu0 %v1165
    %v1262 = vpop.f32.mrb[0].mxu0
    %v1263 = vadd.f32 0.0, %v1262
    %v1264 = vpop.f32.mrb[0].mxu0
    %1265 = vmatprep.mubr.f32.mxu0 0.0
    %1266 = vmatmul.mubr.f32.gmra.mrb[0].mxu0 %v1168
    %v1267 = vpop.f32.mrb[0].mxu0
    %v1268 = vadd.f32 0.0, %v1267
    %v1269 = vpop.f32.mrb[0].mxu0
    %1270 = vmatprep.mubr.f32.mxu0 0.0
    %1271 = vmatmul.mubr.f32.gmra.mrb[0].mxu0 %v1171
    %v1272 = vpop.f32.mrb[0].mxu0
    %v1273 = vadd.f32 0.0, %v1272
    %v1274 = vpop.f32.mrb[0].mxu0
    %1275 = vmatprep.mubr.f32.mxu0 0.0
    %1276 = vmatmul.mubr.f32.gmra.mrb[0].mxu0 %v1174
    %v1277 = vpop.f32.mrb[0].mxu0
    %v1278 = vadd.f32 0.0, %v1277
    %v1279 = vpop.f32.mrb[0].mxu0
    %1280 = vdwg.mxu0
    %1281 = vrot.lane.b32.xlu0 %v893, 96
    %v1282 = vpop.permute.xlu0 %1281
    %1283 = vrot.lane.b32.xlu0 %v894, 96
    %v1284 = vpop.permute.xlu0 %1283
    %1285 = vrot.lane.b32.xlu0 %v895, 96
    %v1286 = vpop.permute.xlu0 %1285
    %1287 = vrot.lane.b32.xlu0 %v896, 96
    %v1288 = vpop.permute.xlu0 %1287
    %1289 = vrot.lane.b32.xlu0 %v897, 96
    %v1290 = vpop.permute.xlu0 %1289
    %1291 = vrot.lane.b32.xlu0 %v898, 96
    %v1292 = vpop.permute.xlu0 %1291
    %1293 = vrot.lane.b32.xlu0 %v899, 96
    %v1294 = vpop.permute.xlu0 %1293
    %1295 = vrot.lane.b32.xlu0 %v900, 96
    %v1296 = vpop.permute.xlu0 %1295
    %1297 = vrot.lane.b32.xlu0 %v646, 96
    %v1298 = vpop.permute.xlu0 %1297
    %1299 = vrot.lane.b32.xlu0 %v651, 96
    %v1300 = vpop.permute.xlu0 %1299
    %1301 = vrot.lane.b32.xlu0 %v656, 96
    %v1302 = vpop.permute.xlu0 %1301
    %1303 = vrot.lane.b32.xlu0 %v661, 96
    %v1304 = vpop.permute.xlu0 %1303
    %1305 = vrot.lane.b32.xlu0 %v666, 96
    %v1306 = vpop.permute.xlu0 %1305
    %1307 = vrot.lane.b32.xlu0 %v671, 96
    %v1308 = vpop.permute.xlu0 %1307
    %1309 = vrot.lane.b32.xlu0 %v676, 96
    %v1310 = vpop.permute.xlu0 %1309
    %1311 = vrot.lane.b32.xlu0 %v681, 96
    %v1312 = vpop.permute.xlu0 %1311
    %v1313 = vsel %vm901, %v1282, 0
    %v1315 = vsel %vm901, %v1284, 0
    %v1317 = vsel %vm901, %v1286, 0
    %v1319 = vsel %vm901, %v1288, 0
    %v1321 = vsel %vm901, %v1290, 0
    %v1323 = vsel %vm901, %v1292, 0
    %v1325 = vsel %vm901, %v1294, 0
    %v1327 = vsel %vm901, %v1296, 0
    %v1329 = vsel %vm901, %v1298, 0
    %v1331 = vsel %vm901, %v1300, 0
    %v1333 = vsel %vm901, %v1302, 0
    %v1335 = vsel %vm901, %v1304, 0
    %v1337 = vsel %vm901, %v1306, 0
    %v1339 = vsel %vm901, %v1308, 0
    %v1341 = vsel %vm901, %v1310, 0
    %v1343 = vsel %vm901, %v1312, 0
    %1345 = vmatprep.subr.mxu0 0.0
    %1346 = vmatpush1.xpose.msra.mxu0 %v1329
    %1347 = vmatprep.subr.mxu0 0.0
    %1348 = vmatpush1.xpose.msra.mxu0 %v1331
    %1349 = vmatprep.subr.mxu0 0.0
    %1350 = vmatpush1.xpose.msra.mxu0 %v1333
    %1351 = vmatprep.subr.mxu0 0.0
    %1352 = vmatpush1.xpose.msra.mxu0 %v1335
    %1353 = vmatprep.subr.mxu0 0.0
    %1354 = vmatpush1.xpose.msra.mxu0 %v1337
    %1355 = vmatprep.subr.mxu0 0.0
    %1356 = vmatpush1.xpose.msra.mxu0 %v1339
    %1357 = vmatprep.subr.mxu0 0.0
    %1358 = vmatpush1.xpose.msra.mxu0 %v1341
    %1359 = vmatprep.subr.mxu0 0.0
    %1360 = vmatpush1.xpose.msra.mxu0 %v1343
    %1361 = vmatprep.subr.mxu0 0.0
    %1362 = vmatpush1.xpose.msra.mxu0 0.0
    %1363 = vmatprep.subr.mxu0 0.0
    %1364 = vmatpush1.xpose.msra.mxu0 0.0
    %1365 = vmatprep.subr.mxu0 0.0
    %1366 = vmatpush1.xpose.msra.mxu0 0.0
    %1367 = vmatprep.subr.mxu0 0.0
    %1368 = vmatpush1.xpose.msra.mxu0 0.0
    %1369 = vmatprep.subr.mxu0 0.0
    %1370 = vmatpush1.xpose.msra.mxu0 0.0
    %1371 = vmatprep.subr.mxu0 0.0
    %1372 = vmatpush1.xpose.msra.mxu0 0.0
    %1373 = vmatprep.subr.mxu0 0.0
    %1374 = vmatpush1.xpose.msra.mxu0 0.0
    %1375 = vmatprep.subr.mxu0 0.0
    %1376 = vmatpush1.xpose.msra.mxu0 0.0
    %1377 = vmatprep.subr.mxu0 0.0
    %1378 = vmatpush1.xpose.msra.mxu0 0.0
    %1379 = vmatprep.subr.mxu0 0.0
    %1380 = vmatpush1.xpose.msra.mxu0 0.0
    %1381 = vmatprep.subr.mxu0 0.0
    %1382 = vmatpush1.xpose.msra.mxu0 0.0
    %1383 = vmatprep.subr.mxu0 0.0
    %1384 = vmatpush1.xpose.msra.mxu0 0.0
    %1385 = vmatprep.subr.mxu0 0.0
    %1386 = vmatpush1.xpose.msra.mxu0 0.0
    %1387 = vmatprep.subr.mxu0 0.0
    %1388 = vmatpush1.xpose.msra.mxu0 0.0
    %1389 = vmatprep.subr.mxu0 0.0
    %1390 = vmatpush1.xpose.msra.mxu0 0.0
    %1391 = vmatprep.subr.mxu0 0.0
    %1392 = vmatpush1.xpose.msra.mxu0 0.0
    %1393 = vmatprep.subr.mxu0 0.0
    %1394 = vmatpush1.xpose.msra.mxu0 0.0
    %1395 = vmatprep.subr.mxu0 0.0
    %1396 = vmatpush1.xpose.msra.mxu0 0.0
    %1397 = vmatprep.subr.mxu0 0.0
    %1398 = vmatpush1.xpose.msra.mxu0 0.0
    %1399 = vmatprep.subr.mxu0 0.0
    %1400 = vmatpush1.xpose.msra.mxu0 0.0
    %1401 = vmatprep.subr.mxu0 0.0
    %1402 = vmatpush1.xpose.msra.mxu0 0.0
    %1403 = vmatprep.subr.mxu0 0.0
    %1404 = vmatpush1.xpose.msra.mxu0 0.0
    %1405 = vmatprep.subr.mxu0 0.0
    %1406 = vmatpush1.xpose.msra.mxu0 0.0
    %1407 = vmatprep.subr.mxu0 0.0
    %1408 = vmatpush1.xpose.msra.mxu0 0.0
    %1409 = vmatprep.mubr.f32.mxu0 0.0
    %1410 = vmatmul.mubr.f32.gmra.mrb[0].mxu0 %v1313
    %v1411 = vpop.f32.mrb[0].mxu0
    %v1412 = vadd.f32 %v885, %v1411
    %v1413 = vpop.f32.mrb[0].mxu0
    %1414 = vmatprep.mubr.f32.mxu0 0.0
    %1415 = vmatmul.mubr.f32.gmra.mrb[0].mxu0 %v1315
    %v1416 = vpop.f32.mrb[0].mxu0
    %v1417 = vadd.f32 %v886, %v1416
    %v1418 = vpop.f32.mrb[0].mxu0
    %1419 = vmatprep.mubr.f32.mxu0 0.0
    %1420 = vmatmul.mubr.f32.gmra.mrb[0].mxu0 %v1317
    %v1421 = vpop.f32.mrb[0].mxu0
    %v1422 = vadd.f32 %v887, %v1421
    %v1423 = vpop.f32.mrb[0].mxu0
    %1424 = vmatprep.mubr.f32.mxu0 0.0
    %1425 = vmatmul.mubr.f32.gmra.mrb[0].mxu0 %v1319
    %v1426 = vpop.f32.mrb[0].mxu0
    %v1427 = vadd.f32 %v888, %v1426
    %v1428 = vpop.f32.mrb[0].mxu0
    %1429 = vmatprep.mubr.f32.mxu0 0.0
    %1430 = vmatmul.mubr.f32.gmra.mrb[0].mxu0 %v1321
    %v1431 = vpop.f32.mrb[0].mxu0
    %v1432 = vadd.f32 %v889, %v1431
    %v1433 = vpop.f32.mrb[0].mxu0
    %1434 = vmatprep.mubr.f32.mxu0 0.0
    %1435 = vmatmul.mubr.f32.gmra.mrb[0].mxu0 %v1323
    %v1436 = vpop.f32.mrb[0].mxu0
    %v1437 = vadd.f32 %v890, %v1436
    %v1438 = vpop.f32.mrb[0].mxu0
    %1439 = vmatprep.mubr.f32.mxu0 0.0
    %1440 = vmatmul.mubr.f32.gmra.mrb[0].mxu0 %v1325
    %v1441 = vpop.f32.mrb[0].mxu0
    %v1442 = vadd.f32 %v891, %v1441
    %v1443 = vpop.f32.mrb[0].mxu0
    %1444 = vmatprep.mubr.f32.mxu0 0.0
    %1445 = vmatmul.mubr.f32.gmra.mrb[0].mxu0 %v1327
    %v1446 = vpop.f32.mrb[0].mxu0
    %v1447 = vadd.f32 %v892, %v1446
    %v1448 = vpop.f32.mrb[0].mxu0
    %1449 = vdwg.mxu0
    %v1450 = vsel %vm1055, %v1412, -inf
    %1451 = vmax.xlane.f32.xlu0 %v1450
    %v1452 = vpop.xlane.xlu0 %1451
    %v1453 = vsel %vm1055, %v1417, -inf
    %1454 = vmax.xlane.f32.xlu0 %v1453
    %v1455 = vpop.xlane.xlu0 %1454
    %v1456 = vsel %vm1055, %v1422, -inf
    %1457 = vmax.xlane.f32.xlu0 %v1456
    %v1458 = vpop.xlane.xlu0 %1457
    %v1459 = vsel %vm1055, %v1427, -inf
    %1460 = vmax.xlane.f32.xlu0 %v1459
    %v1461 = vpop.xlane.xlu0 %1460
    %v1462 = vsel %vm1055, %v1432, -inf
    %1463 = vmax.xlane.f32.xlu0 %v1462
    %v1464 = vpop.xlane.xlu0 %1463
    %v1465 = vsel %vm1055, %v1437, -inf
    %1466 = vmax.xlane.f32.xlu0 %v1465
    %v1467 = vpop.xlane.xlu0 %1466
    %v1468 = vsel %vm1055, %v1442, -inf
    %1469 = vmax.xlane.f32.xlu0 %v1468
    %v1470 = vpop.xlane.xlu0 %1469
    %v1471 = vsel %vm1055, %v1447, -inf
    %1472 = vmax.xlane.f32.xlu0 %v1471
    %v1473 = vpop.xlane.xlu0 %1472
    %v1474 = vsub.f32 %v1412, %v1452
    %v1475 = vsub.f32 %v1417, %v1455
    %v1476 = vsub.f32 %v1422, %v1458
    %v1477 = vsub.f32 %v1427, %v1461
    %v1478 = vsub.f32 %v1432, %v1464
    %v1479 = vsub.f32 %v1437, %v1467
    %v1480 = vsub.f32 %v1442, %v1470
    %v1481 = vsub.f32 %v1447, %v1473
    %v1482 = vmul.f32 %v1474, 1.442695
    %v1483 = vpow.pop %v1482
    %v1484 = vmul.f32 %v1475, 1.442695
    %v1485 = vpow.pop %v1484
    %v1486 = vmul.f32 %v1476, 1.442695
    %v1487 = vpow.pop %v1486
    %v1488 = vmul.f32 %v1477, 1.442695
    %v1489 = vpow.pop %v1488
    %v1490 = vmul.f32 %v1478, 1.442695
    %v1491 = vpow.pop %v1490
    %v1492 = vmul.f32 %v1479, 1.442695
    %v1493 = vpow.pop %v1492
    %v1494 = vmul.f32 %v1480, 1.442695
    %v1495 = vpow.pop %v1494
    %v1496 = vmul.f32 %v1481, 1.442695
    %v1497 = vpow.pop %v1496
    %v1498 = vsel %vm1055, %v1483, 0.0
    %1499 = vadd.xlane.f32.xlu0 %v1498
    %v1500 = vpop.xlane.xlu0 %1499
    %v1501 = vsel %vm1055, %v1485, 0.0
    %1502 = vadd.xlane.f32.xlu0 %v1501
    %v1503 = vpop.xlane.xlu0 %1502
    %v1504 = vsel %vm1055, %v1487, 0.0
    %1505 = vadd.xlane.f32.xlu0 %v1504
    %v1506 = vpop.xlane.xlu0 %1505
    %v1507 = vsel %vm1055, %v1489, 0.0
    %1508 = vadd.xlane.f32.xlu0 %v1507
    %v1509 = vpop.xlane.xlu0 %1508
    %v1510 = vsel %vm1055, %v1491, 0.0
    %1511 = vadd.xlane.f32.xlu0 %v1510
    %v1512 = vpop.xlane.xlu0 %1511
    %v1513 = vsel %vm1055, %v1493, 0.0
    %1514 = vadd.xlane.f32.xlu0 %v1513
    %v1515 = vpop.xlane.xlu0 %1514
    %v1516 = vsel %vm1055, %v1495, 0.0
    %1517 = vadd.xlane.f32.xlu0 %v1516
    %v1518 = vpop.xlane.xlu0 %1517
    %v1519 = vsel %vm1055, %v1497, 0.0
    %1520 = vadd.xlane.f32.xlu0 %v1519
    %v1521 = vpop.xlane.xlu0 %1520
    %v1522 = vrcp.pop %v1500
    %v1523 = vmul.f32 %v1483, %v1522
    %v1524 = vrcp.pop %v1503
    %v1525 = vmul.f32 %v1485, %v1524
    %v1526 = vrcp.pop %v1506
    %v1527 = vmul.f32 %v1487, %v1526
    %v1528 = vrcp.pop %v1509
    %v1529 = vmul.f32 %v1489, %v1528
    %v1530 = vrcp.pop %v1512
    %v1531 = vmul.f32 %v1491, %v1530
    %v1532 = vrcp.pop %v1515
    %v1533 = vmul.f32 %v1493, %v1532
    %v1534 = vrcp.pop %v1518
    %v1535 = vmul.f32 %v1495, %v1534
    %v1536 = vrcp.pop %v1521
    %v1537 = vmul.f32 %v1497, %v1536
    %s1538 = scalar_lea.vmem [#allocation17], 64
    %1539 = vst.msk [vmem:[%s1538] sm:$0xff] %vm1055, %v1523
    %1540 = vst.msk [vmem:[%s1538 + $0x8] sm:$0xff] %vm1055, %v1525
    %1541 = vst.msk [vmem:[%s1538 + $0x10] sm:$0xff] %vm1055, %v1527
    %1542 = vst.msk [vmem:[%s1538 + $0x18] sm:$0xff] %vm1055, %v1529
    %1543 = vst.msk [vmem:[%s1538 + $0x20] sm:$0xff] %vm1055, %v1531
    %1544 = vst.msk [vmem:[%s1538 + $0x28] sm:$0xff] %vm1055, %v1533
    %1545 = vst.msk [vmem:[%s1538 + $0x30] sm:$0xff] %vm1055, %v1535
    %1546 = vst.msk [vmem:[%s1538 + $0x38] sm:$0xff] %vm1055, %v1537
    %1555 = vrot.lane.b32.xlu0 %v807, 96
    %v1556 = vpop.permute.xlu0 %1555
    %1557 = vrot.lane.b32.xlu0 %v812, 96
    %v1558 = vpop.permute.xlu0 %1557
    %1559 = vrot.lane.b32.xlu0 %v817, 96
    %v1560 = vpop.permute.xlu0 %1559
    %1561 = vrot.lane.b32.xlu0 %v822, 96
    %v1562 = vpop.permute.xlu0 %1561
    %1563 = vrot.lane.b32.xlu0 %v827, 96
    %v1564 = vpop.permute.xlu0 %1563
    %1565 = vrot.lane.b32.xlu0 %v832, 96
    %v1566 = vpop.permute.xlu0 %1565
    %1567 = vrot.lane.b32.xlu0 %v837, 96
    %v1568 = vpop.permute.xlu0 %1567
    %1569 = vrot.lane.b32.xlu0 %v842, 96
    %v1570 = vpop.permute.xlu0 %1569
    %v1580 = vsel %vm1055, %v1523, 0
    %v1583 = vsel %vm1055, %v1525, 0
    %v1586 = vsel %vm1055, %v1527, 0
    %v1589 = vsel %vm1055, %v1529, 0
    %v1592 = vsel %vm1055, %v1531, 0
    %v1595 = vsel %vm1055, %v1533, 0
    %v1598 = vsel %vm1055, %v1535, 0
    %v1601 = vsel %vm1055, %v1537, 0
    %1603 = vmatprep.subr.mxu0 0.0
    %1604 = vmatpush1.msra.mxu0 %v1556
    %1605 = vmatprep.subr.mxu0 0.0
    %1606 = vmatpush1.msra.mxu0 %v1558
    %1607 = vmatprep.subr.mxu0 0.0
    %1608 = vmatpush1.msra.mxu0 %v1560
    %1609 = vmatprep.subr.mxu0 0.0
    %1610 = vmatpush1.msra.mxu0 %v1562
    %1611 = vmatprep.subr.mxu0 0.0
    %1612 = vmatpush1.msra.mxu0 %v1564
    %1613 = vmatprep.subr.mxu0 0.0
    %1614 = vmatpush1.msra.mxu0 %v1566
    %1615 = vmatprep.subr.mxu0 0.0
    %1616 = vmatpush1.msra.mxu0 %v1568
    %1617 = vmatprep.subr.mxu0 0.0
    %1618 = vmatpush1.msra.mxu0 %v1570
    %1619 = vmatprep.subr.mxu0 0.0
    %1620 = vmatpush1.msra.mxu0 0.0
    %1621 = vmatprep.subr.mxu0 0.0
    %1622 = vmatpush1.msra.mxu0 0.0
    %1623 = vmatprep.subr.mxu0 0.0
    %1624 = vmatpush1.msra.mxu0 0.0
    %1625 = vmatprep.subr.mxu0 0.0
    %1626 = vmatpush1.msra.mxu0 0.0
    %1627 = vmatprep.subr.mxu0 0.0
    %1628 = vmatpush1.msra.mxu0 0.0
    %1629 = vmatprep.subr.mxu0 0.0
    %1630 = vmatpush1.msra.mxu0 0.0
    %1631 = vmatprep.subr.mxu0 0.0
    %1632 = vmatpush1.msra.mxu0 0.0
    %1633 = vmatprep.subr.mxu0 0.0
    %1634 = vmatpush1.msra.mxu0 0.0
    %1635 = vmatprep.subr.mxu0 0.0
    %1636 = vmatpush1.msra.mxu0 0.0
    %1637 = vmatprep.subr.mxu0 0.0
    %1638 = vmatpush1.msra.mxu0 0.0
    %1639 = vmatprep.subr.mxu0 0.0
    %1640 = vmatpush1.msra.mxu0 0.0
    %1641 = vmatprep.subr.mxu0 0.0
    %1642 = vmatpush1.msra.mxu0 0.0
    %1643 = vmatprep.subr.mxu0 0.0
    %1644 = vmatpush1.msra.mxu0 0.0
    %1645 = vmatprep.subr.mxu0 0.0
    %1646 = vmatpush1.msra.mxu0 0.0
    %1647 = vmatprep.subr.mxu0 0.0
    %1648 = vmatpush1.msra.mxu0 0.0
    %1649 = vmatprep.subr.mxu0 0.0
    %1650 = vmatpush1.msra.mxu0 0.0
    %1651 = vmatprep.subr.mxu0 0.0
    %1652 = vmatpush1.msra.mxu0 0.0
    %1653 = vmatprep.subr.mxu0 0.0
    %1654 = vmatpush1.msra.mxu0 0.0
    %1655 = vmatprep.subr.mxu0 0.0
    %1656 = vmatpush1.msra.mxu0 0.0
    %1657 = vmatprep.subr.mxu0 0.0
    %1658 = vmatpush1.msra.mxu0 0.0
    %1659 = vmatprep.subr.mxu0 0.0
    %1660 = vmatpush1.msra.mxu0 0.0
    %1661 = vmatprep.subr.mxu0 0.0
    %1662 = vmatpush1.msra.mxu0 0.0
    %1663 = vmatprep.subr.mxu0 0.0
    %1664 = vmatpush1.msra.mxu0 0.0
    %1665 = vmatprep.subr.mxu0 0.0
    %1666 = vmatpush1.msra.mxu0 0.0
    %1667 = vmatprep.mubr.f32.mxu0 0.0
    %1668 = vmatmul.mubr.f32.gmra.mrb[0].mxu0 %v1580
    %v1669 = vpop.f32.mrb[0].mxu0
    %v1670 = vadd.f32 0.0, %v1669
    %v1671 = vpop.f32.mrb[0].mxu0
    %1672 = vmatprep.mubr.f32.mxu0 0.0
    %1673 = vmatmul.mubr.f32.gmra.mrb[0].mxu0 %v1583
    %v1674 = vpop.f32.mrb[0].mxu0
    %v1675 = vadd.f32 0.0, %v1674
    %v1676 = vpop.f32.mrb[0].mxu0
    %1677 = vmatprep.mubr.f32.mxu0 0.0
    %1678 = vmatmul.mubr.f32.gmra.mrb[0].mxu0 %v1586
    %v1679 = vpop.f32.mrb[0].mxu0
    %v1680 = vadd.f32 0.0, %v1679
    %v1681 = vpop.f32.mrb[0].mxu0
    %1682 = vmatprep.mubr.f32.mxu0 0.0
    %1683 = vmatmul.mubr.f32.gmra.mrb[0].mxu0 %v1589
    %v1684 = vpop.f32.mrb[0].mxu0
    %v1685 = vadd.f32 0.0, %v1684
    %v1686 = vpop.f32.mrb[0].mxu0
    %1687 = vmatprep.mubr.f32.mxu0 0.0
    %1688 = vmatmul.mubr.f32.gmra.mrb[0].mxu0 %v1592
    %v1689 = vpop.f32.mrb[0].mxu0
    %v1690 = vadd.f32 0.0, %v1689
    %v1691 = vpop.f32.mrb[0].mxu0
    %1692 = vmatprep.mubr.f32.mxu0 0.0
    %1693 = vmatmul.mubr.f32.gmra.mrb[0].mxu0 %v1595
    %v1694 = vpop.f32.mrb[0].mxu0
    %v1695 = vadd.f32 0.0, %v1694
    %v1696 = vpop.f32.mrb[0].mxu0
    %1697 = vmatprep.mubr.f32.mxu0 0.0
    %1698 = vmatmul.mubr.f32.gmra.mrb[0].mxu0 %v1598
    %v1699 = vpop.f32.mrb[0].mxu0
    %v1700 = vadd.f32 0.0, %v1699
    %v1701 = vpop.f32.mrb[0].mxu0
    %1702 = vmatprep.mubr.f32.mxu0 0.0
    %1703 = vmatmul.mubr.f32.gmra.mrb[0].mxu0 %v1601
    %v1704 = vpop.f32.mrb[0].mxu0
    %v1705 = vadd.f32 0.0, %v1704
    %v1706 = vpop.f32.mrb[0].mxu0
    %1707 = vdwg.mxu0
    %1708 = vrot.lane.b32.xlu0 %v893, 64
    %v1709 = vpop.permute.xlu0 %1708
    %1710 = vrot.lane.b32.xlu0 %v894, 64
    %v1711 = vpop.permute.xlu0 %1710
    %1712 = vrot.lane.b32.xlu0 %v895, 64
    %v1713 = vpop.permute.xlu0 %1712
    %1714 = vrot.lane.b32.xlu0 %v896, 64
    %v1715 = vpop.permute.xlu0 %1714
    %1716 = vrot.lane.b32.xlu0 %v897, 64
    %v1717 = vpop.permute.xlu0 %1716
    %1718 = vrot.lane.b32.xlu0 %v898, 64
    %v1719 = vpop.permute.xlu0 %1718
    %1720 = vrot.lane.b32.xlu0 %v899, 64
    %v1721 = vpop.permute.xlu0 %1720
    %1722 = vrot.lane.b32.xlu0 %v900, 64
    %v1723 = vpop.permute.xlu0 %1722
    %1724 = vrot.lane.b32.xlu0 %v646, 64
    %v1725 = vpop.permute.xlu0 %1724
    %1726 = vrot.lane.b32.xlu0 %v651, 64
    %v1727 = vpop.permute.xlu0 %1726
    %1728 = vrot.lane.b32.xlu0 %v656, 64
    %v1729 = vpop.permute.xlu0 %1728
    %1730 = vrot.lane.b32.xlu0 %v661, 64
    %v1731 = vpop.permute.xlu0 %1730
    %1732 = vrot.lane.b32.xlu0 %v666, 64
    %v1733 = vpop.permute.xlu0 %1732
    %1734 = vrot.lane.b32.xlu0 %v671, 64
    %v1735 = vpop.permute.xlu0 %1734
    %1736 = vrot.lane.b32.xlu0 %v676, 64
    %v1737 = vpop.permute.xlu0 %1736
    %1738 = vrot.lane.b32.xlu0 %v681, 64
    %v1739 = vpop.permute.xlu0 %1738
    %v1740 = vsel %vm901, %v1709, 0
    %v1742 = vsel %vm901, %v1711, 0
    %v1744 = vsel %vm901, %v1713, 0
    %v1746 = vsel %vm901, %v1715, 0
    %v1748 = vsel %vm901, %v1717, 0
    %v1750 = vsel %vm901, %v1719, 0
    %v1752 = vsel %vm901, %v1721, 0
    %v1754 = vsel %vm901, %v1723, 0
    %v1756 = vsel %vm901, %v1725, 0
    %v1758 = vsel %vm901, %v1727, 0
    %v1760 = vsel %vm901, %v1729, 0
    %v1762 = vsel %vm901, %v1731, 0
    %v1764 = vsel %vm901, %v1733, 0
    %v1766 = vsel %vm901, %v1735, 0
    %v1768 = vsel %vm901, %v1737, 0
    %v1770 = vsel %vm901, %v1739, 0
    %1772 = vmatprep.subr.mxu0 0.0
    %1773 = vmatpush1.xpose.msra.mxu0 %v1756
    %1774 = vmatprep.subr.mxu0 0.0
    %1775 = vmatpush1.xpose.msra.mxu0 %v1758
    %1776 = vmatprep.subr.mxu0 0.0
    %1777 = vmatpush1.xpose.msra.mxu0 %v1760
    %1778 = vmatprep.subr.mxu0 0.0
    %1779 = vmatpush1.xpose.msra.mxu0 %v1762
    %1780 = vmatprep.subr.mxu0 0.0
    %1781 = vmatpush1.xpose.msra.mxu0 %v1764
    %1782 = vmatprep.subr.mxu0 0.0
    %1783 = vmatpush1.xpose.msra.mxu0 %v1766
    %1784 = vmatprep.subr.mxu0 0.0
    %1785 = vmatpush1.xpose.msra.mxu0 %v1768
    %1786 = vmatprep.subr.mxu0 0.0
    %1787 = vmatpush1.xpose.msra.mxu0 %v1770
    %1788 = vmatprep.subr.mxu0 0.0
    %1789 = vmatpush1.xpose.msra.mxu0 0.0
    %1790 = vmatprep.subr.mxu0 0.0
    %1791 = vmatpush1.xpose.msra.mxu0 0.0
    %1792 = vmatprep.subr.mxu0 0.0
    %1793 = vmatpush1.xpose.msra.mxu0 0.0
    %1794 = vmatprep.subr.mxu0 0.0
    %1795 = vmatpush1.xpose.msra.mxu0 0.0
    %1796 = vmatprep.subr.mxu0 0.0
    %1797 = vmatpush1.xpose.msra.mxu0 0.0
    %1798 = vmatprep.subr.mxu0 0.0
    %1799 = vmatpush1.xpose.msra.mxu0 0.0
    %1800 = vmatprep.subr.mxu0 0.0
    %1801 = vmatpush1.xpose.msra.mxu0 0.0
    %1802 = vmatprep.subr.mxu0 0.0
    %1803 = vmatpush1.xpose.msra.mxu0 0.0
    %1804 = vmatprep.subr.mxu0 0.0
    %1805 = vmatpush1.xpose.msra.mxu0 0.0
    %1806 = vmatprep.subr.mxu0 0.0
    %1807 = vmatpush1.xpose.msra.mxu0 0.0
    %1808 = vmatprep.subr.mxu0 0.0
    %1809 = vmatpush1.xpose.msra.mxu0 0.0
    %1810 = vmatprep.subr.mxu0 0.0
    %1811 = vmatpush1.xpose.msra.mxu0 0.0
    %1812 = vmatprep.subr.mxu0 0.0
    %1813 = vmatpush1.xpose.msra.mxu0 0.0
    %1814 = vmatprep.subr.mxu0 0.0
    %1815 = vmatpush1.xpose.msra.mxu0 0.0
    %1816 = vmatprep.subr.mxu0 0.0
    %1817 = vmatpush1.xpose.msra.mxu0 0.0
    %1818 = vmatprep.subr.mxu0 0.0
    %1819 = vmatpush1.xpose.msra.mxu0 0.0
    %1820 = vmatprep.subr.mxu0 0.0
    %1821 = vmatpush1.xpose.msra.mxu0 0.0
    %1822 = vmatprep.subr.mxu0 0.0
    %1823 = vmatpush1.xpose.msra.mxu0 0.0
    %1824 = vmatprep.subr.mxu0 0.0
    %1825 = vmatpush1.xpose.msra.mxu0 0.0
    %1826 = vmatprep.subr.mxu0 0.0
    %1827 = vmatpush1.xpose.msra.mxu0 0.0
    %1828 = vmatprep.subr.mxu0 0.0
    %1829 = vmatpush1.xpose.msra.mxu0 0.0
    %1830 = vmatprep.subr.mxu0 0.0
    %1831 = vmatpush1.xpose.msra.mxu0 0.0
    %1832 = vmatprep.subr.mxu0 0.0
    %1833 = vmatpush1.xpose.msra.mxu0 0.0
    %1834 = vmatprep.subr.mxu0 0.0
    %1835 = vmatpush1.xpose.msra.mxu0 0.0
    %1836 = vmatprep.mubr.f32.mxu0 0.0
    %1837 = vmatmul.mubr.f32.gmra.mrb[0].mxu0 %v1740
    %v1838 = vpop.f32.mrb[0].mxu0
    %v1839 = vadd.f32 %v885, %v1838
    %v1840 = vpop.f32.mrb[0].mxu0
    %1841 = vmatprep.mubr.f32.mxu0 0.0
    %1842 = vmatmul.mubr.f32.gmra.mrb[0].mxu0 %v1742
    %v1843 = vpop.f32.mrb[0].mxu0
    %v1844 = vadd.f32 %v886, %v1843
    %v1845 = vpop.f32.mrb[0].mxu0
    %1846 = vmatprep.mubr.f32.mxu0 0.0
    %1847 = vmatmul.mubr.f32.gmra.mrb[0].mxu0 %v1744
    %v1848 = vpop.f32.mrb[0].mxu0
    %v1849 = vadd.f32 %v887, %v1848
    %v1850 = vpop.f32.mrb[0].mxu0
    %1851 = vmatprep.mubr.f32.mxu0 0.0
    %1852 = vmatmul.mubr.f32.gmra.mrb[0].mxu0 %v1746
    %v1853 = vpop.f32.mrb[0].mxu0
    %v1854 = vadd.f32 %v888, %v1853
    %v1855 = vpop.f32.mrb[0].mxu0
    %1856 = vmatprep.mubr.f32.mxu0 0.0
    %1857 = vmatmul.mubr.f32.gmra.mrb[0].mxu0 %v1748
    %v1858 = vpop.f32.mrb[0].mxu0
    %v1859 = vadd.f32 %v889, %v1858
    %v1860 = vpop.f32.mrb[0].mxu0
    %1861 = vmatprep.mubr.f32.mxu0 0.0
    %1862 = vmatmul.mubr.f32.gmra.mrb[0].mxu0 %v1750
    %v1863 = vpop.f32.mrb[0].mxu0
    %v1864 = vadd.f32 %v890, %v1863
    %v1865 = vpop.f32.mrb[0].mxu0
    %1866 = vmatprep.mubr.f32.mxu0 0.0
    %1867 = vmatmul.mubr.f32.gmra.mrb[0].mxu0 %v1752
    %v1868 = vpop.f32.mrb[0].mxu0
    %v1869 = vadd.f32 %v891, %v1868
    %v1870 = vpop.f32.mrb[0].mxu0
    %1871 = vmatprep.mubr.f32.mxu0 0.0
    %1872 = vmatmul.mubr.f32.gmra.mrb[0].mxu0 %v1754
    %v1873 = vpop.f32.mrb[0].mxu0
    %v1874 = vadd.f32 %v892, %v1873
    %v1875 = vpop.f32.mrb[0].mxu0
    %1876 = vdwg.mxu0
    %v1877 = vsel %vm1055, %v1839, -inf
    %1878 = vmax.xlane.f32.xlu0 %v1877
    %v1879 = vpop.xlane.xlu0 %1878
    %v1880 = vsel %vm1055, %v1844, -inf
    %1881 = vmax.xlane.f32.xlu0 %v1880
    %v1882 = vpop.xlane.xlu0 %1881
    %v1883 = vsel %vm1055, %v1849, -inf
    %1884 = vmax.xlane.f32.xlu0 %v1883
    %v1885 = vpop.xlane.xlu0 %1884
    %v1886 = vsel %vm1055, %v1854, -inf
    %1887 = vmax.xlane.f32.xlu0 %v1886
    %v1888 = vpop.xlane.xlu0 %1887
    %v1889 = vsel %vm1055, %v1859, -inf
    %1890 = vmax.xlane.f32.xlu0 %v1889
    %v1891 = vpop.xlane.xlu0 %1890
    %v1892 = vsel %vm1055, %v1864, -inf
    %1893 = vmax.xlane.f32.xlu0 %v1892
    %v1894 = vpop.xlane.xlu0 %1893
    %v1895 = vsel %vm1055, %v1869, -inf
    %1896 = vmax.xlane.f32.xlu0 %v1895
    %v1897 = vpop.xlane.xlu0 %1896
    %v1898 = vsel %vm1055, %v1874, -inf
    %1899 = vmax.xlane.f32.xlu0 %v1898
    %v1900 = vpop.xlane.xlu0 %1899
    %v1901 = vsub.f32 %v1839, %v1879
    %v1902 = vsub.f32 %v1844, %v1882
    %v1903 = vsub.f32 %v1849, %v1885
    %v1904 = vsub.f32 %v1854, %v1888
    %v1905 = vsub.f32 %v1859, %v1891
    %v1906 = vsub.f32 %v1864, %v1894
    %v1907 = vsub.f32 %v1869, %v1897
    %v1908 = vsub.f32 %v1874, %v1900
    %v1909 = vmul.f32 %v1901, 1.442695
    %v1910 = vpow.pop %v1909
    %v1911 = vmul.f32 %v1902, 1.442695
    %v1912 = vpow.pop %v1911
    %v1913 = vmul.f32 %v1903, 1.442695
    %v1914 = vpow.pop %v1913
    %v1915 = vmul.f32 %v1904, 1.442695
    %v1916 = vpow.pop %v1915
    %v1917 = vmul.f32 %v1905, 1.442695
    %v1918 = vpow.pop %v1917
    %v1919 = vmul.f32 %v1906, 1.442695
    %v1920 = vpow.pop %v1919
    %v1921 = vmul.f32 %v1907, 1.442695
    %v1922 = vpow.pop %v1921
    %v1923 = vmul.f32 %v1908, 1.442695
    %v1924 = vpow.pop %v1923
    %v1925 = vsel %vm1055, %v1910, 0.0
    %1926 = vadd.xlane.f32.xlu0 %v1925
    %v1927 = vpop.xlane.xlu0 %1926
    %v1928 = vsel %vm1055, %v1912, 0.0
    %1929 = vadd.xlane.f32.xlu0 %v1928
    %v1930 = vpop.xlane.xlu0 %1929
    %v1931 = vsel %vm1055, %v1914, 0.0
    %1932 = vadd.xlane.f32.xlu0 %v1931
    %v1933 = vpop.xlane.xlu0 %1932
    %v1934 = vsel %vm1055, %v1916, 0.0
    %1935 = vadd.xlane.f32.xlu0 %v1934
    %v1936 = vpop.xlane.xlu0 %1935
    %v1937 = vsel %vm1055, %v1918, 0.0
    %1938 = vadd.xlane.f32.xlu0 %v1937
    %v1939 = vpop.xlane.xlu0 %1938
    %v1940 = vsel %vm1055, %v1920, 0.0
    %1941 = vadd.xlane.f32.xlu0 %v1940
    %v1942 = vpop.xlane.xlu0 %1941
    %v1943 = vsel %vm1055, %v1922, 0.0
    %1944 = vadd.xlane.f32.xlu0 %v1943
    %v1945 = vpop.xlane.xlu0 %1944
    %v1946 = vsel %vm1055, %v1924, 0.0
    %1947 = vadd.xlane.f32.xlu0 %v1946
    %v1948 = vpop.xlane.xlu0 %1947
    %v1949 = vrcp.pop %v1927
    %v1950 = vmul.f32 %v1910, %v1949
    %v1951 = vrcp.pop %v1930
    %v1952 = vmul.f32 %v1912, %v1951
    %v1953 = vrcp.pop %v1933
    %v1954 = vmul.f32 %v1914, %v1953
    %v1955 = vrcp.pop %v1936
    %v1956 = vmul.f32 %v1916, %v1955
    %v1957 = vrcp.pop %v1939
    %v1958 = vmul.f32 %v1918, %v1957
    %v1959 = vrcp.pop %v1942
    %v1960 = vmul.f32 %v1920, %v1959
    %v1961 = vrcp.pop %v1945
    %v1962 = vmul.f32 %v1922, %v1961
    %v1963 = vrcp.pop %v1948
    %v1964 = vmul.f32 %v1924, %v1963
    %s1965 = scalar_lea.vmem [#allocation17], 128
    %1966 = vst.msk [vmem:[%s1965] sm:$0xff] %vm1055, %v1950
    %1967 = vst.msk [vmem:[%s1965 + $0x8] sm:$0xff] %vm1055, %v1952
    %1968 = vst.msk [vmem:[%s1965 + $0x10] sm:$0xff] %vm1055, %v1954
    %1969 = vst.msk [vmem:[%s1965 + $0x18] sm:$0xff] %vm1055, %v1956
    %1970 = vst.msk [vmem:[%s1965 + $0x20] sm:$0xff] %vm1055, %v1958
    %1971 = vst.msk [vmem:[%s1965 + $0x28] sm:$0xff] %vm1055, %v1960
    %1972 = vst.msk [vmem:[%s1965 + $0x30] sm:$0xff] %vm1055, %v1962
    %1973 = vst.msk [vmem:[%s1965 + $0x38] sm:$0xff] %vm1055, %v1964
    %1974 = vrot.lane.b32.xlu0 %v807, 64
    %v1975 = vpop.permute.xlu0 %1974
    %1976 = vrot.lane.b32.xlu0 %v812, 64
    %v1977 = vpop.permute.xlu0 %1976
    %1978 = vrot.lane.b32.xlu0 %v817, 64
    %v1979 = vpop.permute.xlu0 %1978
    %1980 = vrot.lane.b32.xlu0 %v822, 64
    %v1981 = vpop.permute.xlu0 %1980
    %1982 = vrot.lane.b32.xlu0 %v827, 64
    %v1983 = vpop.permute.xlu0 %1982
    %1984 = vrot.lane.b32.xlu0 %v832, 64
    %v1985 = vpop.permute.xlu0 %1984
    %1986 = vrot.lane.b32.xlu0 %v837, 64
    %v1987 = vpop.permute.xlu0 %1986
    %1988 = vrot.lane.b32.xlu0 %v842, 64
    %v1989 = vpop.permute.xlu0 %1988
    %v1999 = vsel %vm1055, %v1950, 0
    %v2002 = vsel %vm1055, %v1952, 0
    %v2005 = vsel %vm1055, %v1954, 0
    %v2008 = vsel %vm1055, %v1956, 0
    %v2011 = vsel %vm1055, %v1958, 0
    %v2014 = vsel %vm1055, %v1960, 0
    %v2017 = vsel %vm1055, %v1962, 0
    %v2020 = vsel %vm1055, %v1964, 0
    %2022 = vmatprep.subr.mxu0 0.0
    %2023 = vmatpush1.msra.mxu0 %v1975
    %2024 = vmatprep.subr.mxu0 0.0
    %2025 = vmatpush1.msra.mxu0 %v1977
    %2026 = vmatprep.subr.mxu0 0.0
    %2027 = vmatpush1.msra.mxu0 %v1979
    %2028 = vmatprep.subr.mxu0 0.0
    %2029 = vmatpush1.msra.mxu0 %v1981
    %2030 = vmatprep.subr.mxu0 0.0
    %2031 = vmatpush1.msra.mxu0 %v1983
    %2032 = vmatprep.subr.mxu0 0.0
    %2033 = vmatpush1.msra.mxu0 %v1985
    %2034 = vmatprep.subr.mxu0 0.0
    %2035 = vmatpush1.msra.mxu0 %v1987
    %2036 = vmatprep.subr.mxu0 0.0
    %2037 = vmatpush1.msra.mxu0 %v1989
    %2038 = vmatprep.subr.mxu0 0.0
    %2039 = vmatpush1.msra.mxu0 0.0
    %2040 = vmatprep.subr.mxu0 0.0
    %2041 = vmatpush1.msra.mxu0 0.0
    %2042 = vmatprep.subr.mxu0 0.0
    %2043 = vmatpush1.msra.mxu0 0.0
    %2044 = vmatprep.subr.mxu0 0.0
    %2045 = vmatpush1.msra.mxu0 0.0
    %2046 = vmatprep.subr.mxu0 0.0
    %2047 = vmatpush1.msra.mxu0 0.0
    %2048 = vmatprep.subr.mxu0 0.0
    %2049 = vmatpush1.msra.mxu0 0.0
    %2050 = vmatprep.subr.mxu0 0.0
    %2051 = vmatpush1.msra.mxu0 0.0
    %2052 = vmatprep.subr.mxu0 0.0
    %2053 = vmatpush1.msra.mxu0 0.0
    %2054 = vmatprep.subr.mxu0 0.0
    %2055 = vmatpush1.msra.mxu0 0.0
    %2056 = vmatprep.subr.mxu0 0.0
    %2057 = vmatpush1.msra.mxu0 0.0
    %2058 = vmatprep.subr.mxu0 0.0
    %2059 = vmatpush1.msra.mxu0 0.0
    %2060 = vmatprep.subr.mxu0 0.0
    %2061 = vmatpush1.msra.mxu0 0.0
    %2062 = vmatprep.subr.mxu0 0.0
    %2063 = vmatpush1.msra.mxu0 0.0
    %2064 = vmatprep.subr.mxu0 0.0
    %2065 = vmatpush1.msra.mxu0 0.0
    %2066 = vmatprep.subr.mxu0 0.0
    %2067 = vmatpush1.msra.mxu0 0.0
    %2068 = vmatprep.subr.mxu0 0.0
    %2069 = vmatpush1.msra.mxu0 0.0
    %2070 = vmatprep.subr.mxu0 0.0
    %2071 = vmatpush1.msra.mxu0 0.0
    %2072 = vmatprep.subr.mxu0 0.0
    %2073 = vmatpush1.msra.mxu0 0.0
    %2074 = vmatprep.subr.mxu0 0.0
    %2075 = vmatpush1.msra.mxu0 0.0
    %2076 = vmatprep.subr.mxu0 0.0
    %2077 = vmatpush1.msra.mxu0 0.0
    %2078 = vmatprep.subr.mxu0 0.0
    %2079 = vmatpush1.msra.mxu0 0.0
    %2080 = vmatprep.subr.mxu0 0.0
    %2081 = vmatpush1.msra.mxu0 0.0
    %2082 = vmatprep.subr.mxu0 0.0
    %2083 = vmatpush1.msra.mxu0 0.0
    %2084 = vmatprep.subr.mxu0 0.0
    %2085 = vmatpush1.msra.mxu0 0.0
    %2086 = vmatprep.mubr.f32.mxu0 0.0
    %2087 = vmatmul.mubr.f32.gmra.mrb[0].mxu0 %v1999
    %v2088 = vpop.f32.mrb[0].mxu0
    %v2089 = vadd.f32 0.0, %v2088
    %v2090 = vpop.f32.mrb[0].mxu0
    %2091 = vmatprep.mubr.f32.mxu0 0.0
    %2092 = vmatmul.mubr.f32.gmra.mrb[0].mxu0 %v2002
    %v2093 = vpop.f32.mrb[0].mxu0
    %v2094 = vadd.f32 0.0, %v2093
    %v2095 = vpop.f32.mrb[0].mxu0
    %2096 = vmatprep.mubr.f32.mxu0 0.0
    %2097 = vmatmul.mubr.f32.gmra.mrb[0].mxu0 %v2005
    %v2098 = vpop.f32.mrb[0].mxu0
    %v2099 = vadd.f32 0.0, %v2098
    %v2100 = vpop.f32.mrb[0].mxu0
    %2101 = vmatprep.mubr.f32.mxu0 0.0
    %2102 = vmatmul.mubr.f32.gmra.mrb[0].mxu0 %v2008
    %v2103 = vpop.f32.mrb[0].mxu0
    %v2104 = vadd.f32 0.0, %v2103
    %v2105 = vpop.f32.mrb[0].mxu0
    %2106 = vmatprep.mubr.f32.mxu0 0.0
    %2107 = vmatmul.mubr.f32.gmra.mrb[0].mxu0 %v2011
    %v2108 = vpop.f32.mrb[0].mxu0
    %v2109 = vadd.f32 0.0, %v2108
    %v2110 = vpop.f32.mrb[0].mxu0
    %2111 = vmatprep.mubr.f32.mxu0 0.0
    %2112 = vmatmul.mubr.f32.gmra.mrb[0].mxu0 %v2014
    %v2113 = vpop.f32.mrb[0].mxu0
    %v2114 = vadd.f32 0.0, %v2113
    %v2115 = vpop.f32.mrb[0].mxu0
    %2116 = vmatprep.mubr.f32.mxu0 0.0
    %2117 = vmatmul.mubr.f32.gmra.mrb[0].mxu0 %v2017
    %v2118 = vpop.f32.mrb[0].mxu0
    %v2119 = vadd.f32 0.0, %v2118
    %v2120 = vpop.f32.mrb[0].mxu0
    %2121 = vmatprep.mubr.f32.mxu0 0.0
    %2122 = vmatmul.mubr.f32.gmra.mrb[0].mxu0 %v2020
    %v2123 = vpop.f32.mrb[0].mxu0
    %v2124 = vadd.f32 0.0, %v2123
    %v2125 = vpop.f32.mrb[0].mxu0
    %2126 = vdwg.mxu0
    %2127 = vrot.lane.b32.xlu0 %v893, 32
    %v2128 = vpop.permute.xlu0 %2127
    %2129 = vrot.lane.b32.xlu0 %v894, 32
    %v2130 = vpop.permute.xlu0 %2129
    %2131 = vrot.lane.b32.xlu0 %v895, 32
    %v2132 = vpop.permute.xlu0 %2131
    %2133 = vrot.lane.b32.xlu0 %v896, 32
    %v2134 = vpop.permute.xlu0 %2133
    %2135 = vrot.lane.b32.xlu0 %v897, 32
    %v2136 = vpop.permute.xlu0 %2135
    %2137 = vrot.lane.b32.xlu0 %v898, 32
    %v2138 = vpop.permute.xlu0 %2137
    %2139 = vrot.lane.b32.xlu0 %v899, 32
    %v2140 = vpop.permute.xlu0 %2139
    %2141 = vrot.lane.b32.xlu0 %v900, 32
    %v2142 = vpop.permute.xlu0 %2141
    %2143 = vrot.lane.b32.xlu0 %v646, 32
    %v2144 = vpop.permute.xlu0 %2143
    %2145 = vrot.lane.b32.xlu0 %v651, 32
    %v2146 = vpop.permute.xlu0 %2145
    %2147 = vrot.lane.b32.xlu0 %v656, 32
    %v2148 = vpop.permute.xlu0 %2147
    %2149 = vrot.lane.b32.xlu0 %v661, 32
    %v2150 = vpop.permute.xlu0 %2149
    %2151 = vrot.lane.b32.xlu0 %v666, 32
    %v2152 = vpop.permute.xlu0 %2151
    %2153 = vrot.lane.b32.xlu0 %v671, 32
    %v2154 = vpop.permute.xlu0 %2153
    %2155 = vrot.lane.b32.xlu0 %v676, 32
    %v2156 = vpop.permute.xlu0 %2155
    %2157 = vrot.lane.b32.xlu0 %v681, 32
    %v2158 = vpop.permute.xlu0 %2157
    %v2159 = vsel %vm901, %v2128, 0
    %v2161 = vsel %vm901, %v2130, 0
    %v2163 = vsel %vm901, %v2132, 0
    %v2165 = vsel %vm901, %v2134, 0
    %v2167 = vsel %vm901, %v2136, 0
    %v2169 = vsel %vm901, %v2138, 0
    %v2171 = vsel %vm901, %v2140, 0
    %v2173 = vsel %vm901, %v2142, 0
    %v2175 = vsel %vm901, %v2144, 0
    %v2177 = vsel %vm901, %v2146, 0
    %v2179 = vsel %vm901, %v2148, 0
    %v2181 = vsel %vm901, %v2150, 0
    %v2183 = vsel %vm901, %v2152, 0
    %v2185 = vsel %vm901, %v2154, 0
    %v2187 = vsel %vm901, %v2156, 0
    %v2189 = vsel %vm901, %v2158, 0
    %2191 = vmatprep.subr.mxu0 0.0
    %2192 = vmatpush1.xpose.msra.mxu0 %v2175
    %2193 = vmatprep.subr.mxu0 0.0
    %2194 = vmatpush1.xpose.msra.mxu0 %v2177
    %2195 = vmatprep.subr.mxu0 0.0
    %2196 = vmatpush1.xpose.msra.mxu0 %v2179
    %2197 = vmatprep.subr.mxu0 0.0
    %2198 = vmatpush1.xpose.msra.mxu0 %v2181
    %2199 = vmatprep.subr.mxu0 0.0
    %2200 = vmatpush1.xpose.msra.mxu0 %v2183
    %2201 = vmatprep.subr.mxu0 0.0
    %2202 = vmatpush1.xpose.msra.mxu0 %v2185
    %2203 = vmatprep.subr.mxu0 0.0
    %2204 = vmatpush1.xpose.msra.mxu0 %v2187
    %2205 = vmatprep.subr.mxu0 0.0
    %2206 = vmatpush1.xpose.msra.mxu0 %v2189
    %2207 = vmatprep.subr.mxu0 0.0
    %2208 = vmatpush1.xpose.msra.mxu0 0.0
    %2209 = vmatprep.subr.mxu0 0.0
    %2210 = vmatpush1.xpose.msra.mxu0 0.0
    %2211 = vmatprep.subr.mxu0 0.0
    %2212 = vmatpush1.xpose.msra.mxu0 0.0
    %2213 = vmatprep.subr.mxu0 0.0
    %2214 = vmatpush1.xpose.msra.mxu0 0.0
    %2215 = vmatprep.subr.mxu0 0.0
    %2216 = vmatpush1.xpose.msra.mxu0 0.0
    %2217 = vmatprep.subr.mxu0 0.0
    %2218 = vmatpush1.xpose.msra.mxu0 0.0
    %2219 = vmatprep.subr.mxu0 0.0
    %2220 = vmatpush1.xpose.msra.mxu0 0.0
    %2221 = vmatprep.subr.mxu0 0.0
    %2222 = vmatpush1.xpose.msra.mxu0 0.0
    %2223 = vmatprep.subr.mxu0 0.0
    %2224 = vmatpush1.xpose.msra.mxu0 0.0
    %2225 = vmatprep.subr.mxu0 0.0
    %2226 = vmatpush1.xpose.msra.mxu0 0.0
    %2227 = vmatprep.subr.mxu0 0.0
    %2228 = vmatpush1.xpose.msra.mxu0 0.0
    %2229 = vmatprep.subr.mxu0 0.0
    %2230 = vmatpush1.xpose.msra.mxu0 0.0
    %2231 = vmatprep.subr.mxu0 0.0
    %2232 = vmatpush1.xpose.msra.mxu0 0.0
    %2233 = vmatprep.subr.mxu0 0.0
    %2234 = vmatpush1.xpose.msra.mxu0 0.0
    %2235 = vmatprep.subr.mxu0 0.0
    %2236 = vmatpush1.xpose.msra.mxu0 0.0
    %2237 = vmatprep.subr.mxu0 0.0
    %2238 = vmatpush1.xpose.msra.mxu0 0.0
    %2239 = vmatprep.subr.mxu0 0.0
    %2240 = vmatpush1.xpose.msra.mxu0 0.0
    %2241 = vmatprep.subr.mxu0 0.0
    %2242 = vmatpush1.xpose.msra.mxu0 0.0
    %2243 = vmatprep.subr.mxu0 0.0
    %2244 = vmatpush1.xpose.msra.mxu0 0.0
    %2245 = vmatprep.subr.mxu0 0.0
    %2246 = vmatpush1.xpose.msra.mxu0 0.0
    %2247 = vmatprep.subr.mxu0 0.0
    %2248 = vmatpush1.xpose.msra.mxu0 0.0
    %2249 = vmatprep.subr.mxu0 0.0
    %2250 = vmatpush1.xpose.msra.mxu0 0.0
    %2251 = vmatprep.subr.mxu0 0.0
    %2252 = vmatpush1.xpose.msra.mxu0 0.0
    %2253 = vmatprep.subr.mxu0 0.0
    %2254 = vmatpush1.xpose.msra.mxu0 0.0
    %2255 = vmatprep.mubr.f32.mxu0 0.0
    %2256 = vmatmul.mubr.f32.gmra.mrb[0].mxu0 %v2159
    %v2257 = vpop.f32.mrb[0].mxu0
    %v2258 = vadd.f32 %v885, %v2257
    %v2259 = vpop.f32.mrb[0].mxu0
    %2260 = vmatprep.mubr.f32.mxu0 0.0
    %2261 = vmatmul.mubr.f32.gmra.mrb[0].mxu0 %v2161
    %v2262 = vpop.f32.mrb[0].mxu0
    %v2263 = vadd.f32 %v886, %v2262
    %v2264 = vpop.f32.mrb[0].mxu0
    %2265 = vmatprep.mubr.f32.mxu0 0.0
    %2266 = vmatmul.mubr.f32.gmra.mrb[0].mxu0 %v2163
    %v2267 = vpop.f32.mrb[0].mxu0
    %v2268 = vadd.f32 %v887, %v2267
    %v2269 = vpop.f32.mrb[0].mxu0
    %2270 = vmatprep.mubr.f32.mxu0 0.0
    %2271 = vmatmul.mubr.f32.gmra.mrb[0].mxu0 %v2165
    %v2272 = vpop.f32.mrb[0].mxu0
    %v2273 = vadd.f32 %v888, %v2272
    %v2274 = vpop.f32.mrb[0].mxu0
    %2275 = vmatprep.mubr.f32.mxu0 0.0
    %2276 = vmatmul.mubr.f32.gmra.mrb[0].mxu0 %v2167
    %v2277 = vpop.f32.mrb[0].mxu0
    %v2278 = vadd.f32 %v889, %v2277
    %v2279 = vpop.f32.mrb[0].mxu0
    %2280 = vmatprep.mubr.f32.mxu0 0.0
    %2281 = vmatmul.mubr.f32.gmra.mrb[0].mxu0 %v2169
    %v2282 = vpop.f32.mrb[0].mxu0
    %v2283 = vadd.f32 %v890, %v2282
    %v2284 = vpop.f32.mrb[0].mxu0
    %2285 = vmatprep.mubr.f32.mxu0 0.0
    %2286 = vmatmul.mubr.f32.gmra.mrb[0].mxu0 %v2171
    %v2287 = vpop.f32.mrb[0].mxu0
    %v2288 = vadd.f32 %v891, %v2287
    %v2289 = vpop.f32.mrb[0].mxu0
    %2290 = vmatprep.mubr.f32.mxu0 0.0
    %2291 = vmatmul.mubr.f32.gmra.mrb[0].mxu0 %v2173
    %v2292 = vpop.f32.mrb[0].mxu0
    %v2293 = vadd.f32 %v892, %v2292
    %v2294 = vpop.f32.mrb[0].mxu0
    %2295 = vdwg.mxu0
    %v2296 = vsel %vm1055, %v2258, -inf
    %2297 = vmax.xlane.f32.xlu0 %v2296
    %v2298 = vpop.xlane.xlu0 %2297
    %v2299 = vsel %vm1055, %v2263, -inf
    %2300 = vmax.xlane.f32.xlu0 %v2299
    %v2301 = vpop.xlane.xlu0 %2300
    %v2302 = vsel %vm1055, %v2268, -inf
    %2303 = vmax.xlane.f32.xlu0 %v2302
    %v2304 = vpop.xlane.xlu0 %2303
    %v2305 = vsel %vm1055, %v2273, -inf
    %2306 = vmax.xlane.f32.xlu0 %v2305
    %v2307 = vpop.xlane.xlu0 %2306
    %v2308 = vsel %vm1055, %v2278, -inf
    %2309 = vmax.xlane.f32.xlu0 %v2308
    %v2310 = vpop.xlane.xlu0 %2309
    %v2311 = vsel %vm1055, %v2283, -inf
    %2312 = vmax.xlane.f32.xlu0 %v2311
    %v2313 = vpop.xlane.xlu0 %2312
    %v2314 = vsel %vm1055, %v2288, -inf
    %2315 = vmax.xlane.f32.xlu0 %v2314
    %v2316 = vpop.xlane.xlu0 %2315
    %v2317 = vsel %vm1055, %v2293, -inf
    %2318 = vmax.xlane.f32.xlu0 %v2317
    %v2319 = vpop.xlane.xlu0 %2318
    %v2320 = vsub.f32 %v2258, %v2298
    %v2321 = vsub.f32 %v2263, %v2301
    %v2322 = vsub.f32 %v2268, %v2304
    %v2323 = vsub.f32 %v2273, %v2307
    %v2324 = vsub.f32 %v2278, %v2310
    %v2325 = vsub.f32 %v2283, %v2313
    %v2326 = vsub.f32 %v2288, %v2316
    %v2327 = vsub.f32 %v2293, %v2319
    %v2328 = vmul.f32 %v2320, 1.442695
    %v2329 = vpow.pop %v2328
    %v2330 = vmul.f32 %v2321, 1.442695
    %v2331 = vpow.pop %v2330
    %v2332 = vmul.f32 %v2322, 1.442695
    %v2333 = vpow.pop %v2332
    %v2334 = vmul.f32 %v2323, 1.442695
    %v2335 = vpow.pop %v2334
    %v2336 = vmul.f32 %v2324, 1.442695
    %v2337 = vpow.pop %v2336
    %v2338 = vmul.f32 %v2325, 1.442695
    %v2339 = vpow.pop %v2338
    %v2340 = vmul.f32 %v2326, 1.442695
    %v2341 = vpow.pop %v2340
    %v2342 = vmul.f32 %v2327, 1.442695
    %v2343 = vpow.pop %v2342
    %v2344 = vsel %vm1055, %v2329, 0.0
    %2345 = vadd.xlane.f32.xlu0 %v2344
    %v2346 = vpop.xlane.xlu0 %2345
    %v2347 = vsel %vm1055, %v2331, 0.0
    %2348 = vadd.xlane.f32.xlu0 %v2347
    %v2349 = vpop.xlane.xlu0 %2348
    %v2350 = vsel %vm1055, %v2333, 0.0
    %2351 = vadd.xlane.f32.xlu0 %v2350
    %v2352 = vpop.xlane.xlu0 %2351
    %v2353 = vsel %vm1055, %v2335, 0.0
    %2354 = vadd.xlane.f32.xlu0 %v2353
    %v2355 = vpop.xlane.xlu0 %2354
    %v2356 = vsel %vm1055, %v2337, 0.0
    %2357 = vadd.xlane.f32.xlu0 %v2356
    %v2358 = vpop.xlane.xlu0 %2357
    %v2359 = vsel %vm1055, %v2339, 0.0
    %2360 = vadd.xlane.f32.xlu0 %v2359
    %v2361 = vpop.xlane.xlu0 %2360
    %v2362 = vsel %vm1055, %v2341, 0.0
    %2363 = vadd.xlane.f32.xlu0 %v2362
    %v2364 = vpop.xlane.xlu0 %2363
    %v2365 = vsel %vm1055, %v2343, 0.0
    %2366 = vadd.xlane.f32.xlu0 %v2365
    %v2367 = vpop.xlane.xlu0 %2366
    %v2368 = vrcp.pop %v2346
    %v2369 = vmul.f32 %v2329, %v2368
    %v2370 = vrcp.pop %v2349
    %v2371 = vmul.f32 %v2331, %v2370
    %v2372 = vrcp.pop %v2352
    %v2373 = vmul.f32 %v2333, %v2372
    %v2374 = vrcp.pop %v2355
    %v2375 = vmul.f32 %v2335, %v2374
    %v2376 = vrcp.pop %v2358
    %v2377 = vmul.f32 %v2337, %v2376
    %v2378 = vrcp.pop %v2361
    %v2379 = vmul.f32 %v2339, %v2378
    %v2380 = vrcp.pop %v2364
    %v2381 = vmul.f32 %v2341, %v2380
    %v2382 = vrcp.pop %v2367
    %v2383 = vmul.f32 %v2343, %v2382
    %s2384 = scalar_lea.vmem [#allocation17], 192
    %2385 = vst.msk [vmem:[%s2384] sm:$0xff] %vm1055, %v2369
    %2386 = vst.msk [vmem:[%s2384 + $0x8] sm:$0xff] %vm1055, %v2371
    %2387 = vst.msk [vmem:[%s2384 + $0x10] sm:$0xff] %vm1055, %v2373
    %2388 = vst.msk [vmem:[%s2384 + $0x18] sm:$0xff] %vm1055, %v2375
    %2389 = vst.msk [vmem:[%s2384 + $0x20] sm:$0xff] %vm1055, %v2377
    %2390 = vst.msk [vmem:[%s2384 + $0x28] sm:$0xff] %vm1055, %v2379
    %2391 = vst.msk [vmem:[%s2384 + $0x30] sm:$0xff] %vm1055, %v2381
    %2392 = vst.msk [vmem:[%s2384 + $0x38] sm:$0xff] %vm1055, %v2383
    %2393 = vrot.lane.b32.xlu0 %v807, 32
    %v2394 = vpop.permute.xlu0 %2393
    %2395 = vrot.lane.b32.xlu0 %v812, 32
    %v2396 = vpop.permute.xlu0 %2395
    %2397 = vrot.lane.b32.xlu0 %v817, 32
    %v2398 = vpop.permute.xlu0 %2397
    %2399 = vrot.lane.b32.xlu0 %v822, 32
    %v2400 = vpop.permute.xlu0 %2399
    %2401 = vrot.lane.b32.xlu0 %v827, 32
    %v2402 = vpop.permute.xlu0 %2401
    %2403 = vrot.lane.b32.xlu0 %v832, 32
    %v2404 = vpop.permute.xlu0 %2403
    %2405 = vrot.lane.b32.xlu0 %v837, 32
    %v2406 = vpop.permute.xlu0 %2405
    %2407 = vrot.lane.b32.xlu0 %v842, 32
    %v2408 = vpop.permute.xlu0 %2407
    %v2418 = vsel %vm1055, %v2369, 0
    %v2421 = vsel %vm1055, %v2371, 0
    %v2424 = vsel %vm1055, %v2373, 0
    %v2427 = vsel %vm1055, %v2375, 0
    %v2430 = vsel %vm1055, %v2377, 0
    %v2433 = vsel %vm1055, %v2379, 0
    %v2436 = vsel %vm1055, %v2381, 0
    %v2439 = vsel %vm1055, %v2383, 0
    %2441 = vmatprep.subr.mxu0 0.0
    %2442 = vmatpush1.msra.mxu0 %v2394
    %2443 = vmatprep.subr.mxu0 0.0
    %2444 = vmatpush1.msra.mxu0 %v2396
    %2445 = vmatprep.subr.mxu0 0.0
    %2446 = vmatpush1.msra.mxu0 %v2398
    %2447 = vmatprep.subr.mxu0 0.0
    %2448 = vmatpush1.msra.mxu0 %v2400
    %2449 = vmatprep.subr.mxu0 0.0
    %2450 = vmatpush1.msra.mxu0 %v2402
    %2451 = vmatprep.subr.mxu0 0.0
    %2452 = vmatpush1.msra.mxu0 %v2404
    %2453 = vmatprep.subr.mxu0 0.0
    %2454 = vmatpush1.msra.mxu0 %v2406
    %2455 = vmatprep.subr.mxu0 0.0
    %2456 = vmatpush1.msra.mxu0 %v2408
    %2457 = vmatprep.subr.mxu0 0.0
    %2458 = vmatpush1.msra.mxu0 0.0
    %2459 = vmatprep.subr.mxu0 0.0
    %2460 = vmatpush1.msra.mxu0 0.0
    %2461 = vmatprep.subr.mxu0 0.0
    %2462 = vmatpush1.msra.mxu0 0.0
    %2463 = vmatprep.subr.mxu0 0.0
    %2464 = vmatpush1.msra.mxu0 0.0
    %2465 = vmatprep.subr.mxu0 0.0
    %2466 = vmatpush1.msra.mxu0 0.0
    %2467 = vmatprep.subr.mxu0 0.0
    %2468 = vmatpush1.msra.mxu0 0.0
    %2469 = vmatprep.subr.mxu0 0.0
    %2470 = vmatpush1.msra.mxu0 0.0
    %2471 = vmatprep.subr.mxu0 0.0
    %2472 = vmatpush1.msra.mxu0 0.0
    %2473 = vmatprep.subr.mxu0 0.0
    %2474 = vmatpush1.msra.mxu0 0.0
    %2475 = vmatprep.subr.mxu0 0.0
    %2476 = vmatpush1.msra.mxu0 0.0
    %2477 = vmatprep.subr.mxu0 0.0
    %2478 = vmatpush1.msra.mxu0 0.0
    %2479 = vmatprep.subr.mxu0 0.0
    %2480 = vmatpush1.msra.mxu0 0.0
    %2481 = vmatprep.subr.mxu0 0.0
    %2482 = vmatpush1.msra.mxu0 0.0
    %2483 = vmatprep.subr.mxu0 0.0
    %2484 = vmatpush1.msra.mxu0 0.0
    %2485 = vmatprep.subr.mxu0 0.0
    %2486 = vmatpush1.msra.mxu0 0.0
    %2487 = vmatprep.subr.mxu0 0.0
    %2488 = vmatpush1.msra.mxu0 0.0
    %2489 = vmatprep.subr.mxu0 0.0
    %2490 = vmatpush1.msra.mxu0 0.0
    %2491 = vmatprep.subr.mxu0 0.0
    %2492 = vmatpush1.msra.mxu0 0.0
    %2493 = vmatprep.subr.mxu0 0.0
    %2494 = vmatpush1.msra.mxu0 0.0
    %2495 = vmatprep.subr.mxu0 0.0
    %2496 = vmatpush1.msra.mxu0 0.0
    %2497 = vmatprep.subr.mxu0 0.0
    %2498 = vmatpush1.msra.mxu0 0.0
    %2499 = vmatprep.subr.mxu0 0.0
    %2500 = vmatpush1.msra.mxu0 0.0
    %2501 = vmatprep.subr.mxu0 0.0
    %2502 = vmatpush1.msra.mxu0 0.0
    %2503 = vmatprep.subr.mxu0 0.0
    %2504 = vmatpush1.msra.mxu0 0.0
    %2505 = vmatprep.mubr.f32.mxu0 0.0
    %2506 = vmatmul.mubr.f32.gmra.mrb[0].mxu0 %v2418
    %v2507 = vpop.f32.mrb[0].mxu0
    %v2508 = vadd.f32 0.0, %v2507
    %v2509 = vpop.f32.mrb[0].mxu0
    %2510 = vmatprep.mubr.f32.mxu0 0.0
    %2511 = vmatmul.mubr.f32.gmra.mrb[0].mxu0 %v2421
    %v2512 = vpop.f32.mrb[0].mxu0
    %v2513 = vadd.f32 0.0, %v2512
    %v2514 = vpop.f32.mrb[0].mxu0
    %2515 = vmatprep.mubr.f32.mxu0 0.0
    %2516 = vmatmul.mubr.f32.gmra.mrb[0].mxu0 %v2424
    %v2517 = vpop.f32.mrb[0].mxu0
    %v2518 = vadd.f32 0.0, %v2517
    %v2519 = vpop.f32.mrb[0].mxu0
    %2520 = vmatprep.mubr.f32.mxu0 0.0
    %2521 = vmatmul.mubr.f32.gmra.mrb[0].mxu0 %v2427
    %v2522 = vpop.f32.mrb[0].mxu0
    %v2523 = vadd.f32 0.0, %v2522
    %v2524 = vpop.f32.mrb[0].mxu0
    %2525 = vmatprep.mubr.f32.mxu0 0.0
    %2526 = vmatmul.mubr.f32.gmra.mrb[0].mxu0 %v2430
    %v2527 = vpop.f32.mrb[0].mxu0
    %v2528 = vadd.f32 0.0, %v2527
    %v2529 = vpop.f32.mrb[0].mxu0
    %2530 = vmatprep.mubr.f32.mxu0 0.0
    %2531 = vmatmul.mubr.f32.gmra.mrb[0].mxu0 %v2433
    %v2532 = vpop.f32.mrb[0].mxu0
    %v2533 = vadd.f32 0.0, %v2532
    %v2534 = vpop.f32.mrb[0].mxu0
    %2535 = vmatprep.mubr.f32.mxu0 0.0
    %2536 = vmatmul.mubr.f32.gmra.mrb[0].mxu0 %v2436
    %v2537 = vpop.f32.mrb[0].mxu0
    %v2538 = vadd.f32 0.0, %v2537
    %v2539 = vpop.f32.mrb[0].mxu0
    %2540 = vmatprep.mubr.f32.mxu0 0.0
    %2541 = vmatmul.mubr.f32.gmra.mrb[0].mxu0 %v2439
    %v2542 = vpop.f32.mrb[0].mxu0
    %v2543 = vadd.f32 0.0, %v2542
    %v2544 = vpop.f32.mrb[0].mxu0
    %2545 = vdwg.mxu0
    %2554 = vrot.lane.b32.xlu0 %v1670, 32
    %v2555 = vpop.permute.xlu0 %2554
    %2556 = vrot.lane.b32.xlu0 %v1675, 32
    %v2557 = vpop.permute.xlu0 %2556
    %2558 = vrot.lane.b32.xlu0 %v1680, 32
    %v2559 = vpop.permute.xlu0 %2558
    %2560 = vrot.lane.b32.xlu0 %v1685, 32
    %v2561 = vpop.permute.xlu0 %2560
    %2562 = vrot.lane.b32.xlu0 %v1690, 32
    %v2563 = vpop.permute.xlu0 %2562
    %2564 = vrot.lane.b32.xlu0 %v1695, 32
    %v2565 = vpop.permute.xlu0 %2564
    %2566 = vrot.lane.b32.xlu0 %v1700, 32
    %v2567 = vpop.permute.xlu0 %2566
    %2568 = vrot.lane.b32.xlu0 %v1705, 32
    %v2569 = vpop.permute.xlu0 %2568
    %2586 = vrot.lane.b32.xlu0 %v2089, 64
    %v2587 = vpop.permute.xlu0 %2586
    %2588 = vrot.lane.b32.xlu0 %v2094, 64
    %v2589 = vpop.permute.xlu0 %2588
    %2590 = vrot.lane.b32.xlu0 %v2099, 64
    %v2591 = vpop.permute.xlu0 %2590
    %2592 = vrot.lane.b32.xlu0 %v2104, 64
    %v2593 = vpop.permute.xlu0 %2592
    %2594 = vrot.lane.b32.xlu0 %v2109, 64
    %v2595 = vpop.permute.xlu0 %2594
    %2596 = vrot.lane.b32.xlu0 %v2114, 64
    %v2597 = vpop.permute.xlu0 %2596
    %2598 = vrot.lane.b32.xlu0 %v2119, 64
    %v2599 = vpop.permute.xlu0 %2598
    %2600 = vrot.lane.b32.xlu0 %v2124, 64
    %v2601 = vpop.permute.xlu0 %2600
    %2618 = vrot.lane.b32.xlu0 %v2508, 96
    %v2619 = vpop.permute.xlu0 %2618
    %2620 = vrot.lane.b32.xlu0 %v2513, 96
    %v2621 = vpop.permute.xlu0 %2620
    %2622 = vrot.lane.b32.xlu0 %v2518, 96
    %v2623 = vpop.permute.xlu0 %2622
    %2624 = vrot.lane.b32.xlu0 %v2523, 96
    %v2625 = vpop.permute.xlu0 %2624
    %2626 = vrot.lane.b32.xlu0 %v2528, 96
    %v2627 = vpop.permute.xlu0 %2626
    %2628 = vrot.lane.b32.xlu0 %v2533, 96
    %v2629 = vpop.permute.xlu0 %2628
    %2630 = vrot.lane.b32.xlu0 %v2538, 96
    %v2631 = vpop.permute.xlu0 %2630
    %2632 = vrot.lane.b32.xlu0 %v2543, 96
    %v2633 = vpop.permute.xlu0 %2632
    %v2642 = vsel %vm901, %v1243, %v2555
    %v2643 = vsel %vm901, %v1248, %v2557
    %v2644 = vsel %vm901, %v1253, %v2559
    %v2645 = vsel %vm901, %v1258, %v2561
    %v2646 = vsel %vm901, %v1263, %v2563
    %v2647 = vsel %vm901, %v1268, %v2565
    %v2648 = vsel %vm901, %v1273, %v2567
    %v2649 = vsel %vm901, %v1278, %v2569
    %v2650 = vsel %vm1055, %v2642, %v2587
    %v2651 = vsel %vm1055, %v2643, %v2589
    %v2652 = vsel %vm1055, %v2644, %v2591
    %v2653 = vsel %vm1055, %v2645, %v2593
    %v2654 = vsel %vm1055, %v2646, %v2595
    %v2655 = vsel %vm1055, %v2647, %v2597
    %v2656 = vsel %vm1055, %v2648, %v2599
    %v2657 = vsel %vm1055, %v2649, %v2601
    %vm2658 = vcmask 785408
    %v2659 = vsel %vm2658, %v2650, %v2619
    %v2660 = vsel %vm2658, %v2651, %v2621
    %v2661 = vsel %vm2658, %v2652, %v2623
    %v2662 = vsel %vm2658, %v2653, %v2625
    %v2663 = vsel %vm2658, %v2654, %v2627
    %v2664 = vsel %vm2658, %v2655, %v2629
    %v2665 = vsel %vm2658, %v2656, %v2631
    %v2666 = vsel %vm2658, %v2657, %v2633
    %s2667 = scalar_lea.vmem [#allocation5], 64
    %v2668 = vld [vmem:[%s2667] sm:$0xff]
    %v2669 = vld [vmem:[%s2667 + $0x8] sm:$0xff]
    %v2670 = vld [vmem:[%s2667 + $0x10] sm:$0xff]
    %v2671 = vld [vmem:[%s2667 + $0x18] sm:$0xff]
    %v2672 = vld [vmem:[%s2667 + $0x20] sm:$0xff]
    %v2673 = vld [vmem:[%s2667 + $0x28] sm:$0xff]
    %v2674 = vld [vmem:[%s2667 + $0x30] sm:$0xff]
    %v2675 = vld [vmem:[%s2667 + $0x38] sm:$0xff]
    %v2676 = vmul.f32 %v525, 0.17677669
    %v2677 = vmul.f32 %v530, 0.17677669
    %v2678 = vmul.f32 %v535, 0.17677669
    %v2679 = vmul.f32 %v540, 0.17677669
    %v2680 = vmul.f32 %v545, 0.17677669
    %v2681 = vmul.f32 %v550, 0.17677669
    %v2682 = vmul.f32 %v555, 0.17677669
    %v2683 = vmul.f32 %v560, 0.17677669
    %v2685 = vsel %vm901, %v2676, 0
    %v2688 = vsel %vm901, %v2677, 0
    %v2691 = vsel %vm901, %v2678, 0
    %v2694 = vsel %vm901, %v2679, 0
    %v2697 = vsel %vm901, %v2680, 0
    %v2700 = vsel %vm901, %v2681, 0
    %v2703 = vsel %vm901, %v2682, 0
    %v2706 = vsel %vm901, %v2683, 0
    %v2709 = vsel %vm901, %v686, 0
    %v2712 = vsel %vm901, %v691, 0
    %v2715 = vsel %vm901, %v696, 0
    %v2718 = vsel %vm901, %v701, 0
    %v2721 = vsel %vm901, %v706, 0
    %v2724 = vsel %vm901, %v711, 0
    %v2727 = vsel %vm901, %v716, 0
    %v2730 = vsel %vm901, %v721, 0
    %2732 = vmatprep.subr.mxu0 0.0
    %2733 = vmatpush1.xpose.msra.mxu0 %v2709
    %2734 = vmatprep.subr.mxu0 0.0
    %2735 = vmatpush1.xpose.msra.mxu0 %v2712
    %2736 = vmatprep.subr.mxu0 0.0
    %2737 = vmatpush1.xpose.msra.mxu0 %v2715
    %2738 = vmatprep.subr.mxu0 0.0
    %2739 = vmatpush1.xpose.msra.mxu0 %v2718
    %2740 = vmatprep.subr.mxu0 0.0
    %2741 = vmatpush1.xpose.msra.mxu0 %v2721
    %2742 = vmatprep.subr.mxu0 0.0
    %2743 = vmatpush1.xpose.msra.mxu0 %v2724
    %2744 = vmatprep.subr.mxu0 0.0
    %2745 = vmatpush1.xpose.msra.mxu0 %v2727
    %2746 = vmatprep.subr.mxu0 0.0
    %2747 = vmatpush1.xpose.msra.mxu0 %v2730
    %2748 = vmatprep.subr.mxu0 0.0
    %2749 = vmatpush1.xpose.msra.mxu0 0.0
    %2750 = vmatprep.subr.mxu0 0.0
    %2751 = vmatpush1.xpose.msra.mxu0 0.0
    %2752 = vmatprep.subr.mxu0 0.0
    %2753 = vmatpush1.xpose.msra.mxu0 0.0
    %2754 = vmatprep.subr.mxu0 0.0
    %2755 = vmatpush1.xpose.msra.mxu0 0.0
    %2756 = vmatprep.subr.mxu0 0.0
    %2757 = vmatpush1.xpose.msra.mxu0 0.0
    %2758 = vmatprep.subr.mxu0 0.0
    %2759 = vmatpush1.xpose.msra.mxu0 0.0
    %2760 = vmatprep.subr.mxu0 0.0
    %2761 = vmatpush1.xpose.msra.mxu0 0.0
    %2762 = vmatprep.subr.mxu0 0.0
    %2763 = vmatpush1.xpose.msra.mxu0 0.0
    %2764 = vmatprep.subr.mxu0 0.0
    %2765 = vmatpush1.xpose.msra.mxu0 0.0
    %2766 = vmatprep.subr.mxu0 0.0
    %2767 = vmatpush1.xpose.msra.mxu0 0.0
    %2768 = vmatprep.subr.mxu0 0.0
    %2769 = vmatpush1.xpose.msra.mxu0 0.0
    %2770 = vmatprep.subr.mxu0 0.0
    %2771 = vmatpush1.xpose.msra.mxu0 0.0
    %2772 = vmatprep.subr.mxu0 0.0
    %2773 = vmatpush1.xpose.msra.mxu0 0.0
    %2774 = vmatprep.subr.mxu0 0.0
    %2775 = vmatpush1.xpose.msra.mxu0 0.0
    %2776 = vmatprep.subr.mxu0 0.0
    %2777 = vmatpush1.xpose.msra.mxu0 0.0
    %2778 = vmatprep.subr.mxu0 0.0
    %2779 = vmatpush1.xpose.msra.mxu0 0.0
    %2780 = vmatprep.subr.mxu0 0.0
    %2781 = vmatpush1.xpose.msra.mxu0 0.0
    %2782 = vmatprep.subr.mxu0 0.0
    %2783 = vmatpush1.xpose.msra.mxu0 0.0
    %2784 = vmatprep.subr.mxu0 0.0
    %2785 = vmatpush1.xpose.msra.mxu0 0.0
    %2786 = vmatprep.subr.mxu0 0.0
    %2787 = vmatpush1.xpose.msra.mxu0 0.0
    %2788 = vmatprep.subr.mxu0 0.0
    %2789 = vmatpush1.xpose.msra.mxu0 0.0
    %2790 = vmatprep.subr.mxu0 0.0
    %2791 = vmatpush1.xpose.msra.mxu0 0.0
    %2792 = vmatprep.subr.mxu0 0.0
    %2793 = vmatpush1.xpose.msra.mxu0 0.0
    %2794 = vmatprep.subr.mxu0 0.0
    %2795 = vmatpush1.xpose.msra.mxu0 0.0
    %2796 = vmatprep.mubr.f32.mxu0 0.0
    %2797 = vmatmul.mubr.f32.gmra.mrb[0].mxu0 %v2685
    %v2798 = vpop.f32.mrb[0].mxu0
    %v2799 = vadd.f32 %v2668, %v2798
    %v2800 = vpop.f32.mrb[0].mxu0
    %2801 = vmatprep.mubr.f32.mxu0 0.0
    %2802 = vmatmul.mubr.f32.gmra.mrb[0].mxu0 %v2688
    %v2803 = vpop.f32.mrb[0].mxu0
    %v2804 = vadd.f32 %v2669, %v2803
    %v2805 = vpop.f32.mrb[0].mxu0
    %2806 = vmatprep.mubr.f32.mxu0 0.0
    %2807 = vmatmul.mubr.f32.gmra.mrb[0].mxu0 %v2691
    %v2808 = vpop.f32.mrb[0].mxu0
    %v2809 = vadd.f32 %v2670, %v2808
    %v2810 = vpop.f32.mrb[0].mxu0
    %2811 = vmatprep.mubr.f32.mxu0 0.0
    %2812 = vmatmul.mubr.f32.gmra.mrb[0].mxu0 %v2694
    %v2813 = vpop.f32.mrb[0].mxu0
    %v2814 = vadd.f32 %v2671, %v2813
    %v2815 = vpop.f32.mrb[0].mxu0
    %2816 = vmatprep.mubr.f32.mxu0 0.0
    %2817 = vmatmul.mubr.f32.gmra.mrb[0].mxu0 %v2697
    %v2818 = vpop.f32.mrb[0].mxu0
    %v2819 = vadd.f32 %v2672, %v2818
    %v2820 = vpop.f32.mrb[0].mxu0
    %2821 = vmatprep.mubr.f32.mxu0 0.0
    %2822 = vmatmul.mubr.f32.gmra.mrb[0].mxu0 %v2700
    %v2823 = vpop.f32.mrb[0].mxu0
    %v2824 = vadd.f32 %v2673, %v2823
    %v2825 = vpop.f32.mrb[0].mxu0
    %2826 = vmatprep.mubr.f32.mxu0 0.0
    %2827 = vmatmul.mubr.f32.gmra.mrb[0].mxu0 %v2703
    %v2828 = vpop.f32.mrb[0].mxu0
    %v2829 = vadd.f32 %v2674, %v2828
    %v2830 = vpop.f32.mrb[0].mxu0
    %2831 = vmatprep.mubr.f32.mxu0 0.0
    %2832 = vmatmul.mubr.f32.gmra.mrb[0].mxu0 %v2706
    %v2833 = vpop.f32.mrb[0].mxu0
    %v2834 = vadd.f32 %v2675, %v2833
    %v2835 = vpop.f32.mrb[0].mxu0
    %2836 = vdwg.mxu0
    %v2837 = vsel %vm1055, %v2799, -inf
    %2838 = vmax.xlane.f32.xlu0 %v2837
    %v2839 = vpop.xlane.xlu0 %2838
    %v2840 = vsel %vm1055, %v2804, -inf
    %2841 = vmax.xlane.f32.xlu0 %v2840
    %v2842 = vpop.xlane.xlu0 %2841
    %v2843 = vsel %vm1055, %v2809, -inf
    %2844 = vmax.xlane.f32.xlu0 %v2843
    %v2845 = vpop.xlane.xlu0 %2844
    %v2846 = vsel %vm1055, %v2814, -inf
    %2847 = vmax.xlane.f32.xlu0 %v2846
    %v2848 = vpop.xlane.xlu0 %2847
    %v2849 = vsel %vm1055, %v2819, -inf
    %2850 = vmax.xlane.f32.xlu0 %v2849
    %v2851 = vpop.xlane.xlu0 %2850
    %v2852 = vsel %vm1055, %v2824, -inf
    %2853 = vmax.xlane.f32.xlu0 %v2852
    %v2854 = vpop.xlane.xlu0 %2853
    %v2855 = vsel %vm1055, %v2829, -inf
    %2856 = vmax.xlane.f32.xlu0 %v2855
    %v2857 = vpop.xlane.xlu0 %2856
    %v2858 = vsel %vm1055, %v2834, -inf
    %2859 = vmax.xlane.f32.xlu0 %v2858
    %v2860 = vpop.xlane.xlu0 %2859
    %v2861 = vsub.f32 %v2799, %v2839
    %v2862 = vsub.f32 %v2804, %v2842
    %v2863 = vsub.f32 %v2809, %v2845
    %v2864 = vsub.f32 %v2814, %v2848
    %v2865 = vsub.f32 %v2819, %v2851
    %v2866 = vsub.f32 %v2824, %v2854
    %v2867 = vsub.f32 %v2829, %v2857
    %v2868 = vsub.f32 %v2834, %v2860
    %v2869 = vmul.f32 %v2861, 1.442695
    %v2870 = vpow.pop %v2869
    %v2871 = vmul.f32 %v2862, 1.442695
    %v2872 = vpow.pop %v2871
    %v2873 = vmul.f32 %v2863, 1.442695
    %v2874 = vpow.pop %v2873
    %v2875 = vmul.f32 %v2864, 1.442695
    %v2876 = vpow.pop %v2875
    %v2877 = vmul.f32 %v2865, 1.442695
    %v2878 = vpow.pop %v2877
    %v2879 = vmul.f32 %v2866, 1.442695
    %v2880 = vpow.pop %v2879
    %v2881 = vmul.f32 %v2867, 1.442695
    %v2882 = vpow.pop %v2881
    %v2883 = vmul.f32 %v2868, 1.442695
    %v2884 = vpow.pop %v2883
    %v2885 = vsel %vm1055, %v2870, 0.0
    %2886 = vadd.xlane.f32.xlu0 %v2885
    %v2887 = vpop.xlane.xlu0 %2886
    %v2888 = vsel %vm1055, %v2872, 0.0
    %2889 = vadd.xlane.f32.xlu0 %v2888
    %v2890 = vpop.xlane.xlu0 %2889
    %v2891 = vsel %vm1055, %v2874, 0.0
    %2892 = vadd.xlane.f32.xlu0 %v2891
    %v2893 = vpop.xlane.xlu0 %2892
    %v2894 = vsel %vm1055, %v2876, 0.0
    %2895 = vadd.xlane.f32.xlu0 %v2894
    %v2896 = vpop.xlane.xlu0 %2895
    %v2897 = vsel %vm1055, %v2878, 0.0
    %2898 = vadd.xlane.f32.xlu0 %v2897
    %v2899 = vpop.xlane.xlu0 %2898
    %v2900 = vsel %vm1055, %v2880, 0.0
    %2901 = vadd.xlane.f32.xlu0 %v2900
    %v2902 = vpop.xlane.xlu0 %2901
    %v2903 = vsel %vm1055, %v2882, 0.0
    %2904 = vadd.xlane.f32.xlu0 %v2903
    %v2905 = vpop.xlane.xlu0 %2904
    %v2906 = vsel %vm1055, %v2884, 0.0
    %2907 = vadd.xlane.f32.xlu0 %v2906
    %v2908 = vpop.xlane.xlu0 %2907
    %v2909 = vrcp.pop %v2887
    %v2910 = vmul.f32 %v2870, %v2909
    %v2911 = vrcp.pop %v2890
    %v2912 = vmul.f32 %v2872, %v2911
    %v2913 = vrcp.pop %v2893
    %v2914 = vmul.f32 %v2874, %v2913
    %v2915 = vrcp.pop %v2896
    %v2916 = vmul.f32 %v2876, %v2915
    %v2917 = vrcp.pop %v2899
    %v2918 = vmul.f32 %v2878, %v2917
    %v2919 = vrcp.pop %v2902
    %v2920 = vmul.f32 %v2880, %v2919
    %v2921 = vrcp.pop %v2905
    %v2922 = vmul.f32 %v2882, %v2921
    %v2923 = vrcp.pop %v2908
    %v2924 = vmul.f32 %v2884, %v2923
    %s2925 = scalar_lea.vmem [#allocation17], 256
    %2926 = vst.msk [vmem:[%s2925] sm:$0xff] %vm1055, %v2910
    %2927 = vst.msk [vmem:[%s2925 + $0x8] sm:$0xff] %vm1055, %v2912
    %2928 = vst.msk [vmem:[%s2925 + $0x10] sm:$0xff] %vm1055, %v2914
    %2929 = vst.msk [vmem:[%s2925 + $0x18] sm:$0xff] %vm1055, %v2916
    %2930 = vst.msk [vmem:[%s2925 + $0x20] sm:$0xff] %vm1055, %v2918
    %2931 = vst.msk [vmem:[%s2925 + $0x28] sm:$0xff] %vm1055, %v2920
    %2932 = vst.msk [vmem:[%s2925 + $0x30] sm:$0xff] %vm1055, %v2922
    %2933 = vst.msk [vmem:[%s2925 + $0x38] sm:$0xff] %vm1055, %v2924
    %v2935 = vsel %vm1055, %v2910, 0
    %v2938 = vsel %vm1055, %v2912, 0
    %v2941 = vsel %vm1055, %v2914, 0
    %v2944 = vsel %vm1055, %v2916, 0
    %v2947 = vsel %vm1055, %v2918, 0
    %v2950 = vsel %vm1055, %v2920, 0
    %v2953 = vsel %vm1055, %v2922, 0
    %v2956 = vsel %vm1055, %v2924, 0
    %2958 = vmatprep.subr.mxu0 0.0
    %2959 = vmatpush1.msra.mxu0 %v847
    %2960 = vmatprep.subr.mxu0 0.0
    %2961 = vmatpush1.msra.mxu0 %v852
    %2962 = vmatprep.subr.mxu0 0.0
    %2963 = vmatpush1.msra.mxu0 %v857
    %2964 = vmatprep.subr.mxu0 0.0
    %2965 = vmatpush1.msra.mxu0 %v862
    %2966 = vmatprep.subr.mxu0 0.0
    %2967 = vmatpush1.msra.mxu0 %v867
    %2968 = vmatprep.subr.mxu0 0.0
    %2969 = vmatpush1.msra.mxu0 %v872
    %2970 = vmatprep.subr.mxu0 0.0
    %2971 = vmatpush1.msra.mxu0 %v877
    %2972 = vmatprep.subr.mxu0 0.0
    %2973 = vmatpush1.msra.mxu0 %v882
    %2974 = vmatprep.subr.mxu0 0.0
    %2975 = vmatpush1.msra.mxu0 0.0
    %2976 = vmatprep.subr.mxu0 0.0
    %2977 = vmatpush1.msra.mxu0 0.0
    %2978 = vmatprep.subr.mxu0 0.0
    %2979 = vmatpush1.msra.mxu0 0.0
    %2980 = vmatprep.subr.mxu0 0.0
    %2981 = vmatpush1.msra.mxu0 0.0
    %2982 = vmatprep.subr.mxu0 0.0
    %2983 = vmatpush1.msra.mxu0 0.0
    %2984 = vmatprep.subr.mxu0 0.0
    %2985 = vmatpush1.msra.mxu0 0.0
    %2986 = vmatprep.subr.mxu0 0.0
    %2987 = vmatpush1.msra.mxu0 0.0
    %2988 = vmatprep.subr.mxu0 0.0
    %2989 = vmatpush1.msra.mxu0 0.0
    %2990 = vmatprep.subr.mxu0 0.0
    %2991 = vmatpush1.msra.mxu0 0.0
    %2992 = vmatprep.subr.mxu0 0.0
    %2993 = vmatpush1.msra.mxu0 0.0
    %2994 = vmatprep.subr.mxu0 0.0
    %2995 = vmatpush1.msra.mxu0 0.0
    %2996 = vmatprep.subr.mxu0 0.0
    %2997 = vmatpush1.msra.mxu0 0.0
    %2998 = vmatprep.subr.mxu0 0.0
    %2999 = vmatpush1.msra.mxu0 0.0
    %3000 = vmatprep.subr.mxu0 0.0
    %3001 = vmatpush1.msra.mxu0 0.0
    %3002 = vmatprep.subr.mxu0 0.0
    %3003 = vmatpush1.msra.mxu0 0.0
    %3004 = vmatprep.subr.mxu0 0.0
    %3005 = vmatpush1.msra.mxu0 0.0
    %3006 = vmatprep.subr.mxu0 0.0
    %3007 = vmatpush1.msra.mxu0 0.0
    %3008 = vmatprep.subr.mxu0 0.0
    %3009 = vmatpush1.msra.mxu0 0.0
    %3010 = vmatprep.subr.mxu0 0.0
    %3011 = vmatpush1.msra.mxu0 0.0
    %3012 = vmatprep.subr.mxu0 0.0
    %3013 = vmatpush1.msra.mxu0 0.0
    %3014 = vmatprep.subr.mxu0 0.0
    %3015 = vmatpush1.msra.mxu0 0.0
    %3016 = vmatprep.subr.mxu0 0.0
    %3017 = vmatpush1.msra.mxu0 0.0
    %3018 = vmatprep.subr.mxu0 0.0
    %3019 = vmatpush1.msra.mxu0 0.0
    %3020 = vmatprep.subr.mxu0 0.0
    %3021 = vmatpush1.msra.mxu0 0.0
    %3022 = vmatprep.mubr.f32.mxu0 0.0
    %3023 = vmatmul.mubr.f32.gmra.mrb[0].mxu0 %v2935
    %v3024 = vpop.f32.mrb[0].mxu0
    %v3025 = vadd.f32 0.0, %v3024
    %v3026 = vpop.f32.mrb[0].mxu0
    %3027 = vmatprep.mubr.f32.mxu0 0.0
    %3028 = vmatmul.mubr.f32.gmra.mrb[0].mxu0 %v2938
    %v3029 = vpop.f32.mrb[0].mxu0
    %v3030 = vadd.f32 0.0, %v3029
    %v3031 = vpop.f32.mrb[0].mxu0
    %3032 = vmatprep.mubr.f32.mxu0 0.0
    %3033 = vmatmul.mubr.f32.gmra.mrb[0].mxu0 %v2941
    %v3034 = vpop.f32.mrb[0].mxu0
    %v3035 = vadd.f32 0.0, %v3034
    %v3036 = vpop.f32.mrb[0].mxu0
    %3037 = vmatprep.mubr.f32.mxu0 0.0
    %3038 = vmatmul.mubr.f32.gmra.mrb[0].mxu0 %v2944
    %v3039 = vpop.f32.mrb[0].mxu0
    %v3040 = vadd.f32 0.0, %v3039
    %v3041 = vpop.f32.mrb[0].mxu0
    %3042 = vmatprep.mubr.f32.mxu0 0.0
    %3043 = vmatmul.mubr.f32.gmra.mrb[0].mxu0 %v2947
    %v3044 = vpop.f32.mrb[0].mxu0
    %v3045 = vadd.f32 0.0, %v3044
    %v3046 = vpop.f32.mrb[0].mxu0
    %3047 = vmatprep.mubr.f32.mxu0 0.0
    %3048 = vmatmul.mubr.f32.gmra.mrb[0].mxu0 %v2950
    %v3049 = vpop.f32.mrb[0].mxu0
    %v3050 = vadd.f32 0.0, %v3049
    %v3051 = vpop.f32.mrb[0].mxu0
    %3052 = vmatprep.mubr.f32.mxu0 0.0
    %3053 = vmatmul.mubr.f32.gmra.mrb[0].mxu0 %v2953
    %v3054 = vpop.f32.mrb[0].mxu0
    %v3055 = vadd.f32 0.0, %v3054
    %v3056 = vpop.f32.mrb[0].mxu0
    %3057 = vmatprep.mubr.f32.mxu0 0.0
    %3058 = vmatmul.mubr.f32.gmra.mrb[0].mxu0 %v2956
    %v3059 = vpop.f32.mrb[0].mxu0
    %v3060 = vadd.f32 0.0, %v3059
    %v3061 = vpop.f32.mrb[0].mxu0
    %3062 = vdwg.mxu0
    %3063 = vrot.lane.b32.xlu0 %v2676, 96
    %v3064 = vpop.permute.xlu0 %3063
    %3065 = vrot.lane.b32.xlu0 %v2677, 96
    %v3066 = vpop.permute.xlu0 %3065
    %3067 = vrot.lane.b32.xlu0 %v2678, 96
    %v3068 = vpop.permute.xlu0 %3067
    %3069 = vrot.lane.b32.xlu0 %v2679, 96
    %v3070 = vpop.permute.xlu0 %3069
    %3071 = vrot.lane.b32.xlu0 %v2680, 96
    %v3072 = vpop.permute.xlu0 %3071
    %3073 = vrot.lane.b32.xlu0 %v2681, 96
    %v3074 = vpop.permute.xlu0 %3073
    %3075 = vrot.lane.b32.xlu0 %v2682, 96
    %v3076 = vpop.permute.xlu0 %3075
    %3077 = vrot.lane.b32.xlu0 %v2683, 96
    %v3078 = vpop.permute.xlu0 %3077
    %3079 = vrot.lane.b32.xlu0 %v686, 96
    %v3080 = vpop.permute.xlu0 %3079
    %3081 = vrot.lane.b32.xlu0 %v691, 96
    %v3082 = vpop.permute.xlu0 %3081
    %3083 = vrot.lane.b32.xlu0 %v696, 96
    %v3084 = vpop.permute.xlu0 %3083
    %3085 = vrot.lane.b32.xlu0 %v701, 96
    %v3086 = vpop.permute.xlu0 %3085
    %3087 = vrot.lane.b32.xlu0 %v706, 96
    %v3088 = vpop.permute.xlu0 %3087
    %3089 = vrot.lane.b32.xlu0 %v711, 96
    %v3090 = vpop.permute.xlu0 %3089
    %3091 = vrot.lane.b32.xlu0 %v716, 96
    %v3092 = vpop.permute.xlu0 %3091
    %3093 = vrot.lane.b32.xlu0 %v721, 96
    %v3094 = vpop.permute.xlu0 %3093
    %v3095 = vsel %vm901, %v3064, 0
    %v3097 = vsel %vm901, %v3066, 0
    %v3099 = vsel %vm901, %v3068, 0
    %v3101 = vsel %vm901, %v3070, 0
    %v3103 = vsel %vm901, %v3072, 0
    %v3105 = vsel %vm901, %v3074, 0
    %v3107 = vsel %vm901, %v3076, 0
    %v3109 = vsel %vm901, %v3078, 0
    %v3111 = vsel %vm901, %v3080, 0
    %v3113 = vsel %vm901, %v3082, 0
    %v3115 = vsel %vm901, %v3084, 0
    %v3117 = vsel %vm901, %v3086, 0
    %v3119 = vsel %vm901, %v3088, 0
    %v3121 = vsel %vm901, %v3090, 0
    %v3123 = vsel %vm901, %v3092, 0
    %v3125 = vsel %vm901, %v3094, 0
    %3127 = vmatprep.subr.mxu0 0.0
    %3128 = vmatpush1.xpose.msra.mxu0 %v3111
    %3129 = vmatprep.subr.mxu0 0.0
    %3130 = vmatpush1.xpose.msra.mxu0 %v3113
    %3131 = vmatprep.subr.mxu0 0.0
    %3132 = vmatpush1.xpose.msra.mxu0 %v3115
    %3133 = vmatprep.subr.mxu0 0.0
    %3134 = vmatpush1.xpose.msra.mxu0 %v3117
    %3135 = vmatprep.subr.mxu0 0.0
    %3136 = vmatpush1.xpose.msra.mxu0 %v3119
    %3137 = vmatprep.subr.mxu0 0.0
    %3138 = vmatpush1.xpose.msra.mxu0 %v3121
    %3139 = vmatprep.subr.mxu0 0.0
    %3140 = vmatpush1.xpose.msra.mxu0 %v3123
    %3141 = vmatprep.subr.mxu0 0.0
    %3142 = vmatpush1.xpose.msra.mxu0 %v3125
    %3143 = vmatprep.subr.mxu0 0.0
    %3144 = vmatpush1.xpose.msra.mxu0 0.0
    %3145 = vmatprep.subr.mxu0 0.0
    %3146 = vmatpush1.xpose.msra.mxu0 0.0
    %3147 = vmatprep.subr.mxu0 0.0
    %3148 = vmatpush1.xpose.msra.mxu0 0.0
    %3149 = vmatprep.subr.mxu0 0.0
    %3150 = vmatpush1.xpose.msra.mxu0 0.0
    %3151 = vmatprep.subr.mxu0 0.0
    %3152 = vmatpush1.xpose.msra.mxu0 0.0
    %3153 = vmatprep.subr.mxu0 0.0
    %3154 = vmatpush1.xpose.msra.mxu0 0.0
    %3155 = vmatprep.subr.mxu0 0.0
    %3156 = vmatpush1.xpose.msra.mxu0 0.0
    %3157 = vmatprep.subr.mxu0 0.0
    %3158 = vmatpush1.xpose.msra.mxu0 0.0
    %3159 = vmatprep.subr.mxu0 0.0
    %3160 = vmatpush1.xpose.msra.mxu0 0.0
    %3161 = vmatprep.subr.mxu0 0.0
    %3162 = vmatpush1.xpose.msra.mxu0 0.0
    %3163 = vmatprep.subr.mxu0 0.0
    %3164 = vmatpush1.xpose.msra.mxu0 0.0
    %3165 = vmatprep.subr.mxu0 0.0
    %3166 = vmatpush1.xpose.msra.mxu0 0.0
    %3167 = vmatprep.subr.mxu0 0.0
    %3168 = vmatpush1.xpose.msra.mxu0 0.0
    %3169 = vmatprep.subr.mxu0 0.0
    %3170 = vmatpush1.xpose.msra.mxu0 0.0
    %3171 = vmatprep.subr.mxu0 0.0
    %3172 = vmatpush1.xpose.msra.mxu0 0.0
    %3173 = vmatprep.subr.mxu0 0.0
    %3174 = vmatpush1.xpose.msra.mxu0 0.0
    %3175 = vmatprep.subr.mxu0 0.0
    %3176 = vmatpush1.xpose.msra.mxu0 0.0
    %3177 = vmatprep.subr.mxu0 0.0
    %3178 = vmatpush1.xpose.msra.mxu0 0.0
    %3179 = vmatprep.subr.mxu0 0.0
    %3180 = vmatpush1.xpose.msra.mxu0 0.0
    %3181 = vmatprep.subr.mxu0 0.0
    %3182 = vmatpush1.xpose.msra.mxu0 0.0
    %3183 = vmatprep.subr.mxu0 0.0
    %3184 = vmatpush1.xpose.msra.mxu0 0.0
    %3185 = vmatprep.subr.mxu0 0.0
    %3186 = vmatpush1.xpose.msra.mxu0 0.0
    %3187 = vmatprep.subr.mxu0 0.0
    %3188 = vmatpush1.xpose.msra.mxu0 0.0
    %3189 = vmatprep.subr.mxu0 0.0
    %3190 = vmatpush1.xpose.msra.mxu0 0.0
    %3191 = vmatprep.mubr.f32.mxu0 0.0
    %3192 = vmatmul.mubr.f32.gmra.mrb[0].mxu0 %v3095
    %v3193 = vpop.f32.mrb[0].mxu0
    %v3194 = vadd.f32 %v2668, %v3193
    %v3195 = vpop.f32.mrb[0].mxu0
    %3196 = vmatprep.mubr.f32.mxu0 0.0
    %3197 = vmatmul.mubr.f32.gmra.mrb[0].mxu0 %v3097
    %v3198 = vpop.f32.mrb[0].mxu0
    %v3199 = vadd.f32 %v2669, %v3198
    %v3200 = vpop.f32.mrb[0].mxu0
    %3201 = vmatprep.mubr.f32.mxu0 0.0
    %3202 = vmatmul.mubr.f32.gmra.mrb[0].mxu0 %v3099
    %v3203 = vpop.f32.mrb[0].mxu0
    %v3204 = vadd.f32 %v2670, %v3203
    %v3205 = vpop.f32.mrb[0].mxu0
    %3206 = vmatprep.mubr.f32.mxu0 0.0
    %3207 = vmatmul.mubr.f32.gmra.mrb[0].mxu0 %v3101
    %v3208 = vpop.f32.mrb[0].mxu0
    %v3209 = vadd.f32 %v2671, %v3208
    %v3210 = vpop.f32.mrb[0].mxu0
    %3211 = vmatprep.mubr.f32.mxu0 0.0
    %3212 = vmatmul.mubr.f32.gmra.mrb[0].mxu0 %v3103
    %v3213 = vpop.f32.mrb[0].mxu0
    %v3214 = vadd.f32 %v2672, %v3213
    %v3215 = vpop.f32.mrb[0].mxu0
    %3216 = vmatprep.mubr.f32.mxu0 0.0
    %3217 = vmatmul.mubr.f32.gmra.mrb[0].mxu0 %v3105
    %v3218 = vpop.f32.mrb[0].mxu0
    %v3219 = vadd.f32 %v2673, %v3218
    %v3220 = vpop.f32.mrb[0].mxu0
    %3221 = vmatprep.mubr.f32.mxu0 0.0
    %3222 = vmatmul.mubr.f32.gmra.mrb[0].mxu0 %v3107
    %v3223 = vpop.f32.mrb[0].mxu0
    %v3224 = vadd.f32 %v2674, %v3223
    %v3225 = vpop.f32.mrb[0].mxu0
    %3226 = vmatprep.mubr.f32.mxu0 0.0
    %3227 = vmatmul.mubr.f32.gmra.mrb[0].mxu0 %v3109
    %v3228 = vpop.f32.mrb[0].mxu0
    %v3229 = vadd.f32 %v2675, %v3228
    %v3230 = vpop.f32.mrb[0].mxu0
    %3231 = vdwg.mxu0
    %v3232 = vsel %vm1055, %v3194, -inf
    %3233 = vmax.xlane.f32.xlu0 %v3232
    %v3234 = vpop.xlane.xlu0 %3233
    %v3235 = vsel %vm1055, %v3199, -inf
    %3236 = vmax.xlane.f32.xlu0 %v3235
    %v3237 = vpop.xlane.xlu0 %3236
    %v3238 = vsel %vm1055, %v3204, -inf
    %3239 = vmax.xlane.f32.xlu0 %v3238
    %v3240 = vpop.xlane.xlu0 %3239
    %v3241 = vsel %vm1055, %v3209, -inf
    %3242 = vmax.xlane.f32.xlu0 %v3241
    %v3243 = vpop.xlane.xlu0 %3242
    %v3244 = vsel %vm1055, %v3214, -inf
    %3245 = vmax.xlane.f32.xlu0 %v3244
    %v3246 = vpop.xlane.xlu0 %3245
    %v3247 = vsel %vm1055, %v3219, -inf
    %3248 = vmax.xlane.f32.xlu0 %v3247
    %v3249 = vpop.xlane.xlu0 %3248
    %v3250 = vsel %vm1055, %v3224, -inf
    %3251 = vmax.xlane.f32.xlu0 %v3250
    %v3252 = vpop.xlane.xlu0 %3251
    %v3253 = vsel %vm1055, %v3229, -inf
    %3254 = vmax.xlane.f32.xlu0 %v3253
    %v3255 = vpop.xlane.xlu0 %3254
    %v3256 = vsub.f32 %v3194, %v3234
    %v3257 = vsub.f32 %v3199, %v3237
    %v3258 = vsub.f32 %v3204, %v3240
    %v3259 = vsub.f32 %v3209, %v3243
    %v3260 = vsub.f32 %v3214, %v3246
    %v3261 = vsub.f32 %v3219, %v3249
    %v3262 = vsub.f32 %v3224, %v3252
    %v3263 = vsub.f32 %v3229, %v3255
    %v3264 = vmul.f32 %v3256, 1.442695
    %v3265 = vpow.pop %v3264
    %v3266 = vmul.f32 %v3257, 1.442695
    %v3267 = vpow.pop %v3266
    %v3268 = vmul.f32 %v3258, 1.442695
    %v3269 = vpow.pop %v3268
    %v3270 = vmul.f32 %v3259, 1.442695
    %v3271 = vpow.pop %v3270
    %v3272 = vmul.f32 %v3260, 1.442695
    %v3273 = vpow.pop %v3272
    %v3274 = vmul.f32 %v3261, 1.442695
    %v3275 = vpow.pop %v3274
    %v3276 = vmul.f32 %v3262, 1.442695
    %v3277 = vpow.pop %v3276
    %v3278 = vmul.f32 %v3263, 1.442695
    %v3279 = vpow.pop %v3278
    %v3280 = vsel %vm1055, %v3265, 0.0
    %3281 = vadd.xlane.f32.xlu0 %v3280
    %v3282 = vpop.xlane.xlu0 %3281
    %v3283 = vsel %vm1055, %v3267, 0.0
    %3284 = vadd.xlane.f32.xlu0 %v3283
    %v3285 = vpop.xlane.xlu0 %3284
    %v3286 = vsel %vm1055, %v3269, 0.0
    %3287 = vadd.xlane.f32.xlu0 %v3286
    %v3288 = vpop.xlane.xlu0 %3287
    %v3289 = vsel %vm1055, %v3271, 0.0
    %3290 = vadd.xlane.f32.xlu0 %v3289
    %v3291 = vpop.xlane.xlu0 %3290
    %v3292 = vsel %vm1055, %v3273, 0.0
    %3293 = vadd.xlane.f32.xlu0 %v3292
    %v3294 = vpop.xlane.xlu0 %3293
    %v3295 = vsel %vm1055, %v3275, 0.0
    %3296 = vadd.xlane.f32.xlu0 %v3295
    %v3297 = vpop.xlane.xlu0 %3296
    %v3298 = vsel %vm1055, %v3277, 0.0
    %3299 = vadd.xlane.f32.xlu0 %v3298
    %v3300 = vpop.xlane.xlu0 %3299
    %v3301 = vsel %vm1055, %v3279, 0.0
    %3302 = vadd.xlane.f32.xlu0 %v3301
    %v3303 = vpop.xlane.xlu0 %3302
    %v3304 = vrcp.pop %v3282
    %v3305 = vmul.f32 %v3265, %v3304
    %v3306 = vrcp.pop %v3285
    %v3307 = vmul.f32 %v3267, %v3306
    %v3308 = vrcp.pop %v3288
    %v3309 = vmul.f32 %v3269, %v3308
    %v3310 = vrcp.pop %v3291
    %v3311 = vmul.f32 %v3271, %v3310
    %v3312 = vrcp.pop %v3294
    %v3313 = vmul.f32 %v3273, %v3312
    %v3314 = vrcp.pop %v3297
    %v3315 = vmul.f32 %v3275, %v3314
    %v3316 = vrcp.pop %v3300
    %v3317 = vmul.f32 %v3277, %v3316
    %v3318 = vrcp.pop %v3303
    %v3319 = vmul.f32 %v3279, %v3318
    %s3320 = scalar_lea.vmem [#allocation17], 320
    %3321 = vst.msk [vmem:[%s3320] sm:$0xff] %vm1055, %v3305
    %3322 = vst.msk [vmem:[%s3320 + $0x8] sm:$0xff] %vm1055, %v3307
    %3323 = vst.msk [vmem:[%s3320 + $0x10] sm:$0xff] %vm1055, %v3309
    %3324 = vst.msk [vmem:[%s3320 + $0x18] sm:$0xff] %vm1055, %v3311
    %3325 = vst.msk [vmem:[%s3320 + $0x20] sm:$0xff] %vm1055, %v3313
    %3326 = vst.msk [vmem:[%s3320 + $0x28] sm:$0xff] %vm1055, %v3315
    %3327 = vst.msk [vmem:[%s3320 + $0x30] sm:$0xff] %vm1055, %v3317
    %3328 = vst.msk [vmem:[%s3320 + $0x38] sm:$0xff] %vm1055, %v3319
    %3337 = vrot.lane.b32.xlu0 %v847, 96
    %v3338 = vpop.permute.xlu0 %3337
    %3339 = vrot.lane.b32.xlu0 %v852, 96
    %v3340 = vpop.permute.xlu0 %3339
    %3341 = vrot.lane.b32.xlu0 %v857, 96
    %v3342 = vpop.permute.xlu0 %3341
    %3343 = vrot.lane.b32.xlu0 %v862, 96
    %v3344 = vpop.permute.xlu0 %3343
    %3345 = vrot.lane.b32.xlu0 %v867, 96
    %v3346 = vpop.permute.xlu0 %3345
    %3347 = vrot.lane.b32.xlu0 %v872, 96
    %v3348 = vpop.permute.xlu0 %3347
    %3349 = vrot.lane.b32.xlu0 %v877, 96
    %v3350 = vpop.permute.xlu0 %3349
    %3351 = vrot.lane.b32.xlu0 %v882, 96
    %v3352 = vpop.permute.xlu0 %3351
    %v3362 = vsel %vm1055, %v3305, 0
    %v3365 = vsel %vm1055, %v3307, 0
    %v3368 = vsel %vm1055, %v3309, 0
    %v3371 = vsel %vm1055, %v3311, 0
    %v3374 = vsel %vm1055, %v3313, 0
    %v3377 = vsel %vm1055, %v3315, 0
    %v3380 = vsel %vm1055, %v3317, 0
    %v3383 = vsel %vm1055, %v3319, 0
    %3385 = vmatprep.subr.mxu0 0.0
    %3386 = vmatpush1.msra.mxu0 %v3338
    %3387 = vmatprep.subr.mxu0 0.0
    %3388 = vmatpush1.msra.mxu0 %v3340
    %3389 = vmatprep.subr.mxu0 0.0
    %3390 = vmatpush1.msra.mxu0 %v3342
    %3391 = vmatprep.subr.mxu0 0.0
    %3392 = vmatpush1.msra.mxu0 %v3344
    %3393 = vmatprep.subr.mxu0 0.0
    %3394 = vmatpush1.msra.mxu0 %v3346
    %3395 = vmatprep.subr.mxu0 0.0
    %3396 = vmatpush1.msra.mxu0 %v3348
    %3397 = vmatprep.subr.mxu0 0.0
    %3398 = vmatpush1.msra.mxu0 %v3350
    %3399 = vmatprep.subr.mxu0 0.0
    %3400 = vmatpush1.msra.mxu0 %v3352
    %3401 = vmatprep.subr.mxu0 0.0
    %3402 = vmatpush1.msra.mxu0 0.0
    %3403 = vmatprep.subr.mxu0 0.0
    %3404 = vmatpush1.msra.mxu0 0.0
    %3405 = vmatprep.subr.mxu0 0.0
    %3406 = vmatpush1.msra.mxu0 0.0
    %3407 = vmatprep.subr.mxu0 0.0
    %3408 = vmatpush1.msra.mxu0 0.0
    %3409 = vmatprep.subr.mxu0 0.0
    %3410 = vmatpush1.msra.mxu0 0.0
    %3411 = vmatprep.subr.mxu0 0.0
    %3412 = vmatpush1.msra.mxu0 0.0
    %3413 = vmatprep.subr.mxu0 0.0
    %3414 = vmatpush1.msra.mxu0 0.0
    %3415 = vmatprep.subr.mxu0 0.0
    %3416 = vmatpush1.msra.mxu0 0.0
    %3417 = vmatprep.subr.mxu0 0.0
    %3418 = vmatpush1.msra.mxu0 0.0
    %3419 = vmatprep.subr.mxu0 0.0
    %3420 = vmatpush1.msra.mxu0 0.0
    %3421 = vmatprep.subr.mxu0 0.0
    %3422 = vmatpush1.msra.mxu0 0.0
    %3423 = vmatprep.subr.mxu0 0.0
    %3424 = vmatpush1.msra.mxu0 0.0
    %3425 = vmatprep.subr.mxu0 0.0
    %3426 = vmatpush1.msra.mxu0 0.0
    %3427 = vmatprep.subr.mxu0 0.0
    %3428 = vmatpush1.msra.mxu0 0.0
    %3429 = vmatprep.subr.mxu0 0.0
    %3430 = vmatpush1.msra.mxu0 0.0
    %3431 = vmatprep.subr.mxu0 0.0
    %3432 = vmatpush1.msra.mxu0 0.0
    %3433 = vmatprep.subr.mxu0 0.0
    %3434 = vmatpush1.msra.mxu0 0.0
    %3435 = vmatprep.subr.mxu0 0.0
    %3436 = vmatpush1.msra.mxu0 0.0
    %3437 = vmatprep.subr.mxu0 0.0
    %3438 = vmatpush1.msra.mxu0 0.0
    %3439 = vmatprep.subr.mxu0 0.0
    %3440 = vmatpush1.msra.mxu0 0.0
    %3441 = vmatprep.subr.mxu0 0.0
    %3442 = vmatpush1.msra.mxu0 0.0
    %3443 = vmatprep.subr.mxu0 0.0
    %3444 = vmatpush1.msra.mxu0 0.0
    %3445 = vmatprep.subr.mxu0 0.0
    %3446 = vmatpush1.msra.mxu0 0.0
    %3447 = vmatprep.subr.mxu0 0.0
    %3448 = vmatpush1.msra.mxu0 0.0
    %3449 = vmatprep.mubr.f32.mxu0 0.0
    %3450 = vmatmul.mubr.f32.gmra.mrb[0].mxu0 %v3362
    %v3451 = vpop.f32.mrb[0].mxu0
    %v3452 = vadd.f32 0.0, %v3451
    %v3453 = vpop.f32.mrb[0].mxu0
    %3454 = vmatprep.mubr.f32.mxu0 0.0
    %3455 = vmatmul.mubr.f32.gmra.mrb[0].mxu0 %v3365
    %v3456 = vpop.f32.mrb[0].mxu0
    %v3457 = vadd.f32 0.0, %v3456
    %v3458 = vpop.f32.mrb[0].mxu0
    %3459 = vmatprep.mubr.f32.mxu0 0.0
    %3460 = vmatmul.mubr.f32.gmra.mrb[0].mxu0 %v3368
    %v3461 = vpop.f32.mrb[0].mxu0
    %v3462 = vadd.f32 0.0, %v3461
    %v3463 = vpop.f32.mrb[0].mxu0
    %3464 = vmatprep.mubr.f32.mxu0 0.0
    %3465 = vmatmul.mubr.f32.gmra.mrb[0].mxu0 %v3371
    %v3466 = vpop.f32.mrb[0].mxu0
    %v3467 = vadd.f32 0.0, %v3466
    %v3468 = vpop.f32.mrb[0].mxu0
    %3469 = vmatprep.mubr.f32.mxu0 0.0
    %3470 = vmatmul.mubr.f32.gmra.mrb[0].mxu0 %v3374
    %v3471 = vpop.f32.mrb[0].mxu0
    %v3472 = vadd.f32 0.0, %v3471
    %v3473 = vpop.f32.mrb[0].mxu0
    %3474 = vmatprep.mubr.f32.mxu0 0.0
    %3475 = vmatmul.mubr.f32.gmra.mrb[0].mxu0 %v3377
    %v3476 = vpop.f32.mrb[0].mxu0
    %v3477 = vadd.f32 0.0, %v3476
    %v3478 = vpop.f32.mrb[0].mxu0
    %3479 = vmatprep.mubr.f32.mxu0 0.0
    %3480 = vmatmul.mubr.f32.gmra.mrb[0].mxu0 %v3380
    %v3481 = vpop.f32.mrb[0].mxu0
    %v3482 = vadd.f32 0.0, %v3481
    %v3483 = vpop.f32.mrb[0].mxu0
    %3484 = vmatprep.mubr.f32.mxu0 0.0
    %3485 = vmatmul.mubr.f32.gmra.mrb[0].mxu0 %v3383
    %v3486 = vpop.f32.mrb[0].mxu0
    %v3487 = vadd.f32 0.0, %v3486
    %v3488 = vpop.f32.mrb[0].mxu0
    %3489 = vdwg.mxu0
    %3490 = vrot.lane.b32.xlu0 %v2676, 64
    %v3491 = vpop.permute.xlu0 %3490
    %3492 = vrot.lane.b32.xlu0 %v2677, 64
    %v3493 = vpop.permute.xlu0 %3492
    %3494 = vrot.lane.b32.xlu0 %v2678, 64
    %v3495 = vpop.permute.xlu0 %3494
    %3496 = vrot.lane.b32.xlu0 %v2679, 64
    %v3497 = vpop.permute.xlu0 %3496
    %3498 = vrot.lane.b32.xlu0 %v2680, 64
    %v3499 = vpop.permute.xlu0 %3498
    %3500 = vrot.lane.b32.xlu0 %v2681, 64
    %v3501 = vpop.permute.xlu0 %3500
    %3502 = vrot.lane.b32.xlu0 %v2682, 64
    %v3503 = vpop.permute.xlu0 %3502
    %3504 = vrot.lane.b32.xlu0 %v2683, 64
    %v3505 = vpop.permute.xlu0 %3504
    %3506 = vrot.lane.b32.xlu0 %v686, 64
    %v3507 = vpop.permute.xlu0 %3506
    %3508 = vrot.lane.b32.xlu0 %v691, 64
    %v3509 = vpop.permute.xlu0 %3508
    %3510 = vrot.lane.b32.xlu0 %v696, 64
    %v3511 = vpop.permute.xlu0 %3510
    %3512 = vrot.lane.b32.xlu0 %v701, 64
    %v3513 = vpop.permute.xlu0 %3512
    %3514 = vrot.lane.b32.xlu0 %v706, 64
    %v3515 = vpop.permute.xlu0 %3514
    %3516 = vrot.lane.b32.xlu0 %v711, 64
    %v3517 = vpop.permute.xlu0 %3516
    %3518 = vrot.lane.b32.xlu0 %v716, 64
    %v3519 = vpop.permute.xlu0 %3518
    %3520 = vrot.lane.b32.xlu0 %v721, 64
    %v3521 = vpop.permute.xlu0 %3520
    %v3522 = vsel %vm901, %v3491, 0
    %v3524 = vsel %vm901, %v3493, 0
    %v3526 = vsel %vm901, %v3495, 0
    %v3528 = vsel %vm901, %v3497, 0
    %v3530 = vsel %vm901, %v3499, 0
    %v3532 = vsel %vm901, %v3501, 0
    %v3534 = vsel %vm901, %v3503, 0
    %v3536 = vsel %vm901, %v3505, 0
    %v3538 = vsel %vm901, %v3507, 0
    %v3540 = vsel %vm901, %v3509, 0
    %v3542 = vsel %vm901, %v3511, 0
    %v3544 = vsel %vm901, %v3513, 0
    %v3546 = vsel %vm901, %v3515, 0
    %v3548 = vsel %vm901, %v3517, 0
    %v3550 = vsel %vm901, %v3519, 0
    %v3552 = vsel %vm901, %v3521, 0
    %3554 = vmatprep.subr.mxu0 0.0
    %3555 = vmatpush1.xpose.msra.mxu0 %v3538
    %3556 = vmatprep.subr.mxu0 0.0
    %3557 = vmatpush1.xpose.msra.mxu0 %v3540
    %3558 = vmatprep.subr.mxu0 0.0
    %3559 = vmatpush1.xpose.msra.mxu0 %v3542
    %3560 = vmatprep.subr.mxu0 0.0
    %3561 = vmatpush1.xpose.msra.mxu0 %v3544
    %3562 = vmatprep.subr.mxu0 0.0
    %3563 = vmatpush1.xpose.msra.mxu0 %v3546
    %3564 = vmatprep.subr.mxu0 0.0
    %3565 = vmatpush1.xpose.msra.mxu0 %v3548
    %3566 = vmatprep.subr.mxu0 0.0
    %3567 = vmatpush1.xpose.msra.mxu0 %v3550
    %3568 = vmatprep.subr.mxu0 0.0
    %3569 = vmatpush1.xpose.msra.mxu0 %v3552
    %3570 = vmatprep.subr.mxu0 0.0
    %3571 = vmatpush1.xpose.msra.mxu0 0.0
    %3572 = vmatprep.subr.mxu0 0.0
    %3573 = vmatpush1.xpose.msra.mxu0 0.0
    %3574 = vmatprep.subr.mxu0 0.0
    %3575 = vmatpush1.xpose.msra.mxu0 0.0
    %3576 = vmatprep.subr.mxu0 0.0
    %3577 = vmatpush1.xpose.msra.mxu0 0.0
    %3578 = vmatprep.subr.mxu0 0.0
    %3579 = vmatpush1.xpose.msra.mxu0 0.0
    %3580 = vmatprep.subr.mxu0 0.0
    %3581 = vmatpush1.xpose.msra.mxu0 0.0
    %3582 = vmatprep.subr.mxu0 0.0
    %3583 = vmatpush1.xpose.msra.mxu0 0.0
    %3584 = vmatprep.subr.mxu0 0.0
    %3585 = vmatpush1.xpose.msra.mxu0 0.0
    %3586 = vmatprep.subr.mxu0 0.0
    %3587 = vmatpush1.xpose.msra.mxu0 0.0
    %3588 = vmatprep.subr.mxu0 0.0
    %3589 = vmatpush1.xpose.msra.mxu0 0.0
    %3590 = vmatprep.subr.mxu0 0.0
    %3591 = vmatpush1.xpose.msra.mxu0 0.0
    %3592 = vmatprep.subr.mxu0 0.0
    %3593 = vmatpush1.xpose.msra.mxu0 0.0
    %3594 = vmatprep.subr.mxu0 0.0
    %3595 = vmatpush1.xpose.msra.mxu0 0.0
    %3596 = vmatprep.subr.mxu0 0.0
    %3597 = vmatpush1.xpose.msra.mxu0 0.0
    %3598 = vmatprep.subr.mxu0 0.0
    %3599 = vmatpush1.xpose.msra.mxu0 0.0
    %3600 = vmatprep.subr.mxu0 0.0
    %3601 = vmatpush1.xpose.msra.mxu0 0.0
    %3602 = vmatprep.subr.mxu0 0.0
    %3603 = vmatpush1.xpose.msra.mxu0 0.0
    %3604 = vmatprep.subr.mxu0 0.0
    %3605 = vmatpush1.xpose.msra.mxu0 0.0
    %3606 = vmatprep.subr.mxu0 0.0
    %3607 = vmatpush1.xpose.msra.mxu0 0.0
    %3608 = vmatprep.subr.mxu0 0.0
    %3609 = vmatpush1.xpose.msra.mxu0 0.0
    %3610 = vmatprep.subr.mxu0 0.0
    %3611 = vmatpush1.xpose.msra.mxu0 0.0
    %3612 = vmatprep.subr.mxu0 0.0
    %3613 = vmatpush1.xpose.msra.mxu0 0.0
    %3614 = vmatprep.subr.mxu0 0.0
    %3615 = vmatpush1.xpose.msra.mxu0 0.0
    %3616 = vmatprep.subr.mxu0 0.0
    %3617 = vmatpush1.xpose.msra.mxu0 0.0
    %3618 = vmatprep.mubr.f32.mxu0 0.0
    %3619 = vmatmul.mubr.f32.gmra.mrb[0].mxu0 %v3522
    %v3620 = vpop.f32.mrb[0].mxu0
    %v3621 = vadd.f32 %v2668, %v3620
    %v3622 = vpop.f32.mrb[0].mxu0
    %3623 = vmatprep.mubr.f32.mxu0 0.0
    %3624 = vmatmul.mubr.f32.gmra.mrb[0].mxu0 %v3524
    %v3625 = vpop.f32.mrb[0].mxu0
    %v3626 = vadd.f32 %v2669, %v3625
    %v3627 = vpop.f32.mrb[0].mxu0
    %3628 = vmatprep.mubr.f32.mxu0 0.0
    %3629 = vmatmul.mubr.f32.gmra.mrb[0].mxu0 %v3526
    %v3630 = vpop.f32.mrb[0].mxu0
    %v3631 = vadd.f32 %v2670, %v3630
    %v3632 = vpop.f32.mrb[0].mxu0
    %3633 = vmatprep.mubr.f32.mxu0 0.0
    %3634 = vmatmul.mubr.f32.gmra.mrb[0].mxu0 %v3528
    %v3635 = vpop.f32.mrb[0].mxu0
    %v3636 = vadd.f32 %v2671, %v3635
    %v3637 = vpop.f32.mrb[0].mxu0
    %3638 = vmatprep.mubr.f32.mxu0 0.0
    %3639 = vmatmul.mubr.f32.gmra.mrb[0].mxu0 %v3530
    %v3640 = vpop.f32.mrb[0].mxu0
    %v3641 = vadd.f32 %v2672, %v3640
    %v3642 = vpop.f32.mrb[0].mxu0
    %3643 = vmatprep.mubr.f32.mxu0 0.0
    %3644 = vmatmul.mubr.f32.gmra.mrb[0].mxu0 %v3532
    %v3645 = vpop.f32.mrb[0].mxu0
    %v3646 = vadd.f32 %v2673, %v3645
    %v3647 = vpop.f32.mrb[0].mxu0
    %3648 = vmatprep.mubr.f32.mxu0 0.0
    %3649 = vmatmul.mubr.f32.gmra.mrb[0].mxu0 %v3534
    %v3650 = vpop.f32.mrb[0].mxu0
    %v3651 = vadd.f32 %v2674, %v3650
    %v3652 = vpop.f32.mrb[0].mxu0
    %3653 = vmatprep.mubr.f32.mxu0 0.0
    %3654 = vmatmul.mubr.f32.gmra.mrb[0].mxu0 %v3536
    %v3655 = vpop.f32.mrb[0].mxu0
    %v3656 = vadd.f32 %v2675, %v3655
    %v3657 = vpop.f32.mrb[0].mxu0
    %3658 = vdwg.mxu0
    %v3659 = vsel %vm1055, %v3621, -inf
    %3660 = vmax.xlane.f32.xlu0 %v3659
    %v3661 = vpop.xlane.xlu0 %3660
    %v3662 = vsel %vm1055, %v3626, -inf
    %3663 = vmax.xlane.f32.xlu0 %v3662
    %v3664 = vpop.xlane.xlu0 %3663
    %v3665 = vsel %vm1055, %v3631, -inf
    %3666 = vmax.xlane.f32.xlu0 %v3665
    %v3667 = vpop.xlane.xlu0 %3666
    %v3668 = vsel %vm1055, %v3636, -inf
    %3669 = vmax.xlane.f32.xlu0 %v3668
    %v3670 = vpop.xlane.xlu0 %3669
    %v3671 = vsel %vm1055, %v3641, -inf
    %3672 = vmax.xlane.f32.xlu0 %v3671
    %v3673 = vpop.xlane.xlu0 %3672
    %v3674 = vsel %vm1055, %v3646, -inf
    %3675 = vmax.xlane.f32.xlu0 %v3674
    %v3676 = vpop.xlane.xlu0 %3675
    %v3677 = vsel %vm1055, %v3651, -inf
    %3678 = vmax.xlane.f32.xlu0 %v3677
    %v3679 = vpop.xlane.xlu0 %3678
    %v3680 = vsel %vm1055, %v3656, -inf
    %3681 = vmax.xlane.f32.xlu0 %v3680
    %v3682 = vpop.xlane.xlu0 %3681
    %v3683 = vsub.f32 %v3621, %v3661
    %v3684 = vsub.f32 %v3626, %v3664
    %v3685 = vsub.f32 %v3631, %v3667
    %v3686 = vsub.f32 %v3636, %v3670
    %v3687 = vsub.f32 %v3641, %v3673
    %v3688 = vsub.f32 %v3646, %v3676
    %v3689 = vsub.f32 %v3651, %v3679
    %v3690 = vsub.f32 %v3656, %v3682
    %v3691 = vmul.f32 %v3683, 1.442695
    %v3692 = vpow.pop %v3691
    %v3693 = vmul.f32 %v3684, 1.442695
    %v3694 = vpow.pop %v3693
    %v3695 = vmul.f32 %v3685, 1.442695
    %v3696 = vpow.pop %v3695
    %v3697 = vmul.f32 %v3686, 1.442695
    %v3698 = vpow.pop %v3697
    %v3699 = vmul.f32 %v3687, 1.442695
    %v3700 = vpow.pop %v3699
    %v3701 = vmul.f32 %v3688, 1.442695
    %v3702 = vpow.pop %v3701
    %v3703 = vmul.f32 %v3689, 1.442695
    %v3704 = vpow.pop %v3703
    %v3705 = vmul.f32 %v3690, 1.442695
    %v3706 = vpow.pop %v3705
    %v3707 = vsel %vm1055, %v3692, 0.0
    %3708 = vadd.xlane.f32.xlu0 %v3707
    %v3709 = vpop.xlane.xlu0 %3708
    %v3710 = vsel %vm1055, %v3694, 0.0
    %3711 = vadd.xlane.f32.xlu0 %v3710
    %v3712 = vpop.xlane.xlu0 %3711
    %v3713 = vsel %vm1055, %v3696, 0.0
    %3714 = vadd.xlane.f32.xlu0 %v3713
    %v3715 = vpop.xlane.xlu0 %3714
    %v3716 = vsel %vm1055, %v3698, 0.0
    %3717 = vadd.xlane.f32.xlu0 %v3716
    %v3718 = vpop.xlane.xlu0 %3717
    %v3719 = vsel %vm1055, %v3700, 0.0
    %3720 = vadd.xlane.f32.xlu0 %v3719
    %v3721 = vpop.xlane.xlu0 %3720
    %v3722 = vsel %vm1055, %v3702, 0.0
    %3723 = vadd.xlane.f32.xlu0 %v3722
    %v3724 = vpop.xlane.xlu0 %3723
    %v3725 = vsel %vm1055, %v3704, 0.0
    %3726 = vadd.xlane.f32.xlu0 %v3725
    %v3727 = vpop.xlane.xlu0 %3726
    %v3728 = vsel %vm1055, %v3706, 0.0
    %3729 = vadd.xlane.f32.xlu0 %v3728
    %v3730 = vpop.xlane.xlu0 %3729
    %v3731 = vrcp.pop %v3709
    %v3732 = vmul.f32 %v3692, %v3731
    %v3733 = vrcp.pop %v3712
    %v3734 = vmul.f32 %v3694, %v3733
    %v3735 = vrcp.pop %v3715
    %v3736 = vmul.f32 %v3696, %v3735
    %v3737 = vrcp.pop %v3718
    %v3738 = vmul.f32 %v3698, %v3737
    %v3739 = vrcp.pop %v3721
    %v3740 = vmul.f32 %v3700, %v3739
    %v3741 = vrcp.pop %v3724
    %v3742 = vmul.f32 %v3702, %v3741
    %v3743 = vrcp.pop %v3727
    %v3744 = vmul.f32 %v3704, %v3743
    %v3745 = vrcp.pop %v3730
    %v3746 = vmul.f32 %v3706, %v3745
    %s3747 = scalar_lea.vmem [#allocation17], 384
    %3748 = vst.msk [vmem:[%s3747] sm:$0xff] %vm1055, %v3732
    %3749 = vst.msk [vmem:[%s3747 + $0x8] sm:$0xff] %vm1055, %v3734
    %3750 = vst.msk [vmem:[%s3747 + $0x10] sm:$0xff] %vm1055, %v3736
    %3751 = vst.msk [vmem:[%s3747 + $0x18] sm:$0xff] %vm1055, %v3738
    %3752 = vst.msk [vmem:[%s3747 + $0x20] sm:$0xff] %vm1055, %v3740
    %3753 = vst.msk [vmem:[%s3747 + $0x28] sm:$0xff] %vm1055, %v3742
    %3754 = vst.msk [vmem:[%s3747 + $0x30] sm:$0xff] %vm1055, %v3744
    %3755 = vst.msk [vmem:[%s3747 + $0x38] sm:$0xff] %vm1055, %v3746
    %3756 = vrot.lane.b32.xlu0 %v847, 64
    %v3757 = vpop.permute.xlu0 %3756
    %3758 = vrot.lane.b32.xlu0 %v852, 64
    %v3759 = vpop.permute.xlu0 %3758
    %3760 = vrot.lane.b32.xlu0 %v857, 64
    %v3761 = vpop.permute.xlu0 %3760
    %3762 = vrot.lane.b32.xlu0 %v862, 64
    %v3763 = vpop.permute.xlu0 %3762
    %3764 = vrot.lane.b32.xlu0 %v867, 64
    %v3765 = vpop.permute.xlu0 %3764
    %3766 = vrot.lane.b32.xlu0 %v872, 64
    %v3767 = vpop.permute.xlu0 %3766
    %3768 = vrot.lane.b32.xlu0 %v877, 64
    %v3769 = vpop.permute.xlu0 %3768
    %3770 = vrot.lane.b32.xlu0 %v882, 64
    %v3771 = vpop.permute.xlu0 %3770
    %v3781 = vsel %vm1055, %v3732, 0
    %v3784 = vsel %vm1055, %v3734, 0
    %v3787 = vsel %vm1055, %v3736, 0
    %v3790 = vsel %vm1055, %v3738, 0
    %v3793 = vsel %vm1055, %v3740, 0
    %v3796 = vsel %vm1055, %v3742, 0
    %v3799 = vsel %vm1055, %v3744, 0
    %v3802 = vsel %vm1055, %v3746, 0
    %3804 = vmatprep.subr.mxu0 0.0
    %3805 = vmatpush1.msra.mxu0 %v3757
    %3806 = vmatprep.subr.mxu0 0.0
    %3807 = vmatpush1.msra.mxu0 %v3759
    %3808 = vmatprep.subr.mxu0 0.0
    %3809 = vmatpush1.msra.mxu0 %v3761
    %3810 = vmatprep.subr.mxu0 0.0
    %3811 = vmatpush1.msra.mxu0 %v3763
    %3812 = vmatprep.subr.mxu0 0.0
    %3813 = vmatpush1.msra.mxu0 %v3765
    %3814 = vmatprep.subr.mxu0 0.0
    %3815 = vmatpush1.msra.mxu0 %v3767
    %3816 = vmatprep.subr.mxu0 0.0
    %3817 = vmatpush1.msra.mxu0 %v3769
    %3818 = vmatprep.subr.mxu0 0.0
    %3819 = vmatpush1.msra.mxu0 %v3771
    %3820 = vmatprep.subr.mxu0 0.0
    %3821 = vmatpush1.msra.mxu0 0.0
    %3822 = vmatprep.subr.mxu0 0.0
    %3823 = vmatpush1.msra.mxu0 0.0
    %3824 = vmatprep.subr.mxu0 0.0
    %3825 = vmatpush1.msra.mxu0 0.0
    %3826 = vmatprep.subr.mxu0 0.0
    %3827 = vmatpush1.msra.mxu0 0.0
    %3828 = vmatprep.subr.mxu0 0.0
    %3829 = vmatpush1.msra.mxu0 0.0
    %3830 = vmatprep.subr.mxu0 0.0
    %3831 = vmatpush1.msra.mxu0 0.0
    %3832 = vmatprep.subr.mxu0 0.0
    %3833 = vmatpush1.msra.mxu0 0.0
    %3834 = vmatprep.subr.mxu0 0.0
    %3835 = vmatpush1.msra.mxu0 0.0
    %3836 = vmatprep.subr.mxu0 0.0
    %3837 = vmatpush1.msra.mxu0 0.0
    %3838 = vmatprep.subr.mxu0 0.0
    %3839 = vmatpush1.msra.mxu0 0.0
    %3840 = vmatprep.subr.mxu0 0.0
    %3841 = vmatpush1.msra.mxu0 0.0
    %3842 = vmatprep.subr.mxu0 0.0
    %3843 = vmatpush1.msra.mxu0 0.0
    %3844 = vmatprep.subr.mxu0 0.0
    %3845 = vmatpush1.msra.mxu0 0.0
    %3846 = vmatprep.subr.mxu0 0.0
    %3847 = vmatpush1.msra.mxu0 0.0
    %3848 = vmatprep.subr.mxu0 0.0
    %3849 = vmatpush1.msra.mxu0 0.0
    %3850 = vmatprep.subr.mxu0 0.0
    %3851 = vmatpush1.msra.mxu0 0.0
    %3852 = vmatprep.subr.mxu0 0.0
    %3853 = vmatpush1.msra.mxu0 0.0
    %3854 = vmatprep.subr.mxu0 0.0
    %3855 = vmatpush1.msra.mxu0 0.0
    %3856 = vmatprep.subr.mxu0 0.0
    %3857 = vmatpush1.msra.mxu0 0.0
    %3858 = vmatprep.subr.mxu0 0.0
    %3859 = vmatpush1.msra.mxu0 0.0
    %3860 = vmatprep.subr.mxu0 0.0
    %3861 = vmatpush1.msra.mxu0 0.0
    %3862 = vmatprep.subr.mxu0 0.0
    %3863 = vmatpush1.msra.mxu0 0.0
    %3864 = vmatprep.subr.mxu0 0.0
    %3865 = vmatpush1.msra.mxu0 0.0
    %3866 = vmatprep.subr.mxu0 0.0
    %3867 = vmatpush1.msra.mxu0 0.0
    %3868 = vmatprep.mubr.f32.mxu0 0.0
    %3869 = vmatmul.mubr.f32.gmra.mrb[0].mxu0 %v3781
    %v3870 = vpop.f32.mrb[0].mxu0
    %v3871 = vadd.f32 0.0, %v3870
    %v3872 = vpop.f32.mrb[0].mxu0
    %3873 = vmatprep.mubr.f32.mxu0 0.0
    %3874 = vmatmul.mubr.f32.gmra.mrb[0].mxu0 %v3784
    %v3875 = vpop.f32.mrb[0].mxu0
    %v3876 = vadd.f32 0.0, %v3875
    %v3877 = vpop.f32.mrb[0].mxu0
    %3878 = vmatprep.mubr.f32.mxu0 0.0
    %3879 = vmatmul.mubr.f32.gmra.mrb[0].mxu0 %v3787
    %v3880 = vpop.f32.mrb[0].mxu0
    %v3881 = vadd.f32 0.0, %v3880
    %v3882 = vpop.f32.mrb[0].mxu0
    %3883 = vmatprep.mubr.f32.mxu0 0.0
    %3884 = vmatmul.mubr.f32.gmra.mrb[0].mxu0 %v3790
    %v3885 = vpop.f32.mrb[0].mxu0
    %v3886 = vadd.f32 0.0, %v3885
    %v3887 = vpop.f32.mrb[0].mxu0
    %3888 = vmatprep.mubr.f32.mxu0 0.0
    %3889 = vmatmul.mubr.f32.gmra.mrb[0].mxu0 %v3793
    %v3890 = vpop.f32.mrb[0].mxu0
    %v3891 = vadd.f32 0.0, %v3890
    %v3892 = vpop.f32.mrb[0].mxu0
    %3893 = vmatprep.mubr.f32.mxu0 0.0
    %3894 = vmatmul.mubr.f32.gmra.mrb[0].mxu0 %v3796
    %v3895 = vpop.f32.mrb[0].mxu0
    %v3896 = vadd.f32 0.0, %v3895
    %v3897 = vpop.f32.mrb[0].mxu0
    %3898 = vmatprep.mubr.f32.mxu0 0.0
    %3899 = vmatmul.mubr.f32.gmra.mrb[0].mxu0 %v3799
    %v3900 = vpop.f32.mrb[0].mxu0
    %v3901 = vadd.f32 0.0, %v3900
    %v3902 = vpop.f32.mrb[0].mxu0
    %3903 = vmatprep.mubr.f32.mxu0 0.0
    %3904 = vmatmul.mubr.f32.gmra.mrb[0].mxu0 %v3802
    %v3905 = vpop.f32.mrb[0].mxu0
    %v3906 = vadd.f32 0.0, %v3905
    %v3907 = vpop.f32.mrb[0].mxu0
    %3908 = vdwg.mxu0
    %3909 = vrot.lane.b32.xlu0 %v2676, 32
    %v3910 = vpop.permute.xlu0 %3909
    %3911 = vrot.lane.b32.xlu0 %v2677, 32
    %v3912 = vpop.permute.xlu0 %3911
    %3913 = vrot.lane.b32.xlu0 %v2678, 32
    %v3914 = vpop.permute.xlu0 %3913
    %3915 = vrot.lane.b32.xlu0 %v2679, 32
    %v3916 = vpop.permute.xlu0 %3915
    %3917 = vrot.lane.b32.xlu0 %v2680, 32
    %v3918 = vpop.permute.xlu0 %3917
    %3919 = vrot.lane.b32.xlu0 %v2681, 32
    %v3920 = vpop.permute.xlu0 %3919
    %3921 = vrot.lane.b32.xlu0 %v2682, 32
    %v3922 = vpop.permute.xlu0 %3921
    %3923 = vrot.lane.b32.xlu0 %v2683, 32
    %v3924 = vpop.permute.xlu0 %3923
    %3925 = vrot.lane.b32.xlu0 %v686, 32
    %v3926 = vpop.permute.xlu0 %3925
    %3927 = vrot.lane.b32.xlu0 %v691, 32
    %v3928 = vpop.permute.xlu0 %3927
    %3929 = vrot.lane.b32.xlu0 %v696, 32
    %v3930 = vpop.permute.xlu0 %3929
    %3931 = vrot.lane.b32.xlu0 %v701, 32
    %v3932 = vpop.permute.xlu0 %3931
    %3933 = vrot.lane.b32.xlu0 %v706, 32
    %v3934 = vpop.permute.xlu0 %3933
    %3935 = vrot.lane.b32.xlu0 %v711, 32
    %v3936 = vpop.permute.xlu0 %3935
    %3937 = vrot.lane.b32.xlu0 %v716, 32
    %v3938 = vpop.permute.xlu0 %3937
    %3939 = vrot.lane.b32.xlu0 %v721, 32
    %v3940 = vpop.permute.xlu0 %3939
    %v3941 = vsel %vm901, %v3910, 0
    %v3943 = vsel %vm901, %v3912, 0
    %v3945 = vsel %vm901, %v3914, 0
    %v3947 = vsel %vm901, %v3916, 0
    %v3949 = vsel %vm901, %v3918, 0
    %v3951 = vsel %vm901, %v3920, 0
    %v3953 = vsel %vm901, %v3922, 0
    %v3955 = vsel %vm901, %v3924, 0
    %v3957 = vsel %vm901, %v3926, 0
    %v3959 = vsel %vm901, %v3928, 0
    %v3961 = vsel %vm901, %v3930, 0
    %v3963 = vsel %vm901, %v3932, 0
    %v3965 = vsel %vm901, %v3934, 0
    %v3967 = vsel %vm901, %v3936, 0
    %v3969 = vsel %vm901, %v3938, 0
    %v3971 = vsel %vm901, %v3940, 0
    %3973 = vmatprep.subr.mxu0 0.0
    %3974 = vmatpush1.xpose.msra.mxu0 %v3957
    %3975 = vmatprep.subr.mxu0 0.0
    %3976 = vmatpush1.xpose.msra.mxu0 %v3959
    %3977 = vmatprep.subr.mxu0 0.0
    %3978 = vmatpush1.xpose.msra.mxu0 %v3961
    %3979 = vmatprep.subr.mxu0 0.0
    %3980 = vmatpush1.xpose.msra.mxu0 %v3963
    %3981 = vmatprep.subr.mxu0 0.0
    %3982 = vmatpush1.xpose.msra.mxu0 %v3965
    %3983 = vmatprep.subr.mxu0 0.0
    %3984 = vmatpush1.xpose.msra.mxu0 %v3967
    %3985 = vmatprep.subr.mxu0 0.0
    %3986 = vmatpush1.xpose.msra.mxu0 %v3969
    %3987 = vmatprep.subr.mxu0 0.0
    %3988 = vmatpush1.xpose.msra.mxu0 %v3971
    %3989 = vmatprep.subr.mxu0 0.0
    %3990 = vmatpush1.xpose.msra.mxu0 0.0
    %3991 = vmatprep.subr.mxu0 0.0
    %3992 = vmatpush1.xpose.msra.mxu0 0.0
    %3993 = vmatprep.subr.mxu0 0.0
    %3994 = vmatpush1.xpose.msra.mxu0 0.0
    %3995 = vmatprep.subr.mxu0 0.0
    %3996 = vmatpush1.xpose.msra.mxu0 0.0
    %3997 = vmatprep.subr.mxu0 0.0
    %3998 = vmatpush1.xpose.msra.mxu0 0.0
    %3999 = vmatprep.subr.mxu0 0.0
    %4000 = vmatpush1.xpose.msra.mxu0 0.0
    %4001 = vmatprep.subr.mxu0 0.0
    %4002 = vmatpush1.xpose.msra.mxu0 0.0
    %4003 = vmatprep.subr.mxu0 0.0
    %4004 = vmatpush1.xpose.msra.mxu0 0.0
    %4005 = vmatprep.subr.mxu0 0.0
    %4006 = vmatpush1.xpose.msra.mxu0 0.0
    %4007 = vmatprep.subr.mxu0 0.0
    %4008 = vmatpush1.xpose.msra.mxu0 0.0
    %4009 = vmatprep.subr.mxu0 0.0
    %4010 = vmatpush1.xpose.msra.mxu0 0.0
    %4011 = vmatprep.subr.mxu0 0.0
    %4012 = vmatpush1.xpose.msra.mxu0 0.0
    %4013 = vmatprep.subr.mxu0 0.0
    %4014 = vmatpush1.xpose.msra.mxu0 0.0
    %4015 = vmatprep.subr.mxu0 0.0
    %4016 = vmatpush1.xpose.msra.mxu0 0.0
    %4017 = vmatprep.subr.mxu0 0.0
    %4018 = vmatpush1.xpose.msra.mxu0 0.0
    %4019 = vmatprep.subr.mxu0 0.0
    %4020 = vmatpush1.xpose.msra.mxu0 0.0
    %4021 = vmatprep.subr.mxu0 0.0
    %4022 = vmatpush1.xpose.msra.mxu0 0.0
    %4023 = vmatprep.subr.mxu0 0.0
    %4024 = vmatpush1.xpose.msra.mxu0 0.0
    %4025 = vmatprep.subr.mxu0 0.0
    %4026 = vmatpush1.xpose.msra.mxu0 0.0
    %4027 = vmatprep.subr.mxu0 0.0
    %4028 = vmatpush1.xpose.msra.mxu0 0.0
    %4029 = vmatprep.subr.mxu0 0.0
    %4030 = vmatpush1.xpose.msra.mxu0 0.0
    %4031 = vmatprep.subr.mxu0 0.0
    %4032 = vmatpush1.xpose.msra.mxu0 0.0
    %4033 = vmatprep.subr.mxu0 0.0
    %4034 = vmatpush1.xpose.msra.mxu0 0.0
    %4035 = vmatprep.subr.mxu0 0.0
    %4036 = vmatpush1.xpose.msra.mxu0 0.0
    %4037 = vmatprep.mubr.f32.mxu0 0.0
    %4038 = vmatmul.mubr.f32.gmra.mrb[0].mxu0 %v3941
    %v4039 = vpop.f32.mrb[0].mxu0
    %v4040 = vadd.f32 %v2668, %v4039
    %v4041 = vpop.f32.mrb[0].mxu0
    %4042 = vmatprep.mubr.f32.mxu0 0.0
    %4043 = vmatmul.mubr.f32.gmra.mrb[0].mxu0 %v3943
    %v4044 = vpop.f32.mrb[0].mxu0
    %v4045 = vadd.f32 %v2669, %v4044
    %v4046 = vpop.f32.mrb[0].mxu0
    %4047 = vmatprep.mubr.f32.mxu0 0.0
    %4048 = vmatmul.mubr.f32.gmra.mrb[0].mxu0 %v3945
    %v4049 = vpop.f32.mrb[0].mxu0
    %v4050 = vadd.f32 %v2670, %v4049
    %v4051 = vpop.f32.mrb[0].mxu0
    %4052 = vmatprep.mubr.f32.mxu0 0.0
    %4053 = vmatmul.mubr.f32.gmra.mrb[0].mxu0 %v3947
    %v4054 = vpop.f32.mrb[0].mxu0
    %v4055 = vadd.f32 %v2671, %v4054
    %v4056 = vpop.f32.mrb[0].mxu0
    %4057 = vmatprep.mubr.f32.mxu0 0.0
    %4058 = vmatmul.mubr.f32.gmra.mrb[0].mxu0 %v3949
    %v4059 = vpop.f32.mrb[0].mxu0
    %v4060 = vadd.f32 %v2672, %v4059
    %v4061 = vpop.f32.mrb[0].mxu0
    %4062 = vmatprep.mubr.f32.mxu0 0.0
    %4063 = vmatmul.mubr.f32.gmra.mrb[0].mxu0 %v3951
    %v4064 = vpop.f32.mrb[0].mxu0
    %v4065 = vadd.f32 %v2673, %v4064
    %v4066 = vpop.f32.mrb[0].mxu0
    %4067 = vmatprep.mubr.f32.mxu0 0.0
    %4068 = vmatmul.mubr.f32.gmra.mrb[0].mxu0 %v3953
    %v4069 = vpop.f32.mrb[0].mxu0
    %v4070 = vadd.f32 %v2674, %v4069
    %v4071 = vpop.f32.mrb[0].mxu0
    %4072 = vmatprep.mubr.f32.mxu0 0.0
    %4073 = vmatmul.mubr.f32.gmra.mrb[0].mxu0 %v3955
    %v4074 = vpop.f32.mrb[0].mxu0
    %v4075 = vadd.f32 %v2675, %v4074
    %v4076 = vpop.f32.mrb[0].mxu0
    %4077 = vdwg.mxu0
    %v4078 = vsel %vm1055, %v4040, -inf
    %4079 = vmax.xlane.f32.xlu0 %v4078
    %v4080 = vpop.xlane.xlu0 %4079
    %v4081 = vsel %vm1055, %v4045, -inf
    %4082 = vmax.xlane.f32.xlu0 %v4081
    %v4083 = vpop.xlane.xlu0 %4082
    %v4084 = vsel %vm1055, %v4050, -inf
    %4085 = vmax.xlane.f32.xlu0 %v4084
    %v4086 = vpop.xlane.xlu0 %4085
    %v4087 = vsel %vm1055, %v4055, -inf
    %4088 = vmax.xlane.f32.xlu0 %v4087
    %v4089 = vpop.xlane.xlu0 %4088
    %v4090 = vsel %vm1055, %v4060, -inf
    %4091 = vmax.xlane.f32.xlu0 %v4090
    %v4092 = vpop.xlane.xlu0 %4091
    %v4093 = vsel %vm1055, %v4065, -inf
    %4094 = vmax.xlane.f32.xlu0 %v4093
    %v4095 = vpop.xlane.xlu0 %4094
    %v4096 = vsel %vm1055, %v4070, -inf
    %4097 = vmax.xlane.f32.xlu0 %v4096
    %v4098 = vpop.xlane.xlu0 %4097
    %v4099 = vsel %vm1055, %v4075, -inf
    %4100 = vmax.xlane.f32.xlu0 %v4099
    %v4101 = vpop.xlane.xlu0 %4100
    %v4102 = vsub.f32 %v4040, %v4080
    %v4103 = vsub.f32 %v4045, %v4083
    %v4104 = vsub.f32 %v4050, %v4086
    %v4105 = vsub.f32 %v4055, %v4089
    %v4106 = vsub.f32 %v4060, %v4092
    %v4107 = vsub.f32 %v4065, %v4095
    %v4108 = vsub.f32 %v4070, %v4098
    %v4109 = vsub.f32 %v4075, %v4101
    %v4110 = vmul.f32 %v4102, 1.442695
    %v4111 = vpow.pop %v4110
    %v4112 = vmul.f32 %v4103, 1.442695
    %v4113 = vpow.pop %v4112
    %v4114 = vmul.f32 %v4104, 1.442695
    %v4115 = vpow.pop %v4114
    %v4116 = vmul.f32 %v4105, 1.442695
    %v4117 = vpow.pop %v4116
    %v4118 = vmul.f32 %v4106, 1.442695
    %v4119 = vpow.pop %v4118
    %v4120 = vmul.f32 %v4107, 1.442695
    %v4121 = vpow.pop %v4120
    %v4122 = vmul.f32 %v4108, 1.442695
    %v4123 = vpow.pop %v4122
    %v4124 = vmul.f32 %v4109, 1.442695
    %v4125 = vpow.pop %v4124
    %v4126 = vsel %vm1055, %v4111, 0.0
    %4127 = vadd.xlane.f32.xlu0 %v4126
    %v4128 = vpop.xlane.xlu0 %4127
    %v4129 = vsel %vm1055, %v4113, 0.0
    %4130 = vadd.xlane.f32.xlu0 %v4129
    %v4131 = vpop.xlane.xlu0 %4130
    %v4132 = vsel %vm1055, %v4115, 0.0
    %4133 = vadd.xlane.f32.xlu0 %v4132
    %v4134 = vpop.xlane.xlu0 %4133
    %v4135 = vsel %vm1055, %v4117, 0.0
    %4136 = vadd.xlane.f32.xlu0 %v4135
    %v4137 = vpop.xlane.xlu0 %4136
    %v4138 = vsel %vm1055, %v4119, 0.0
    %4139 = vadd.xlane.f32.xlu0 %v4138
    %v4140 = vpop.xlane.xlu0 %4139
    %v4141 = vsel %vm1055, %v4121, 0.0
    %4142 = vadd.xlane.f32.xlu0 %v4141
    %v4143 = vpop.xlane.xlu0 %4142
    %v4144 = vsel %vm1055, %v4123, 0.0
    %4145 = vadd.xlane.f32.xlu0 %v4144
    %v4146 = vpop.xlane.xlu0 %4145
    %v4147 = vsel %vm1055, %v4125, 0.0
    %4148 = vadd.xlane.f32.xlu0 %v4147
    %v4149 = vpop.xlane.xlu0 %4148
    %v4150 = vrcp.pop %v4128
    %v4151 = vmul.f32 %v4111, %v4150
    %v4152 = vrcp.pop %v4131
    %v4153 = vmul.f32 %v4113, %v4152
    %v4154 = vrcp.pop %v4134
    %v4155 = vmul.f32 %v4115, %v4154
    %v4156 = vrcp.pop %v4137
    %v4157 = vmul.f32 %v4117, %v4156
    %v4158 = vrcp.pop %v4140
    %v4159 = vmul.f32 %v4119, %v4158
    %v4160 = vrcp.pop %v4143
    %v4161 = vmul.f32 %v4121, %v4160
    %v4162 = vrcp.pop %v4146
    %v4163 = vmul.f32 %v4123, %v4162
    %v4164 = vrcp.pop %v4149
    %v4165 = vmul.f32 %v4125, %v4164
    %s4166 = scalar_lea.vmem [#allocation17], 448
    %4167 = vst.msk [vmem:[%s4166] sm:$0xff] %vm1055, %v4151
    %4168 = vst.msk [vmem:[%s4166 + $0x8] sm:$0xff] %vm1055, %v4153
    %4169 = vst.msk [vmem:[%s4166 + $0x10] sm:$0xff] %vm1055, %v4155
    %4170 = vst.msk [vmem:[%s4166 + $0x18] sm:$0xff] %vm1055, %v4157
    %4171 = vst.msk [vmem:[%s4166 + $0x20] sm:$0xff] %vm1055, %v4159
    %4172 = vst.msk [vmem:[%s4166 + $0x28] sm:$0xff] %vm1055, %v4161
    %4173 = vst.msk [vmem:[%s4166 + $0x30] sm:$0xff] %vm1055, %v4163
    %4174 = vst.msk [vmem:[%s4166 + $0x38] sm:$0xff] %vm1055, %v4165
    %4175 = vrot.lane.b32.xlu0 %v847, 32
    %v4176 = vpop.permute.xlu0 %4175
    %4177 = vrot.lane.b32.xlu0 %v852, 32
    %v4178 = vpop.permute.xlu0 %4177
    %4179 = vrot.lane.b32.xlu0 %v857, 32
    %v4180 = vpop.permute.xlu0 %4179
    %4181 = vrot.lane.b32.xlu0 %v862, 32
    %v4182 = vpop.permute.xlu0 %4181
    %4183 = vrot.lane.b32.xlu0 %v867, 32
    %v4184 = vpop.permute.xlu0 %4183
    %4185 = vrot.lane.b32.xlu0 %v872, 32
    %v4186 = vpop.permute.xlu0 %4185
    %4187 = vrot.lane.b32.xlu0 %v877, 32
    %v4188 = vpop.permute.xlu0 %4187
    %4189 = vrot.lane.b32.xlu0 %v882, 32
    %v4190 = vpop.permute.xlu0 %4189
    %v4200 = vsel %vm1055, %v4151, 0
    %v4203 = vsel %vm1055, %v4153, 0
    %v4206 = vsel %vm1055, %v4155, 0
    %v4209 = vsel %vm1055, %v4157, 0
    %v4212 = vsel %vm1055, %v4159, 0
    %v4215 = vsel %vm1055, %v4161, 0
    %v4218 = vsel %vm1055, %v4163, 0
    %v4221 = vsel %vm1055, %v4165, 0
    %4223 = vmatprep.subr.mxu0 0.0
    %4224 = vmatpush1.msra.mxu0 %v4176
    %4225 = vmatprep.subr.mxu0 0.0
    %4226 = vmatpush1.msra.mxu0 %v4178
    %4227 = vmatprep.subr.mxu0 0.0
    %4228 = vmatpush1.msra.mxu0 %v4180
    %4229 = vmatprep.subr.mxu0 0.0
    %4230 = vmatpush1.msra.mxu0 %v4182
    %4231 = vmatprep.subr.mxu0 0.0
    %4232 = vmatpush1.msra.mxu0 %v4184
    %4233 = vmatprep.subr.mxu0 0.0
    %4234 = vmatpush1.msra.mxu0 %v4186
    %4235 = vmatprep.subr.mxu0 0.0
    %4236 = vmatpush1.msra.mxu0 %v4188
    %4237 = vmatprep.subr.mxu0 0.0
    %4238 = vmatpush1.msra.mxu0 %v4190
    %4239 = vmatprep.subr.mxu0 0.0
    %4240 = vmatpush1.msra.mxu0 0.0
    %4241 = vmatprep.subr.mxu0 0.0
    %4242 = vmatpush1.msra.mxu0 0.0
    %4243 = vmatprep.subr.mxu0 0.0
    %4244 = vmatpush1.msra.mxu0 0.0
    %4245 = vmatprep.subr.mxu0 0.0
    %4246 = vmatpush1.msra.mxu0 0.0
    %4247 = vmatprep.subr.mxu0 0.0
    %4248 = vmatpush1.msra.mxu0 0.0
    %4249 = vmatprep.subr.mxu0 0.0
    %4250 = vmatpush1.msra.mxu0 0.0
    %4251 = vmatprep.subr.mxu0 0.0
    %4252 = vmatpush1.msra.mxu0 0.0
    %4253 = vmatprep.subr.mxu0 0.0
    %4254 = vmatpush1.msra.mxu0 0.0
    %4255 = vmatprep.subr.mxu0 0.0
    %4256 = vmatpush1.msra.mxu0 0.0
    %4257 = vmatprep.subr.mxu0 0.0
    %4258 = vmatpush1.msra.mxu0 0.0
    %4259 = vmatprep.subr.mxu0 0.0
    %4260 = vmatpush1.msra.mxu0 0.0
    %4261 = vmatprep.subr.mxu0 0.0
    %4262 = vmatpush1.msra.mxu0 0.0
    %4263 = vmatprep.subr.mxu0 0.0
    %4264 = vmatpush1.msra.mxu0 0.0
    %4265 = vmatprep.subr.mxu0 0.0
    %4266 = vmatpush1.msra.mxu0 0.0
    %4267 = vmatprep.subr.mxu0 0.0
    %4268 = vmatpush1.msra.mxu0 0.0
    %4269 = vmatprep.subr.mxu0 0.0
    %4270 = vmatpush1.msra.mxu0 0.0
    %4271 = vmatprep.subr.mxu0 0.0
    %4272 = vmatpush1.msra.mxu0 0.0
    %4273 = vmatprep.subr.mxu0 0.0
    %4274 = vmatpush1.msra.mxu0 0.0
    %4275 = vmatprep.subr.mxu0 0.0
    %4276 = vmatpush1.msra.mxu0 0.0
    %4277 = vmatprep.subr.mxu0 0.0
    %4278 = vmatpush1.msra.mxu0 0.0
    %4279 = vmatprep.subr.mxu0 0.0
    %4280 = vmatpush1.msra.mxu0 0.0
    %4281 = vmatprep.subr.mxu0 0.0
    %4282 = vmatpush1.msra.mxu0 0.0
    %4283 = vmatprep.subr.mxu0 0.0
    %4284 = vmatpush1.msra.mxu0 0.0
    %4285 = vmatprep.subr.mxu0 0.0
    %4286 = vmatpush1.msra.mxu0 0.0
    %4287 = vmatprep.mubr.f32.mxu0 0.0
    %4288 = vmatmul.mubr.f32.gmra.mrb[0].mxu0 %v4200
    %v4289 = vpop.f32.mrb[0].mxu0
    %v4290 = vadd.f32 0.0, %v4289
    %v4291 = vpop.f32.mrb[0].mxu0
    %4292 = vmatprep.mubr.f32.mxu0 0.0
    %4293 = vmatmul.mubr.f32.gmra.mrb[0].mxu0 %v4203
    %v4294 = vpop.f32.mrb[0].mxu0
    %v4295 = vadd.f32 0.0, %v4294
    %v4296 = vpop.f32.mrb[0].mxu0
    %4297 = vmatprep.mubr.f32.mxu0 0.0
    %4298 = vmatmul.mubr.f32.gmra.mrb[0].mxu0 %v4206
    %v4299 = vpop.f32.mrb[0].mxu0
    %v4300 = vadd.f32 0.0, %v4299
    %v4301 = vpop.f32.mrb[0].mxu0
    %4302 = vmatprep.mubr.f32.mxu0 0.0
    %4303 = vmatmul.mubr.f32.gmra.mrb[0].mxu0 %v4209
    %v4304 = vpop.f32.mrb[0].mxu0
    %v4305 = vadd.f32 0.0, %v4304
    %v4306 = vpop.f32.mrb[0].mxu0
    %4307 = vmatprep.mubr.f32.mxu0 0.0
    %4308 = vmatmul.mubr.f32.gmra.mrb[0].mxu0 %v4212
    %v4309 = vpop.f32.mrb[0].mxu0
    %v4310 = vadd.f32 0.0, %v4309
    %v4311 = vpop.f32.mrb[0].mxu0
    %4312 = vmatprep.mubr.f32.mxu0 0.0
    %4313 = vmatmul.mubr.f32.gmra.mrb[0].mxu0 %v4215
    %v4314 = vpop.f32.mrb[0].mxu0
    %v4315 = vadd.f32 0.0, %v4314
    %v4316 = vpop.f32.mrb[0].mxu0
    %4317 = vmatprep.mubr.f32.mxu0 0.0
    %4318 = vmatmul.mubr.f32.gmra.mrb[0].mxu0 %v4218
    %v4319 = vpop.f32.mrb[0].mxu0
    %v4320 = vadd.f32 0.0, %v4319
    %v4321 = vpop.f32.mrb[0].mxu0
    %4322 = vmatprep.mubr.f32.mxu0 0.0
    %4323 = vmatmul.mubr.f32.gmra.mrb[0].mxu0 %v4221
    %v4324 = vpop.f32.mrb[0].mxu0
    %v4325 = vadd.f32 0.0, %v4324
    %v4326 = vpop.f32.mrb[0].mxu0
    %4327 = vdwg.mxu0
    %4336 = vrot.lane.b32.xlu0 %v3452, 32
    %v4337 = vpop.permute.xlu0 %4336
    %4338 = vrot.lane.b32.xlu0 %v3457, 32
    %v4339 = vpop.permute.xlu0 %4338
    %4340 = vrot.lane.b32.xlu0 %v3462, 32
    %v4341 = vpop.permute.xlu0 %4340
    %4342 = vrot.lane.b32.xlu0 %v3467, 32
    %v4343 = vpop.permute.xlu0 %4342
    %4344 = vrot.lane.b32.xlu0 %v3472, 32
    %v4345 = vpop.permute.xlu0 %4344
    %4346 = vrot.lane.b32.xlu0 %v3477, 32
    %v4347 = vpop.permute.xlu0 %4346
    %4348 = vrot.lane.b32.xlu0 %v3482, 32
    %v4349 = vpop.permute.xlu0 %4348
    %4350 = vrot.lane.b32.xlu0 %v3487, 32
    %v4351 = vpop.permute.xlu0 %4350
    %4368 = vrot.lane.b32.xlu0 %v3871, 64
    %v4369 = vpop.permute.xlu0 %4368
    %4370 = vrot.lane.b32.xlu0 %v3876, 64
    %v4371 = vpop.permute.xlu0 %4370
    %4372 = vrot.lane.b32.xlu0 %v3881, 64
    %v4373 = vpop.permute.xlu0 %4372
    %4374 = vrot.lane.b32.xlu0 %v3886, 64
    %v4375 = vpop.permute.xlu0 %4374
    %4376 = vrot.lane.b32.xlu0 %v3891, 64
    %v4377 = vpop.permute.xlu0 %4376
    %4378 = vrot.lane.b32.xlu0 %v3896, 64
    %v4379 = vpop.permute.xlu0 %4378
    %4380 = vrot.lane.b32.xlu0 %v3901, 64
    %v4381 = vpop.permute.xlu0 %4380
    %4382 = vrot.lane.b32.xlu0 %v3906, 64
    %v4383 = vpop.permute.xlu0 %4382
    %4400 = vrot.lane.b32.xlu0 %v4290, 96
    %v4401 = vpop.permute.xlu0 %4400
    %4402 = vrot.lane.b32.xlu0 %v4295, 96
    %v4403 = vpop.permute.xlu0 %4402
    %4404 = vrot.lane.b32.xlu0 %v4300, 96
    %v4405 = vpop.permute.xlu0 %4404
    %4406 = vrot.lane.b32.xlu0 %v4305, 96
    %v4407 = vpop.permute.xlu0 %4406
    %4408 = vrot.lane.b32.xlu0 %v4310, 96
    %v4409 = vpop.permute.xlu0 %4408
    %4410 = vrot.lane.b32.xlu0 %v4315, 96
    %v4411 = vpop.permute.xlu0 %4410
    %4412 = vrot.lane.b32.xlu0 %v4320, 96
    %v4413 = vpop.permute.xlu0 %4412
    %4414 = vrot.lane.b32.xlu0 %v4325, 96
    %v4415 = vpop.permute.xlu0 %4414
    %v4424 = vsel %vm901, %v3025, %v4337
    %v4425 = vsel %vm901, %v3030, %v4339
    %v4426 = vsel %vm901, %v3035, %v4341
    %v4427 = vsel %vm901, %v3040, %v4343
    %v4428 = vsel %vm901, %v3045, %v4345
    %v4429 = vsel %vm901, %v3050, %v4347
    %v4430 = vsel %vm901, %v3055, %v4349
    %v4431 = vsel %vm901, %v3060, %v4351
    %v4432 = vsel %vm1055, %v4424, %v4369
    %v4433 = vsel %vm1055, %v4425, %v4371
    %v4434 = vsel %vm1055, %v4426, %v4373
    %v4435 = vsel %vm1055, %v4427, %v4375
    %v4436 = vsel %vm1055, %v4428, %v4377
    %v4437 = vsel %vm1055, %v4429, %v4379
    %v4438 = vsel %vm1055, %v4430, %v4381
    %v4439 = vsel %vm1055, %v4431, %v4383
    %v4440 = vsel %vm2658, %v4432, %v4401
    %v4441 = vsel %vm2658, %v4433, %v4403
    %v4442 = vsel %vm2658, %v4434, %v4405
    %v4443 = vsel %vm2658, %v4435, %v4407
    %v4444 = vsel %vm2658, %v4436, %v4409
    %v4445 = vsel %vm2658, %v4437, %v4411
    %v4446 = vsel %vm2658, %v4438, %v4413
    %v4447 = vsel %vm2658, %v4439, %v4415
    %v4448 = vld [vmem:[#allocation11] sm:$0xff]
    %v4449 = vld [vmem:[#allocation11 + $0x8] sm:$0xff]
    %v4450 = vld [vmem:[#allocation11 + $0x10] sm:$0xff]
    %v4451 = vld [vmem:[#allocation11 + $0x18] sm:$0xff]
    %v4452 = vld [vmem:[#allocation11 + $0x20] sm:$0xff]
    %v4453 = vld [vmem:[#allocation11 + $0x28] sm:$0xff]
    %v4454 = vld [vmem:[#allocation11 + $0x30] sm:$0xff]
    %v4455 = vld [vmem:[#allocation11 + $0x38] sm:$0xff]
    %v4456 = vld [vmem:[#allocation11 + $0x40] sm:$0xff]
    %v4457 = vld [vmem:[#allocation11 + $0x48] sm:$0xff]
    %v4458 = vld [vmem:[#allocation11 + $0x50] sm:$0xff]
    %v4459 = vld [vmem:[#allocation11 + $0x58] sm:$0xff]
    %v4460 = vld [vmem:[#allocation11 + $0x60] sm:$0xff]
    %v4461 = vld [vmem:[#allocation11 + $0x68] sm:$0xff]
    %v4462 = vld [vmem:[#allocation11 + $0x70] sm:$0xff]
    %v4463 = vld [vmem:[#allocation11 + $0x78] sm:$0xff]
    %v4464 = vld [vmem:[%s6] sm:$0x1]
    %v4466 = vlaneseq
    %v4467 = vshrl.u32 %v4466, 7
    %v4468 = vsub.s32 0, %v4467
    %v4469 = vrot.slane %v4464, %v4468
    %4471 = vmatprep.subr.mxu0 0.0
    %4472 = vmatpush1.msra.mxu0 %v4448
    %4473 = vmatprep.subr.mxu0 0.0
    %4474 = vmatpush1.msra.mxu0 %v4449
    %4475 = vmatprep.subr.mxu0 0.0
    %4476 = vmatpush1.msra.mxu0 %v4450
    %4477 = vmatprep.subr.mxu0 0.0
    %4478 = vmatpush1.msra.mxu0 %v4451
    %4479 = vmatprep.subr.mxu0 0.0
    %4480 = vmatpush1.msra.mxu0 %v4452
    %4481 = vmatprep.subr.mxu0 0.0
    %4482 = vmatpush1.msra.mxu0 %v4453
    %4483 = vmatprep.subr.mxu0 0.0
    %4484 = vmatpush1.msra.mxu0 %v4454
    %4485 = vmatprep.subr.mxu0 0.0
    %4486 = vmatpush1.msra.mxu0 %v4455
    %4487 = vmatprep.subr.mxu0 0.0
    %4488 = vmatpush1.msra.mxu0 %v4456
    %4489 = vmatprep.subr.mxu0 0.0
    %4490 = vmatpush1.msra.mxu0 %v4457
    %4491 = vmatprep.subr.mxu0 0.0
    %4492 = vmatpush1.msra.mxu0 %v4458
    %4493 = vmatprep.subr.mxu0 0.0
    %4494 = vmatpush1.msra.mxu0 %v4459
    %4495 = vmatprep.subr.mxu0 0.0
    %4496 = vmatpush1.msra.mxu0 %v4460
    %4497 = vmatprep.subr.mxu0 0.0
    %4498 = vmatpush1.msra.mxu0 %v4461
    %4499 = vmatprep.subr.mxu0 0.0
    %4500 = vmatpush1.msra.mxu0 %v4462
    %4501 = vmatprep.subr.mxu0 0.0
    %4502 = vmatpush1.msra.mxu0 %v4463
    %4503 = vmatprep.subr.mxu0 0.0
    %4504 = vmatpush1.msra.mxu0 0.0
    %4505 = vmatprep.subr.mxu0 0.0
    %4506 = vmatpush1.msra.mxu0 0.0
    %4507 = vmatprep.subr.mxu0 0.0
    %4508 = vmatpush1.msra.mxu0 0.0
    %4509 = vmatprep.subr.mxu0 0.0
    %4510 = vmatpush1.msra.mxu0 0.0
    %4511 = vmatprep.subr.mxu0 0.0
    %4512 = vmatpush1.msra.mxu0 0.0
    %4513 = vmatprep.subr.mxu0 0.0
    %4514 = vmatpush1.msra.mxu0 0.0
    %4515 = vmatprep.subr.mxu0 0.0
    %4516 = vmatpush1.msra.mxu0 0.0
    %4517 = vmatprep.subr.mxu0 0.0
    %4518 = vmatpush1.msra.mxu0 0.0
    %4519 = vmatprep.subr.mxu0 0.0
    %4520 = vmatpush1.msra.mxu0 0.0
    %4521 = vmatprep.subr.mxu0 0.0
    %4522 = vmatpush1.msra.mxu0 0.0
    %4523 = vmatprep.subr.mxu0 0.0
    %4524 = vmatpush1.msra.mxu0 0.0
    %4525 = vmatprep.subr.mxu0 0.0
    %4526 = vmatpush1.msra.mxu0 0.0
    %4527 = vmatprep.subr.mxu0 0.0
    %4528 = vmatpush1.msra.mxu0 0.0
    %4529 = vmatprep.subr.mxu0 0.0
    %4530 = vmatpush1.msra.mxu0 0.0
    %4531 = vmatprep.subr.mxu0 0.0
    %4532 = vmatpush1.msra.mxu0 0.0
    %4533 = vmatprep.subr.mxu0 0.0
    %4534 = vmatpush1.msra.mxu0 0.0
    %4535 = vmatprep.mubr.f32.mxu0 0.0
    %4536 = vmatmul.mubr.f32.gmra.mrb[0].mxu0 %v2659
    %v4537 = vpop.f32.mrb[0].mxu0
    %v4538 = vadd.f32 %v4469, %v4537
    %v4539 = vpop.f32.mrb[0].mxu0
    %4540 = vmatprep.mubr.f32.mxu0 0.0
    %4541 = vmatmul.mubr.f32.gmra.mrb[0].mxu0 %v2660
    %v4542 = vpop.f32.mrb[0].mxu0
    %v4543 = vadd.f32 %v4469, %v4542
    %v4544 = vpop.f32.mrb[0].mxu0
    %4545 = vmatprep.mubr.f32.mxu0 0.0
    %4546 = vmatmul.mubr.f32.gmra.mrb[0].mxu0 %v2661
    %v4547 = vpop.f32.mrb[0].mxu0
    %v4548 = vadd.f32 %v4469, %v4547
    %v4549 = vpop.f32.mrb[0].mxu0
    %4550 = vmatprep.mubr.f32.mxu0 0.0
    %4551 = vmatmul.mubr.f32.gmra.mrb[0].mxu0 %v2662
    %v4552 = vpop.f32.mrb[0].mxu0
    %v4553 = vadd.f32 %v4469, %v4552
    %v4554 = vpop.f32.mrb[0].mxu0
    %4555 = vmatprep.mubr.f32.mxu0 0.0
    %4556 = vmatmul.mubr.f32.gmra.mrb[0].mxu0 %v2663
    %v4557 = vpop.f32.mrb[0].mxu0
    %v4558 = vadd.f32 %v4469, %v4557
    %v4559 = vpop.f32.mrb[0].mxu0
    %4560 = vmatprep.mubr.f32.mxu0 0.0
    %4561 = vmatmul.mubr.f32.gmra.mrb[0].mxu0 %v2664
    %v4562 = vpop.f32.mrb[0].mxu0
    %v4563 = vadd.f32 %v4469, %v4562
    %v4564 = vpop.f32.mrb[0].mxu0
    %4565 = vmatprep.mubr.f32.mxu0 0.0
    %4566 = vmatmul.mubr.f32.gmra.mrb[0].mxu0 %v2665
    %v4567 = vpop.f32.mrb[0].mxu0
    %v4568 = vadd.f32 %v4469, %v4567
    %v4569 = vpop.f32.mrb[0].mxu0
    %4570 = vmatprep.mubr.f32.mxu0 0.0
    %4571 = vmatmul.mubr.f32.gmra.mrb[0].mxu0 %v2666
    %v4572 = vpop.f32.mrb[0].mxu0
    %v4573 = vadd.f32 %v4469, %v4572
    %v4574 = vpop.f32.mrb[0].mxu0
    %4575 = vmatprep.mubr.f32.mxu0 0.0
    %4576 = vmatmul.mubr.f32.gmra.mrb[0].mxu0 %v4440
    %v4577 = vpop.f32.mrb[0].mxu0
    %v4578 = vadd.f32 %v4469, %v4577
    %v4579 = vpop.f32.mrb[0].mxu0
    %4580 = vmatprep.mubr.f32.mxu0 0.0
    %4581 = vmatmul.mubr.f32.gmra.mrb[0].mxu0 %v4441
    %v4582 = vpop.f32.mrb[0].mxu0
    %v4583 = vadd.f32 %v4469, %v4582
    %v4584 = vpop.f32.mrb[0].mxu0
    %4585 = vmatprep.mubr.f32.mxu0 0.0
    %4586 = vmatmul.mubr.f32.gmra.mrb[0].mxu0 %v4442
    %v4587 = vpop.f32.mrb[0].mxu0
    %v4588 = vadd.f32 %v4469, %v4587
    %v4589 = vpop.f32.mrb[0].mxu0
    %4590 = vmatprep.mubr.f32.mxu0 0.0
    %4591 = vmatmul.mubr.f32.gmra.mrb[0].mxu0 %v4443
    %v4592 = vpop.f32.mrb[0].mxu0
    %v4593 = vadd.f32 %v4469, %v4592
    %v4594 = vpop.f32.mrb[0].mxu0
    %4595 = vmatprep.mubr.f32.mxu0 0.0
    %4596 = vmatmul.mubr.f32.gmra.mrb[0].mxu0 %v4444
    %v4597 = vpop.f32.mrb[0].mxu0
    %v4598 = vadd.f32 %v4469, %v4597
    %v4599 = vpop.f32.mrb[0].mxu0
    %4600 = vmatprep.mubr.f32.mxu0 0.0
    %4601 = vmatmul.mubr.f32.gmra.mrb[0].mxu0 %v4445
    %v4602 = vpop.f32.mrb[0].mxu0
    %v4603 = vadd.f32 %v4469, %v4602
    %v4604 = vpop.f32.mrb[0].mxu0
    %4605 = vmatprep.mubr.f32.mxu0 0.0
    %4606 = vmatmul.mubr.f32.gmra.mrb[0].mxu0 %v4446
    %v4607 = vpop.f32.mrb[0].mxu0
    %v4608 = vadd.f32 %v4469, %v4607
    %v4609 = vpop.f32.mrb[0].mxu0
    %4610 = vmatprep.mubr.f32.mxu0 0.0
    %4611 = vmatmul.mubr.f32.gmra.mrb[0].mxu0 %v4447
    %v4612 = vpop.f32.mrb[0].mxu0
    %v4613 = vadd.f32 %v4469, %v4612
    %v4614 = vpop.f32.mrb[0].mxu0
    %4615 = vdwg.mxu0
    %v4616 = vadd.f32 %v4538, %v163
    %v4617 = vadd.f32 %v4543, %v164
    %v4618 = vadd.f32 %v4548, %v165
    %v4619 = vadd.f32 %v4553, %v166
    %v4620 = vadd.f32 %v4558, %v167
    %v4621 = vadd.f32 %v4563, %v168
    %v4622 = vadd.f32 %v4568, %v169
    %v4623 = vadd.f32 %v4573, %v170
    %v4624 = vadd.f32 %v4578, %v171
    %v4625 = vadd.f32 %v4583, %v172
    %v4626 = vadd.f32 %v4588, %v173
    %v4627 = vadd.f32 %v4593, %v174
    %v4628 = vadd.f32 %v4598, %v175
    %v4629 = vadd.f32 %v4603, %v176
    %v4630 = vadd.f32 %v4608, %v177
    %v4631 = vadd.f32 %v4613, %v178
    %4632 = vadd.xlane.f32.xlu0 %v4616
    %v4633 = vpop.xlane.xlu0 %4632
    %4634 = vadd.xlane.f32.xlu0 %v4617
    %v4635 = vpop.xlane.xlu0 %4634
    %4636 = vadd.xlane.f32.xlu0 %v4618
    %v4637 = vpop.xlane.xlu0 %4636
    %4638 = vadd.xlane.f32.xlu0 %v4619
    %v4639 = vpop.xlane.xlu0 %4638
    %4640 = vadd.xlane.f32.xlu0 %v4620
    %v4641 = vpop.xlane.xlu0 %4640
    %4642 = vadd.xlane.f32.xlu0 %v4621
    %v4643 = vpop.xlane.xlu0 %4642
    %4644 = vadd.xlane.f32.xlu0 %v4622
    %v4645 = vpop.xlane.xlu0 %4644
    %4646 = vadd.xlane.f32.xlu0 %v4623
    %v4647 = vpop.xlane.xlu0 %4646
    %4648 = vadd.xlane.f32.xlu0 %v4624
    %v4649 = vpop.xlane.xlu0 %4648
    %4650 = vadd.xlane.f32.xlu0 %v4625
    %v4651 = vpop.xlane.xlu0 %4650
    %4652 = vadd.xlane.f32.xlu0 %v4626
    %v4653 = vpop.xlane.xlu0 %4652
    %4654 = vadd.xlane.f32.xlu0 %v4627
    %v4655 = vpop.xlane.xlu0 %4654
    %4656 = vadd.xlane.f32.xlu0 %v4628
    %v4657 = vpop.xlane.xlu0 %4656
    %4658 = vadd.xlane.f32.xlu0 %v4629
    %v4659 = vpop.xlane.xlu0 %4658
    %4660 = vadd.xlane.f32.xlu0 %v4630
    %v4661 = vpop.xlane.xlu0 %4660
    %4662 = vadd.xlane.f32.xlu0 %v4631
    %v4663 = vpop.xlane.xlu0 %4662
    %v4664 = vmul.f32 %v4633, %v211
    %v4665 = vmul.f32 %v4635, %v211
    %v4666 = vmul.f32 %v4637, %v211
    %v4667 = vmul.f32 %v4639, %v211
    %v4668 = vmul.f32 %v4641, %v211
    %v4669 = vmul.f32 %v4643, %v211
    %v4670 = vmul.f32 %v4645, %v211
    %v4671 = vmul.f32 %v4647, %v211
    %v4672 = vmul.f32 %v4649, %v211
    %v4673 = vmul.f32 %v4651, %v211
    %v4674 = vmul.f32 %v4653, %v211
    %v4675 = vmul.f32 %v4655, %v211
    %v4676 = vmul.f32 %v4657, %v211
    %v4677 = vmul.f32 %v4659, %v211
    %v4678 = vmul.f32 %v4661, %v211
    %v4679 = vmul.f32 %v4663, %v211
    %v4680 = vsub.f32 %v4616, %v4664
    %v4681 = vsub.f32 %v4617, %v4665
    %v4682 = vsub.f32 %v4618, %v4666
    %v4683 = vsub.f32 %v4619, %v4667
    %v4684 = vsub.f32 %v4620, %v4668
    %v4685 = vsub.f32 %v4621, %v4669
    %v4686 = vsub.f32 %v4622, %v4670
    %v4687 = vsub.f32 %v4623, %v4671
    %v4688 = vsub.f32 %v4624, %v4672
    %v4689 = vsub.f32 %v4625, %v4673
    %v4690 = vsub.f32 %v4626, %v4674
    %v4691 = vsub.f32 %v4627, %v4675
    %v4692 = vsub.f32 %v4628, %v4676
    %v4693 = vsub.f32 %v4629, %v4677
    %v4694 = vsub.f32 %v4630, %v4678
    %v4695 = vsub.f32 %v4631, %v4679
    %v4696 = vmul.f32 %v4680, %v4680
    %v4697 = vmul.f32 %v4681, %v4681
    %v4698 = vmul.f32 %v4682, %v4682
    %v4699 = vmul.f32 %v4683, %v4683
    %v4700 = vmul.f32 %v4684, %v4684
    %v4701 = vmul.f32 %v4685, %v4685
    %v4702 = vmul.f32 %v4686, %v4686
    %v4703 = vmul.f32 %v4687, %v4687
    %v4704 = vmul.f32 %v4688, %v4688
    %v4705 = vmul.f32 %v4689, %v4689
    %v4706 = vmul.f32 %v4690, %v4690
    %v4707 = vmul.f32 %v4691, %v4691
    %v4708 = vmul.f32 %v4692, %v4692
    %v4709 = vmul.f32 %v4693, %v4693
    %v4710 = vmul.f32 %v4694, %v4694
    %v4711 = vmul.f32 %v4695, %v4695
    %4712 = vadd.xlane.f32.xlu0 %v4696
    %v4713 = vpop.xlane.xlu0 %4712
    %4714 = vadd.xlane.f32.xlu0 %v4697
    %v4715 = vpop.xlane.xlu0 %4714
    %4716 = vadd.xlane.f32.xlu0 %v4698
    %v4717 = vpop.xlane.xlu0 %4716
    %4718 = vadd.xlane.f32.xlu0 %v4699
    %v4719 = vpop.xlane.xlu0 %4718
    %4720 = vadd.xlane.f32.xlu0 %v4700
    %v4721 = vpop.xlane.xlu0 %4720
    %4722 = vadd.xlane.f32.xlu0 %v4701
    %v4723 = vpop.xlane.xlu0 %4722
    %4724 = vadd.xlane.f32.xlu0 %v4702
    %v4725 = vpop.xlane.xlu0 %4724
    %4726 = vadd.xlane.f32.xlu0 %v4703
    %v4727 = vpop.xlane.xlu0 %4726
    %4728 = vadd.xlane.f32.xlu0 %v4704
    %v4729 = vpop.xlane.xlu0 %4728
    %4730 = vadd.xlane.f32.xlu0 %v4705
    %v4731 = vpop.xlane.xlu0 %4730
    %4732 = vadd.xlane.f32.xlu0 %v4706
    %v4733 = vpop.xlane.xlu0 %4732
    %4734 = vadd.xlane.f32.xlu0 %v4707
    %v4735 = vpop.xlane.xlu0 %4734
    %4736 = vadd.xlane.f32.xlu0 %v4708
    %v4737 = vpop.xlane.xlu0 %4736
    %4738 = vadd.xlane.f32.xlu0 %v4709
    %v4739 = vpop.xlane.xlu0 %4738
    %4740 = vadd.xlane.f32.xlu0 %v4710
    %v4741 = vpop.xlane.xlu0 %4740
    %4742 = vadd.xlane.f32.xlu0 %v4711
    %v4743 = vpop.xlane.xlu0 %4742
    %v4744 = vmul.f32 %v4713, %v211
    %v4745 = vmul.f32 %v4715, %v211
    %v4746 = vmul.f32 %v4717, %v211
    %v4747 = vmul.f32 %v4719, %v211
    %v4748 = vmul.f32 %v4721, %v211
    %v4749 = vmul.f32 %v4723, %v211
    %v4750 = vmul.f32 %v4725, %v211
    %v4751 = vmul.f32 %v4727, %v211
    %v4752 = vmul.f32 %v4729, %v211
    %v4753 = vmul.f32 %v4731, %v211
    %v4754 = vmul.f32 %v4733, %v211
    %v4755 = vmul.f32 %v4735, %v211
    %v4756 = vmul.f32 %v4737, %v211
    %v4757 = vmul.f32 %v4739, %v211
    %v4758 = vmul.f32 %v4741, %v211
    %v4759 = vmul.f32 %v4743, %v211
    %v4760 = vadd.f32 %v4744, 1e-06
    %v4761 = vadd.f32 %v4745, 1e-06
    %v4762 = vadd.f32 %v4746, 1e-06
    %v4763 = vadd.f32 %v4747, 1e-06
    %v4764 = vadd.f32 %v4748, 1e-06
    %v4765 = vadd.f32 %v4749, 1e-06
    %v4766 = vadd.f32 %v4750, 1e-06
    %v4767 = vadd.f32 %v4751, 1e-06
    %v4768 = vadd.f32 %v4752, 1e-06
    %v4769 = vadd.f32 %v4753, 1e-06
    %v4770 = vadd.f32 %v4754, 1e-06
    %v4771 = vadd.f32 %v4755, 1e-06
    %v4772 = vadd.f32 %v4756, 1e-06
    %v4773 = vadd.f32 %v4757, 1e-06
    %v4774 = vadd.f32 %v4758, 1e-06
    %v4775 = vadd.f32 %v4759, 1e-06
    %v4776 = vrsqrt.pop %v4760
    %v4777 = vrsqrt.pop %v4761
    %v4778 = vrsqrt.pop %v4762
    %v4779 = vrsqrt.pop %v4763
    %v4780 = vrsqrt.pop %v4764
    %v4781 = vrsqrt.pop %v4765
    %v4782 = vrsqrt.pop %v4766
    %v4783 = vrsqrt.pop %v4767
    %v4784 = vrsqrt.pop %v4768
    %v4785 = vrsqrt.pop %v4769
    %v4786 = vrsqrt.pop %v4770
    %v4787 = vrsqrt.pop %v4771
    %v4788 = vrsqrt.pop %v4772
    %v4789 = vrsqrt.pop %v4773
    %v4790 = vrsqrt.pop %v4774
    %v4791 = vrsqrt.pop %v4775
    %v4792 = vmul.f32 %v4680, %v4776
    %v4793 = vmul.f32 %v4681, %v4777
    %v4794 = vmul.f32 %v4682, %v4778
    %v4795 = vmul.f32 %v4683, %v4779
    %v4796 = vmul.f32 %v4684, %v4780
    %v4797 = vmul.f32 %v4685, %v4781
    %v4798 = vmul.f32 %v4686, %v4782
    %v4799 = vmul.f32 %v4687, %v4783
    %v4800 = vmul.f32 %v4688, %v4784
    %v4801 = vmul.f32 %v4689, %v4785
    %v4802 = vmul.f32 %v4690, %v4786
    %v4803 = vmul.f32 %v4691, %v4787
    %v4804 = vmul.f32 %v4692, %v4788
    %v4805 = vmul.f32 %v4693, %v4789
    %v4806 = vmul.f32 %v4694, %v4790
    %v4807 = vmul.f32 %v4695, %v4791
    %v4808 = vld [vmem:[%s13] sm:$0x1]
    %v4810 = vlaneseq
    %v4811 = vshrl.u32 %v4810, 7
    %v4812 = vsub.s32 0, %v4811
    %v4813 = vrot.slane %v4808, %v4812
    %v4815 = vmul.f32 %v4792, %v4813
    %v4816 = vmul.f32 %v4793, %v4813
    %v4817 = vmul.f32 %v4794, %v4813
    %v4818 = vmul.f32 %v4795, %v4813
    %v4819 = vmul.f32 %v4796, %v4813
    %v4820 = vmul.f32 %v4797, %v4813
    %v4821 = vmul.f32 %v4798, %v4813
    %v4822 = vmul.f32 %v4799, %v4813
    %v4823 = vmul.f32 %v4800, %v4813
    %v4824 = vmul.f32 %v4801, %v4813
    %v4825 = vmul.f32 %v4802, %v4813
    %v4826 = vmul.f32 %v4803, %v4813
    %v4827 = vmul.f32 %v4804, %v4813
    %v4828 = vmul.f32 %v4805, %v4813
    %v4829 = vmul.f32 %v4806, %v4813
    %v4830 = vmul.f32 %v4807, %v4813
    %v4831 = vld [vmem:[%s14] sm:$0x1]
    %v4833 = vlaneseq
    %v4834 = vshrl.u32 %v4833, 7
    %v4835 = vsub.s32 0, %v4834
    %v4836 = vrot.slane %v4831, %v4835
    %v4838 = vadd.f32 %v4815, %v4836
    %v4839 = vadd.f32 %v4816, %v4836
    %v4840 = vadd.f32 %v4817, %v4836
    %v4841 = vadd.f32 %v4818, %v4836
    %v4842 = vadd.f32 %v4819, %v4836
    %v4843 = vadd.f32 %v4820, %v4836
    %v4844 = vadd.f32 %v4821, %v4836
    %v4845 = vadd.f32 %v4822, %v4836
    %v4846 = vadd.f32 %v4823, %v4836
    %v4847 = vadd.f32 %v4824, %v4836
    %v4848 = vadd.f32 %v4825, %v4836
    %v4849 = vadd.f32 %v4826, %v4836
    %v4850 = vadd.f32 %v4827, %v4836
    %v4851 = vadd.f32 %v4828, %v4836
    %v4852 = vadd.f32 %v4829, %v4836
    %v4853 = vadd.f32 %v4830, %v4836
    %v4854 = vld [vmem:[#allocation13] sm:$0xff]
    %v4855 = vld [vmem:[#allocation13 + $0x8] sm:$0xff]
    %v4856 = vld [vmem:[#allocation13 + $0x10] sm:$0xff]
    %v4857 = vld [vmem:[#allocation13 + $0x18] sm:$0xff]
    %v4858 = vld [vmem:[#allocation13 + $0x20] sm:$0xff]
    %v4859 = vld [vmem:[#allocation13 + $0x28] sm:$0xff]
    %v4860 = vld [vmem:[#allocation13 + $0x30] sm:$0xff]
    %v4861 = vld [vmem:[#allocation13 + $0x38] sm:$0xff]
    %v4862 = vld [vmem:[#allocation13 + $0x40] sm:$0xff]
    %v4863 = vld [vmem:[#allocation13 + $0x48] sm:$0xff]
    %v4864 = vld [vmem:[#allocation13 + $0x50] sm:$0xff]
    %v4865 = vld [vmem:[#allocation13 + $0x58] sm:$0xff]
    %v4866 = vld [vmem:[#allocation13 + $0x60] sm:$0xff]
    %v4867 = vld [vmem:[#allocation13 + $0x68] sm:$0xff]
    %v4868 = vld [vmem:[#allocation13 + $0x70] sm:$0xff]
    %v4869 = vld [vmem:[#allocation13 + $0x78] sm:$0xff]
    %v4870 = vld [vmem:[#allocation13 + $0x80] sm:$0xff]
    %v4871 = vld [vmem:[#allocation13 + $0x88] sm:$0xff]
    %v4872 = vld [vmem:[#allocation13 + $0x90] sm:$0xff]
    %v4873 = vld [vmem:[#allocation13 + $0x98] sm:$0xff]
    %v4874 = vld [vmem:[#allocation13 + $0xa0] sm:$0xff]
    %v4875 = vld [vmem:[#allocation13 + $0xa8] sm:$0xff]
    %v4876 = vld [vmem:[#allocation13 + $0xb0] sm:$0xff]
    %v4877 = vld [vmem:[#allocation13 + $0xb8] sm:$0xff]
    %v4878 = vld [vmem:[#allocation13 + $0xc0] sm:$0xff]
    %v4879 = vld [vmem:[#allocation13 + $0xc8] sm:$0xff]
    %v4880 = vld [vmem:[#allocation13 + $0xd0] sm:$0xff]
    %v4881 = vld [vmem:[#allocation13 + $0xd8] sm:$0xff]
    %v4882 = vld [vmem:[#allocation13 + $0xe0] sm:$0xff]
    %v4883 = vld [vmem:[#allocation13 + $0xe8] sm:$0xff]
    %v4884 = vld [vmem:[#allocation13 + $0xf0] sm:$0xff]
    %v4885 = vld [vmem:[#allocation13 + $0xf8] sm:$0xff]
    %v4886 = vld [vmem:[%s10] sm:$0x3]
    %v4888 = vlaneseq
    %v4889 = vshrl.u32 %v4888, 7
    %v4890 = vsub.s32 0, %v4889
    %v4891 = vrot.slane %v4886, %v4890
    %v4892 = vlaneseq
    %v4893 = vshrl.u32 %v4892, 7
    %v4894 = vsub.s32 1, %v4893
    %v4895 = vrot.slane %v4886, %v4894
    %4898 = vmatprep.subr.mxu0 %v4855
    %4899 = vmatpush1.msra.mxu0 %v4854
    %4900 = vmatprep.subr.mxu0 %v4857
    %4901 = vmatpush1.msra.mxu0 %v4856
    %4902 = vmatprep.subr.mxu0 %v4859
    %4903 = vmatpush1.msra.mxu0 %v4858
    %4904 = vmatprep.subr.mxu0 %v4861
    %4905 = vmatpush1.msra.mxu0 %v4860
    %4906 = vmatprep.subr.mxu0 %v4863
    %4907 = vmatpush1.msra.mxu0 %v4862
    %4908 = vmatprep.subr.mxu0 %v4865
    %4909 = vmatpush1.msra.mxu0 %v4864
    %4910 = vmatprep.subr.mxu0 %v4867
    %4911 = vmatpush1.msra.mxu0 %v4866
    %4912 = vmatprep.subr.mxu0 %v4869
    %4913 = vmatpush1.msra.mxu0 %v4868
    %4914 = vmatprep.subr.mxu0 %v4871
    %4915 = vmatpush1.msra.mxu0 %v4870
    %4916 = vmatprep.subr.mxu0 %v4873
    %4917 = vmatpush1.msra.mxu0 %v4872
    %4918 = vmatprep.subr.mxu0 %v4875
    %4919 = vmatpush1.msra.mxu0 %v4874
    %4920 = vmatprep.subr.mxu0 %v4877
    %4921 = vmatpush1.msra.mxu0 %v4876
    %4922 = vmatprep.subr.mxu0 %v4879
    %4923 = vmatpush1.msra.mxu0 %v4878
    %4924 = vmatprep.subr.mxu0 %v4881
    %4925 = vmatpush1.msra.mxu0 %v4880
    %4926 = vmatprep.subr.mxu0 %v4883
    %4927 = vmatpush1.msra.mxu0 %v4882
    %4928 = vmatprep.subr.mxu0 %v4885
    %4929 = vmatpush1.msra.mxu0 %v4884
    %4930 = vmatprep.subr.mxu0 0.0
    %4931 = vmatpush1.msra.mxu0 0.0
    %4932 = vmatprep.subr.mxu0 0.0
    %4933 = vmatpush1.msra.mxu0 0.0
    %4934 = vmatprep.subr.mxu0 0.0
    %4935 = vmatpush1.msra.mxu0 0.0
    %4936 = vmatprep.subr.mxu0 0.0
    %4937 = vmatpush1.msra.mxu0 0.0
    %4938 = vmatprep.subr.mxu0 0.0
    %4939 = vmatpush1.msra.mxu0 0.0
    %4940 = vmatprep.subr.mxu0 0.0
    %4941 = vmatpush1.msra.mxu0 0.0
    %4942 = vmatprep.subr.mxu0 0.0
    %4943 = vmatpush1.msra.mxu0 0.0
    %4944 = vmatprep.subr.mxu0 0.0
    %4945 = vmatpush1.msra.mxu0 0.0
    %4946 = vmatprep.subr.mxu0 0.0
    %4947 = vmatpush1.msra.mxu0 0.0
    %4948 = vmatprep.subr.mxu0 0.0
    %4949 = vmatpush1.msra.mxu0 0.0
    %4950 = vmatprep.subr.mxu0 0.0
    %4951 = vmatpush1.msra.mxu0 0.0
    %4952 = vmatprep.subr.mxu0 0.0
    %4953 = vmatpush1.msra.mxu0 0.0
    %4954 = vmatprep.subr.mxu0 0.0
    %4955 = vmatpush1.msra.mxu0 0.0
    %4956 = vmatprep.subr.mxu0 0.0
    %4957 = vmatpush1.msra.mxu0 0.0
    %4958 = vmatprep.subr.mxu0 0.0
    %4959 = vmatpush1.msra.mxu0 0.0
    %4960 = vmatprep.subr.mxu0 0.0
    %4961 = vmatpush1.msra.mxu0 0.0
    %4962 = vmatprep.mubr.f32.mxu0 0.0
    %4963 = vmatmul.mubr.f32.gmra.mrb[0].mxu0 %v4838
    %v4964 = vpop.f32.mrb[0].mxu0
    %v4965 = vadd.f32 %v4891, %v4964
    %v4966 = vpop.f32.mrb[0].mxu0
    %v4967 = vadd.f32 %v4895, %v4966
    %4968 = vmatprep.mubr.f32.mxu0 0.0
    %4969 = vmatmul.mubr.f32.gmra.mrb[0].mxu0 %v4839
    %v4970 = vpop.f32.mrb[0].mxu0
    %v4971 = vadd.f32 %v4891, %v4970
    %v4972 = vpop.f32.mrb[0].mxu0
    %v4973 = vadd.f32 %v4895, %v4972
    %4974 = vmatprep.mubr.f32.mxu0 0.0
    %4975 = vmatmul.mubr.f32.gmra.mrb[0].mxu0 %v4840
    %v4976 = vpop.f32.mrb[0].mxu0
    %v4977 = vadd.f32 %v4891, %v4976
    %v4978 = vpop.f32.mrb[0].mxu0
    %v4979 = vadd.f32 %v4895, %v4978
    %4980 = vmatprep.mubr.f32.mxu0 0.0
    %4981 = vmatmul.mubr.f32.gmra.mrb[0].mxu0 %v4841
    %v4982 = vpop.f32.mrb[0].mxu0
    %v4983 = vadd.f32 %v4891, %v4982
    %v4984 = vpop.f32.mrb[0].mxu0
    %v4985 = vadd.f32 %v4895, %v4984
    %4986 = vmatprep.mubr.f32.mxu0 0.0
    %4987 = vmatmul.mubr.f32.gmra.mrb[0].mxu0 %v4842
    %v4988 = vpop.f32.mrb[0].mxu0
    %v4989 = vadd.f32 %v4891, %v4988
    %v4990 = vpop.f32.mrb[0].mxu0
    %v4991 = vadd.f32 %v4895, %v4990
    %4992 = vmatprep.mubr.f32.mxu0 0.0
    %4993 = vmatmul.mubr.f32.gmra.mrb[0].mxu0 %v4843
    %v4994 = vpop.f32.mrb[0].mxu0
    %v4995 = vadd.f32 %v4891, %v4994
    %v4996 = vpop.f32.mrb[0].mxu0
    %v4997 = vadd.f32 %v4895, %v4996
    %4998 = vmatprep.mubr.f32.mxu0 0.0
    %4999 = vmatmul.mubr.f32.gmra.mrb[0].mxu0 %v4844
    %v5000 = vpop.f32.mrb[0].mxu0
    %v5001 = vadd.f32 %v4891, %v5000
    %v5002 = vpop.f32.mrb[0].mxu0
    %v5003 = vadd.f32 %v4895, %v5002
    %5004 = vmatprep.mubr.f32.mxu0 0.0
    %5005 = vmatmul.mubr.f32.gmra.mrb[0].mxu0 %v4845
    %v5006 = vpop.f32.mrb[0].mxu0
    %v5007 = vadd.f32 %v4891, %v5006
    %v5008 = vpop.f32.mrb[0].mxu0
    %v5009 = vadd.f32 %v4895, %v5008
    %5010 = vmatprep.mubr.f32.mxu0 0.0
    %5011 = vmatmul.mubr.f32.gmra.mrb[0].mxu0 %v4846
    %v5012 = vpop.f32.mrb[0].mxu0
    %v5013 = vadd.f32 %v4891, %v5012
    %v5014 = vpop.f32.mrb[0].mxu0
    %v5015 = vadd.f32 %v4895, %v5014
    %5016 = vmatprep.mubr.f32.mxu0 0.0
    %5017 = vmatmul.mubr.f32.gmra.mrb[0].mxu0 %v4847
    %v5018 = vpop.f32.mrb[0].mxu0
    %v5019 = vadd.f32 %v4891, %v5018
    %v5020 = vpop.f32.mrb[0].mxu0
    %v5021 = vadd.f32 %v4895, %v5020
    %5022 = vmatprep.mubr.f32.mxu0 0.0
    %5023 = vmatmul.mubr.f32.gmra.mrb[0].mxu0 %v4848
    %v5024 = vpop.f32.mrb[0].mxu0
    %v5025 = vadd.f32 %v4891, %v5024
    %v5026 = vpop.f32.mrb[0].mxu0
    %v5027 = vadd.f32 %v4895, %v5026
    %5028 = vmatprep.mubr.f32.mxu0 0.0
    %5029 = vmatmul.mubr.f32.gmra.mrb[0].mxu0 %v4849
    %v5030 = vpop.f32.mrb[0].mxu0
    %v5031 = vadd.f32 %v4891, %v5030
    %v5032 = vpop.f32.mrb[0].mxu0
    %v5033 = vadd.f32 %v4895, %v5032
    %5034 = vmatprep.mubr.f32.mxu0 0.0
    %5035 = vmatmul.mubr.f32.gmra.mrb[0].mxu0 %v4850
    %v5036 = vpop.f32.mrb[0].mxu0
    %v5037 = vadd.f32 %v4891, %v5036
    %v5038 = vpop.f32.mrb[0].mxu0
    %v5039 = vadd.f32 %v4895, %v5038
    %5040 = vmatprep.mubr.f32.mxu0 0.0
    %5041 = vmatmul.mubr.f32.gmra.mrb[0].mxu0 %v4851
    %v5042 = vpop.f32.mrb[0].mxu0
    %v5043 = vadd.f32 %v4891, %v5042
    %v5044 = vpop.f32.mrb[0].mxu0
    %v5045 = vadd.f32 %v4895, %v5044
    %5046 = vmatprep.mubr.f32.mxu0 0.0
    %5047 = vmatmul.mubr.f32.gmra.mrb[0].mxu0 %v4852
    %v5048 = vpop.f32.mrb[0].mxu0
    %v5049 = vadd.f32 %v4891, %v5048
    %v5050 = vpop.f32.mrb[0].mxu0
    %v5051 = vadd.f32 %v4895, %v5050
    %5052 = vmatprep.mubr.f32.mxu0 0.0
    %5053 = vmatmul.mubr.f32.gmra.mrb[0].mxu0 %v4853
    %v5054 = vpop.f32.mrb[0].mxu0
    %v5055 = vadd.f32 %v4891, %v5054
    %v5056 = vpop.f32.mrb[0].mxu0
    %v5057 = vadd.f32 %v4895, %v5056
    %5058 = vdwg.mxu0
    %v5059 = vmul.f32 %v4965, 0.5
    %v5060 = vmul.f32 %v4967, 0.5
    %v5061 = vmul.f32 %v4971, 0.5
    %v5062 = vmul.f32 %v4973, 0.5
    %v5063 = vmul.f32 %v4977, 0.5
    %v5064 = vmul.f32 %v4979, 0.5
    %v5065 = vmul.f32 %v4983, 0.5
    %v5066 = vmul.f32 %v4985, 0.5
    %v5067 = vmul.f32 %v4989, 0.5
    %v5068 = vmul.f32 %v4991, 0.5
    %v5069 = vmul.f32 %v4995, 0.5
    %v5070 = vmul.f32 %v4997, 0.5
    %v5071 = vmul.f32 %v5001, 0.5
    %v5072 = vmul.f32 %v5003, 0.5
    %v5073 = vmul.f32 %v5007, 0.5
    %v5074 = vmul.f32 %v5009, 0.5
    %v5075 = vmul.f32 %v5013, 0.5
    %v5076 = vmul.f32 %v5015, 0.5
    %v5077 = vmul.f32 %v5019, 0.5
    %v5078 = vmul.f32 %v5021, 0.5
    %v5079 = vmul.f32 %v5025, 0.5
    %v5080 = vmul.f32 %v5027, 0.5
    %v5081 = vmul.f32 %v5031, 0.5
    %v5082 = vmul.f32 %v5033, 0.5
    %v5083 = vmul.f32 %v5037, 0.5
    %v5084 = vmul.f32 %v5039, 0.5
    %v5085 = vmul.f32 %v5043, 0.5
    %v5086 = vmul.f32 %v5045, 0.5
    %v5087 = vmul.f32 %v5049, 0.5
    %v5088 = vmul.f32 %v5051, 0.5
    %v5089 = vmul.f32 %v5055, 0.5
    %v5090 = vmul.f32 %v5057, 0.5
    %v5091 = vmul.f32 %v4965, 0.70710677
    %v5092 = vmul.f32 %v4967, 0.70710677
    %v5093 = vmul.f32 %v4971, 0.70710677
    %v5094 = vmul.f32 %v4973, 0.70710677
    %v5095 = vmul.f32 %v4977, 0.70710677
    %v5096 = vmul.f32 %v4979, 0.70710677
    %v5097 = vmul.f32 %v4983, 0.70710677
    %v5098 = vmul.f32 %v4985, 0.70710677
    %v5099 = vmul.f32 %v4989, 0.70710677
    %v5100 = vmul.f32 %v4991, 0.70710677
    %v5101 = vmul.f32 %v4995, 0.70710677
    %v5102 = vmul.f32 %v4997, 0.70710677
    %v5103 = vmul.f32 %v5001, 0.70710677
    %v5104 = vmul.f32 %v5003, 0.70710677
    %v5105 = vmul.f32 %v5007, 0.70710677
    %v5106 = vmul.f32 %v5009, 0.70710677
    %v5107 = vmul.f32 %v5013, 0.70710677
    %v5108 = vmul.f32 %v5015, 0.70710677
    %v5109 = vmul.f32 %v5019, 0.70710677
    %v5110 = vmul.f32 %v5021, 0.70710677
    %v5111 = vmul.f32 %v5025, 0.70710677
    %v5112 = vmul.f32 %v5027, 0.70710677
    %v5113 = vmul.f32 %v5031, 0.70710677
    %v5114 = vmul.f32 %v5033, 0.70710677
    %v5115 = vmul.f32 %v5037, 0.70710677
    %v5116 = vmul.f32 %v5039, 0.70710677
    %v5117 = vmul.f32 %v5043, 0.70710677
    %v5118 = vmul.f32 %v5045, 0.70710677
    %v5119 = vmul.f32 %v5049, 0.70710677
    %v5120 = vmul.f32 %v5051, 0.70710677
    %v5121 = vmul.f32 %v5055, 0.70710677
    %v5122 = vmul.f32 %v5057, 0.70710677
    %v5123 = verf.f32.pop %v5091
    %v5124 = verf.f32.pop %v5092
    %v5125 = verf.f32.pop %v5093
    %v5126 = verf.f32.pop %v5094
    %v5127 = verf.f32.pop %v5095
    %v5128 = verf.f32.pop %v5096
    %v5129 = verf.f32.pop %v5097
    %v5130 = verf.f32.pop %v5098
    %v5131 = verf.f32.pop %v5099
    %v5132 = verf.f32.pop %v5100
    %v5133 = verf.f32.pop %v5101
    %v5134 = verf.f32.pop %v5102
    %v5135 = verf.f32.pop %v5103
    %v5136 = verf.f32.pop %v5104
    %v5137 = verf.f32.pop %v5105
    %v5138 = verf.f32.pop %v5106
    %v5139 = verf.f32.pop %v5107
    %v5140 = verf.f32.pop %v5108
    %v5141 = verf.f32.pop %v5109
    %v5142 = verf.f32.pop %v5110
    %v5143 = verf.f32.pop %v5111
    %v5144 = verf.f32.pop %v5112
    %v5145 = verf.f32.pop %v5113
    %v5146 = verf.f32.pop %v5114
    %v5147 = verf.f32.pop %v5115
    %v5148 = verf.f32.pop %v5116
    %v5149 = verf.f32.pop %v5117
    %v5150 = verf.f32.pop %v5118
    %v5151 = verf.f32.pop %v5119
    %v5152 = verf.f32.pop %v5120
    %v5153 = verf.f32.pop %v5121
    %v5154 = verf.f32.pop %v5122
    %v5155 = vadd.f32 %v5123, 1.0
    %v5156 = vadd.f32 %v5124, 1.0
    %v5157 = vadd.f32 %v5125, 1.0
    %v5158 = vadd.f32 %v5126, 1.0
    %v5159 = vadd.f32 %v5127, 1.0
    %v5160 = vadd.f32 %v5128, 1.0
    %v5161 = vadd.f32 %v5129, 1.0
    %v5162 = vadd.f32 %v5130, 1.0
    %v5163 = vadd.f32 %v5131, 1.0
    %v5164 = vadd.f32 %v5132, 1.0
    %v5165 = vadd.f32 %v5133, 1.0
    %v5166 = vadd.f32 %v5134, 1.0
    %v5167 = vadd.f32 %v5135, 1.0
    %v5168 = vadd.f32 %v5136, 1.0
    %v5169 = vadd.f32 %v5137, 1.0
    %v5170 = vadd.f32 %v5138, 1.0
    %v5171 = vadd.f32 %v5139, 1.0
    %v5172 = vadd.f32 %v5140, 1.0
    %v5173 = vadd.f32 %v5141, 1.0
    %v5174 = vadd.f32 %v5142, 1.0
    %v5175 = vadd.f32 %v5143, 1.0
    %v5176 = vadd.f32 %v5144, 1.0
    %v5177 = vadd.f32 %v5145, 1.0
    %v5178 = vadd.f32 %v5146, 1.0
    %v5179 = vadd.f32 %v5147, 1.0
    %v5180 = vadd.f32 %v5148, 1.0
    %v5181 = vadd.f32 %v5149, 1.0
    %v5182 = vadd.f32 %v5150, 1.0
    %v5183 = vadd.f32 %v5151, 1.0
    %v5184 = vadd.f32 %v5152, 1.0
    %v5185 = vadd.f32 %v5153, 1.0
    %v5186 = vadd.f32 %v5154, 1.0
    %v5187 = vmul.f32 %v5059, %v5155
    %v5188 = vmul.f32 %v5060, %v5156
    %v5189 = vmul.f32 %v5061, %v5157
    %v5190 = vmul.f32 %v5062, %v5158
    %v5191 = vmul.f32 %v5063, %v5159
    %v5192 = vmul.f32 %v5064, %v5160
    %v5193 = vmul.f32 %v5065, %v5161
    %v5194 = vmul.f32 %v5066, %v5162
    %v5195 = vmul.f32 %v5067, %v5163
    %v5196 = vmul.f32 %v5068, %v5164
    %v5197 = vmul.f32 %v5069, %v5165
    %v5198 = vmul.f32 %v5070, %v5166
    %v5199 = vmul.f32 %v5071, %v5167
    %v5200 = vmul.f32 %v5072, %v5168
    %v5201 = vmul.f32 %v5073, %v5169
    %v5202 = vmul.f32 %v5074, %v5170
    %v5203 = vmul.f32 %v5075, %v5171
    %v5204 = vmul.f32 %v5076, %v5172
    %v5205 = vmul.f32 %v5077, %v5173
    %v5206 = vmul.f32 %v5078, %v5174
    %v5207 = vmul.f32 %v5079, %v5175
    %v5208 = vmul.f32 %v5080, %v5176
    %v5209 = vmul.f32 %v5081, %v5177
    %v5210 = vmul.f32 %v5082, %v5178
    %v5211 = vmul.f32 %v5083, %v5179
    %v5212 = vmul.f32 %v5084, %v5180
    %v5213 = vmul.f32 %v5085, %v5181
    %v5214 = vmul.f32 %v5086, %v5182
    %v5215 = vmul.f32 %v5087, %v5183
    %v5216 = vmul.f32 %v5088, %v5184
    %v5217 = vmul.f32 %v5089, %v5185
    %v5218 = vmul.f32 %v5090, %v5186
    %v5219 = vld [vmem:[#allocation14] sm:$0xff]
    %v5220 = vld [vmem:[#allocation14 + $0x8] sm:$0xff]
    %v5221 = vld [vmem:[#allocation14 + $0x10] sm:$0xff]
    %v5222 = vld [vmem:[#allocation14 + $0x18] sm:$0xff]
    %v5223 = vld [vmem:[#allocation14 + $0x20] sm:$0xff]
    %v5224 = vld [vmem:[#allocation14 + $0x28] sm:$0xff]
    %v5225 = vld [vmem:[#allocation14 + $0x30] sm:$0xff]
    %v5226 = vld [vmem:[#allocation14 + $0x38] sm:$0xff]
    %v5227 = vld [vmem:[#allocation14 + $0x40] sm:$0xff]
    %v5228 = vld [vmem:[#allocation14 + $0x48] sm:$0xff]
    %v5229 = vld [vmem:[#allocation14 + $0x50] sm:$0xff]
    %v5230 = vld [vmem:[#allocation14 + $0x58] sm:$0xff]
    %v5231 = vld [vmem:[#allocation14 + $0x60] sm:$0xff]
    %v5232 = vld [vmem:[#allocation14 + $0x68] sm:$0xff]
    %v5233 = vld [vmem:[#allocation14 + $0x70] sm:$0xff]
    %v5234 = vld [vmem:[#allocation14 + $0x78] sm:$0xff]
    %v5235 = vld [vmem:[#allocation14 + $0x80] sm:$0xff]
    %v5236 = vld [vmem:[#allocation14 + $0x88] sm:$0xff]
    %v5237 = vld [vmem:[#allocation14 + $0x90] sm:$0xff]
    %v5238 = vld [vmem:[#allocation14 + $0x98] sm:$0xff]
    %v5239 = vld [vmem:[#allocation14 + $0xa0] sm:$0xff]
    %v5240 = vld [vmem:[#allocation14 + $0xa8] sm:$0xff]
    %v5241 = vld [vmem:[#allocation14 + $0xb0] sm:$0xff]
    %v5242 = vld [vmem:[#allocation14 + $0xb8] sm:$0xff]
    %v5243 = vld [vmem:[#allocation14 + $0xc0] sm:$0xff]
    %v5244 = vld [vmem:[#allocation14 + $0xc8] sm:$0xff]
    %v5245 = vld [vmem:[#allocation14 + $0xd0] sm:$0xff]
    %v5246 = vld [vmem:[#allocation14 + $0xd8] sm:$0xff]
    %v5247 = vld [vmem:[#allocation14 + $0xe0] sm:$0xff]
    %v5248 = vld [vmem:[#allocation14 + $0xe8] sm:$0xff]
    %v5249 = vld [vmem:[#allocation14 + $0xf0] sm:$0xff]
    %v5250 = vld [vmem:[#allocation14 + $0xf8] sm:$0xff]
    %v5251 = vld [vmem:[%s12] sm:$0x1]
    %v5253 = vlaneseq
    %v5254 = vshrl.u32 %v5253, 7
    %v5255 = vsub.s32 0, %v5254
    %v5256 = vrot.slane %v5251, %v5255
    %5258 = vmatprep.subr.mxu0 0.0
    %5259 = vmatpush1.msra.mxu0 %v5219
    %5260 = vmatprep.subr.mxu0 0.0
    %5261 = vmatpush1.msra.mxu0 %v5220
    %5262 = vmatprep.subr.mxu0 0.0
    %5263 = vmatpush1.msra.mxu0 %v5221
    %5264 = vmatprep.subr.mxu0 0.0
    %5265 = vmatpush1.msra.mxu0 %v5222
    %5266 = vmatprep.subr.mxu0 0.0
    %5267 = vmatpush1.msra.mxu0 %v5223
    %5268 = vmatprep.subr.mxu0 0.0
    %5269 = vmatpush1.msra.mxu0 %v5224
    %5270 = vmatprep.subr.mxu0 0.0
    %5271 = vmatpush1.msra.mxu0 %v5225
    %5272 = vmatprep.subr.mxu0 0.0
    %5273 = vmatpush1.msra.mxu0 %v5226
    %5274 = vmatprep.subr.mxu0 0.0
    %5275 = vmatpush1.msra.mxu0 %v5227
    %5276 = vmatprep.subr.mxu0 0.0
    %5277 = vmatpush1.msra.mxu0 %v5228
    %5278 = vmatprep.subr.mxu0 0.0
    %5279 = vmatpush1.msra.mxu0 %v5229
    %5280 = vmatprep.subr.mxu0 0.0
    %5281 = vmatpush1.msra.mxu0 %v5230
    %5282 = vmatprep.subr.mxu0 0.0
    %5283 = vmatpush1.msra.mxu0 %v5231
    %5284 = vmatprep.subr.mxu0 0.0
    %5285 = vmatpush1.msra.mxu0 %v5232
    %5286 = vmatprep.subr.mxu0 0.0
    %5287 = vmatpush1.msra.mxu0 %v5233
    %5288 = vmatprep.subr.mxu0 0.0
    %5289 = vmatpush1.msra.mxu0 %v5234
    %5290 = vmatprep.subr.mxu0 0.0
    %5291 = vmatpush1.msra.mxu0 %v5235
    %5292 = vmatprep.subr.mxu0 0.0
    %5293 = vmatpush1.msra.mxu0 %v5236
    %5294 = vmatprep.subr.mxu0 0.0
    %5295 = vmatpush1.msra.mxu0 %v5237
    %5296 = vmatprep.subr.mxu0 0.0
    %5297 = vmatpush1.msra.mxu0 %v5238
    %5298 = vmatprep.subr.mxu0 0.0
    %5299 = vmatpush1.msra.mxu0 %v5239
    %5300 = vmatprep.subr.mxu0 0.0
    %5301 = vmatpush1.msra.mxu0 %v5240
    %5302 = vmatprep.subr.mxu0 0.0
    %5303 = vmatpush1.msra.mxu0 %v5241
    %5304 = vmatprep.subr.mxu0 0.0
    %5305 = vmatpush1.msra.mxu0 %v5242
    %5306 = vmatprep.subr.mxu0 0.0
    %5307 = vmatpush1.msra.mxu0 %v5243
    %5308 = vmatprep.subr.mxu0 0.0
    %5309 = vmatpush1.msra.mxu0 %v5244
    %5310 = vmatprep.subr.mxu0 0.0
    %5311 = vmatpush1.msra.mxu0 %v5245
    %5312 = vmatprep.subr.mxu0 0.0
    %5313 = vmatpush1.msra.mxu0 %v5246
    %5314 = vmatprep.subr.mxu0 0.0
    %5315 = vmatpush1.msra.mxu0 %v5247
    %5316 = vmatprep.subr.mxu0 0.0
    %5317 = vmatpush1.msra.mxu0 %v5248
    %5318 = vmatprep.subr.mxu0 0.0
    %5319 = vmatpush1.msra.mxu0 %v5249
    %5320 = vmatprep.subr.mxu0 0.0
    %5321 = vmatpush1.msra.mxu0 %v5250
    %5322 = vmatprep.mubr.f32.mxu0 %v5188
    %5323 = vmatmul.mubr.f32.gmra.mrb[0].mxu0 %v5187
    %v5324 = vpop.f32.mrb[0].mxu0
    %v5325 = vadd.f32 %v5256, %v5324
    %v5326 = vpop.f32.mrb[0].mxu0
    %5327 = vmatprep.mubr.f32.mxu0 %v5190
    %5328 = vmatmul.mubr.f32.gmra.mrb[0].mxu0 %v5189
    %v5329 = vpop.f32.mrb[0].mxu0
    %v5330 = vadd.f32 %v5256, %v5329
    %v5331 = vpop.f32.mrb[0].mxu0
    %5332 = vmatprep.mubr.f32.mxu0 %v5192
    %5333 = vmatmul.mubr.f32.gmra.mrb[0].mxu0 %v5191
    %v5334 = vpop.f32.mrb[0].mxu0
    %v5335 = vadd.f32 %v5256, %v5334
    %v5336 = vpop.f32.mrb[0].mxu0
    %5337 = vmatprep.mubr.f32.mxu0 %v5194
    %5338 = vmatmul.mubr.f32.gmra.mrb[0].mxu0 %v5193
    %v5339 = vpop.f32.mrb[0].mxu0
    %v5340 = vadd.f32 %v5256, %v5339
    %v5341 = vpop.f32.mrb[0].mxu0
    %5342 = vmatprep.mubr.f32.mxu0 %v5196
    %5343 = vmatmul.mubr.f32.gmra.mrb[0].mxu0 %v5195
    %v5344 = vpop.f32.mrb[0].mxu0
    %v5345 = vadd.f32 %v5256, %v5344
    %v5346 = vpop.f32.mrb[0].mxu0
    %5347 = vmatprep.mubr.f32.mxu0 %v5198
    %5348 = vmatmul.mubr.f32.gmra.mrb[0].mxu0 %v5197
    %v5349 = vpop.f32.mrb[0].mxu0
    %v5350 = vadd.f32 %v5256, %v5349
    %v5351 = vpop.f32.mrb[0].mxu0
    %5352 = vmatprep.mubr.f32.mxu0 %v5200
    %5353 = vmatmul.mubr.f32.gmra.mrb[0].mxu0 %v5199
    %v5354 = vpop.f32.mrb[0].mxu0
    %v5355 = vadd.f32 %v5256, %v5354
    %v5356 = vpop.f32.mrb[0].mxu0
    %5357 = vmatprep.mubr.f32.mxu0 %v5202
    %5358 = vmatmul.mubr.f32.gmra.mrb[0].mxu0 %v5201
    %v5359 = vpop.f32.mrb[0].mxu0
    %v5360 = vadd.f32 %v5256, %v5359
    %v5361 = vpop.f32.mrb[0].mxu0
    %5362 = vmatprep.mubr.f32.mxu0 %v5204
    %5363 = vmatmul.mubr.f32.gmra.mrb[0].mxu0 %v5203
    %v5364 = vpop.f32.mrb[0].mxu0
    %v5365 = vadd.f32 %v5256, %v5364
    %v5366 = vpop.f32.mrb[0].mxu0
    %5367 = vmatprep.mubr.f32.mxu0 %v5206
    %5368 = vmatmul.mubr.f32.gmra.mrb[0].mxu0 %v5205
    %v5369 = vpop.f32.mrb[0].mxu0
    %v5370 = vadd.f32 %v5256, %v5369
    %v5371 = vpop.f32.mrb[0].mxu0
    %5372 = vmatprep.mubr.f32.mxu0 %v5208
    %5373 = vmatmul.mubr.f32.gmra.mrb[0].mxu0 %v5207
    %v5374 = vpop.f32.mrb[0].mxu0
    %v5375 = vadd.f32 %v5256, %v5374
    %v5376 = vpop.f32.mrb[0].mxu0
    %5377 = vmatprep.mubr.f32.mxu0 %v5210
    %5378 = vmatmul.mubr.f32.gmra.mrb[0].mxu0 %v5209
    %v5379 = vpop.f32.mrb[0].mxu0
    %v5380 = vadd.f32 %v5256, %v5379
    %v5381 = vpop.f32.mrb[0].mxu0
    %5382 = vmatprep.mubr.f32.mxu0 %v5212
    %5383 = vmatmul.mubr.f32.gmra.mrb[0].mxu0 %v5211
    %v5384 = vpop.f32.mrb[0].mxu0
    %v5385 = vadd.f32 %v5256, %v5384
    %v5386 = vpop.f32.mrb[0].mxu0
    %5387 = vmatprep.mubr.f32.mxu0 %v5214
    %5388 = vmatmul.mubr.f32.gmra.mrb[0].mxu0 %v5213
    %v5389 = vpop.f32.mrb[0].mxu0
    %v5390 = vadd.f32 %v5256, %v5389
    %v5391 = vpop.f32.mrb[0].mxu0
    %5392 = vmatprep.mubr.f32.mxu0 %v5216
    %5393 = vmatmul.mubr.f32.gmra.mrb[0].mxu0 %v5215
    %v5394 = vpop.f32.mrb[0].mxu0
    %v5395 = vadd.f32 %v5256, %v5394
    %v5396 = vpop.f32.mrb[0].mxu0
    %5397 = vmatprep.mubr.f32.mxu0 %v5218
    %5398 = vmatmul.mubr.f32.gmra.mrb[0].mxu0 %v5217
    %v5399 = vpop.f32.mrb[0].mxu0
    %v5400 = vadd.f32 %v5256, %v5399
    %v5401 = vpop.f32.mrb[0].mxu0
    %5402 = vdwg.mxu0
    %v5403 = vadd.f32 %v5325, %v4616
    %v5404 = vadd.f32 %v5330, %v4617
    %v5405 = vadd.f32 %v5335, %v4618
    %v5406 = vadd.f32 %v5340, %v4619
    %v5407 = vadd.f32 %v5345, %v4620
    %v5408 = vadd.f32 %v5350, %v4621
    %v5409 = vadd.f32 %v5355, %v4622
    %v5410 = vadd.f32 %v5360, %v4623
    %v5411 = vadd.f32 %v5365, %v4624
    %v5412 = vadd.f32 %v5370, %v4625
    %v5413 = vadd.f32 %v5375, %v4626
    %v5414 = vadd.f32 %v5380, %v4627
    %v5415 = vadd.f32 %v5385, %v4628
    %v5416 = vadd.f32 %v5390, %v4629
    %v5417 = vadd.f32 %v5395, %v4630
    %v5418 = vadd.f32 %v5400, %v4631
    %5419 = vst [vmem:[#allocation16] sm:$0xff] %v5403
    %5420 = vst [vmem:[#allocation16 + $0x8] sm:$0xff] %v5404
    %5421 = vst [vmem:[#allocation16 + $0x10] sm:$0xff] %v5405
    %5422 = vst [vmem:[#allocation16 + $0x18] sm:$0xff] %v5406
    %5423 = vst [vmem:[#allocation16 + $0x20] sm:$0xff] %v5407
    %5424 = vst [vmem:[#allocation16 + $0x28] sm:$0xff] %v5408
    %5425 = vst [vmem:[#allocation16 + $0x30] sm:$0xff] %v5409
    %5426 = vst [vmem:[#allocation16 + $0x38] sm:$0xff] %v5410
    %5427 = vst [vmem:[#allocation16 + $0x40] sm:$0xff] %v5411
    %5428 = vst [vmem:[#allocation16 + $0x48] sm:$0xff] %v5412
    %5429 = vst [vmem:[#allocation16 + $0x50] sm:$0xff] %v5413
    %5430 = vst [vmem:[#allocation16 + $0x58] sm:$0xff] %v5414
    %5431 = vst [vmem:[#allocation16 + $0x60] sm:$0xff] %v5415
    %5432 = vst [vmem:[#allocation16 + $0x68] sm:$0xff] %v5416
    %5433 = vst [vmem:[#allocation16 + $0x70] sm:$0xff] %v5417
    %5434 = vst [vmem:[#allocation16 + $0x78] sm:$0xff] %v5418
    // Predicated region
    $region94: #{tpu_custom_call.1} parent=1 // pred_check
      _
    $region95: #{tpu_custom_call.1} parent=1 // pred_check_branch
      %5436 = sbr.rel (0) target = $region97
    $region96: #{tpu_custom_call.1} parent=1 // pred_region
      %s5438 = ssub.s32 2048, 2048
      %5439 = vsyncadd [#allocation4], %s5438
      %s5440 = sshll.u32 [#allocation16], 4
      %s5441 = int_to_ptr.vmem [resolvable:$true] %s5440
      %5446 = dma.vmem_to_hbm [thread:$0]  %s5441, 2048, %s15, [#allocation4], 128, 128, 8
    $region97: #{tpu_custom_call.1} parent=1 // pred_fallthru
      _
    // Predicated region
    $region98: #{tpu_custom_call.1} parent=1 // pred_check
      _
    $region99: #{tpu_custom_call.1} parent=1 // pred_check_branch
      %5448 = sbr.rel (0) target = $region101
    $region100: #{tpu_custom_call.1} parent=1 // pred_region
      %s5450 = ssub.s32 8192, 8192
      %5451 = vsyncadd [#allocation18], %s5450
      %s5452 = sshll.u32 [#allocation17], 4
      %s5453 = int_to_ptr.vmem [resolvable:$true] %s5452
      %5458 = dma.vmem_to_hbm [thread:$0]  %s5453, 8192, %s16, [#allocation18], 128, 128, 8
    $region101: #{tpu_custom_call.1} parent=1 // pred_fallthru
      _
    // Predicated region
    $region102: #{tpu_custom_call.1} parent=1 // pred_check
      _
    $region103: #{tpu_custom_call.1} parent=1 // pred_check_branch
      %5460 = sbr.rel (0) target = $region105
    $region104: #{tpu_custom_call.1} parent=1 // pred_region
      %5461 = dma.done [#allocation4], 2048
    $region105: #{tpu_custom_call.1} parent=1 // pred_fallthru
      _
    // Predicated region
    $region106: #{tpu_custom_call.1} parent=1 // pred_check
      _
    $region107: #{tpu_custom_call.1} parent=1 // pred_check_branch
      %5463 = sbr.rel (0) target = $region109
    $region108: #{tpu_custom_call.1} parent=1 // pred_region
      %5464 = dma.done [#allocation18], 8192
    $region109: #{tpu_custom_call.1} parent=1 // pred_fallthru
      _
    %5465 = vsyncpa [#allocation3], 1
    %5466 = vsyncpa [#allocation6], 1
    %5467 = vsyncpa [#allocation9], 1
    %5468 = vsyncpa [#allocation12], 1
    %5469 = vsyncpa [#allocation15], 1
    %5470 = vsyncpa [#allocation4], 1
    %5471 = vsyncpa [#allocation18], 1

</llo_original>
